<compile_context>
chip_gen: v6e
topology: v6e:2x2x1
jax: 0.10.0
libtpu: 0.0.40
codegen_flags: <defaults>
</compile_context>

<pallas_src>
import jax
import jax.numpy as jnp
from jax.experimental import pallas as pl
from jax.experimental.pallas import tpu as pltpu


def down_kernel(x_ref, w1_ref, b1_ref, w2_ref, b2_ref, o_ref, l1_ref, l2_ref):
    # x_ref:  (Hp, 2, Wp, 2*Cin)  bf16, pool-pre-split NHWC tile (one batch elem)
    # w1_ref: (3, 3*Cin,  Cmid)   bf16, BN1-folded conv1 weights, stacked per dy
    # b1_ref: (1, Cmid)           f32,  BN1-folded bias
    # w2_ref: (3, 3*Cmid, Cout)   bf16, BN2-folded conv2 weights
    # b2_ref: (1, Cout)           f32
    # o_ref:  (1, Hp, Wp, Cout)   f32,  NHWC output tile
    # l1_ref: (Hp+2, Wp, 3*Cin)   f32 scratch — per-dy im2col of the pooled input
    # l2_ref: (Hp+2, Wp, 3*Cmid)  f32 scratch — per-dy im2col of the conv1 output
    Hp, _, Wp, two_cin = x_ref.shape
    Cin = two_cin // 2
    Cmid = w1_ref.shape[2]
    Cout = w2_ref.shape[2]
    S = Hp * Wp

    # ---- MaxPool2d(2): VPU elementwise maxes only ----------------------------
    x = x_ref[...]                                   # (Hp, 2, Wp, 2*Cin) bf16
    xh = jnp.maximum(x[:, 0], x[:, 1])               # H-subsample      (Hp, Wp, 2*Cin)
    pooled = jnp.maximum(xh[:, :, :Cin], xh[:, :, Cin:])   # W-subsample (Hp, Wp, Cin)

    def build_im2col(l_ref, a, c):
        """Fill l_ref so l_ref[1+h, w, dx*c + ch] = a_zeropad[h, w + dx - 1, ch]."""
        z_row = jnp.zeros((1, Wp, 3 * c), l_ref.dtype)
        z_col = jnp.zeros((Hp, 1, c), l_ref.dtype)
        # Halo: zero only the border (never touched by the interior writes).
        l_ref[0:1] = z_row
        l_ref[Hp + 1:Hp + 2] = z_row
        l_ref[1:Hp + 1, 0:1, 0:c] = z_col                       # dx=0 block, w=0
        l_ref[1:Hp + 1, Wp - 1:Wp, 2 * c:3 * c] = z_col         # dx=2 block, w=Wp-1
        # Interior: dx = 0 (W shift +1), dx = 1 (center), dx = 2 (W shift -1).
        l_ref[1:Hp + 1, 1:Wp, 0:c] = a[:, :Wp - 1, :]
        l_ref[1:Hp + 1, :, c:2 * c] = a
        l_ref[1:Hp + 1, :Wp - 1, 2 * c:3 * c] = a[:, 1:, :]

    def conv3x3(l_ref, w_ref, c):
        """Per-dy im2col matmuls: 3 MXU matmuls with K = 3*c, f32 accumulation."""
        def lhs(dy):
            # Leading-axis slice + contiguous reshape (no relayout), cast for MXU.
            return l_ref[dy:dy + Hp].reshape(S, 3 * c).astype(jnp.bfloat16)
        acc = jnp.dot(lhs(0), w_ref[0], preferred_element_type=jnp.float32)
        acc = acc + jnp.dot(lhs(1), w_ref[1], preferred_element_type=jnp.float32)
        acc = acc + jnp.dot(lhs(2), w_ref[2], preferred_element_type=jnp.float32)
        return acc                                   # (S, Cout_of_layer) f32

    # ---- Conv1 (3x3, BN folded) + ReLU ---------------------------------------
    build_im2col(l1_ref, pooled.astype(jnp.float32), Cin)
    h = jnp.maximum(conv3x3(l1_ref, w1_ref, Cin) + b1_ref[...], 0.0)   # (S, Cmid) f32

    # ---- Conv2 (3x3, BN folded) + ReLU ---------------------------------------
    build_im2col(l2_ref, h.reshape(Hp, Wp, Cmid), Cmid)
    out = jnp.maximum(conv3x3(l2_ref, w2_ref, Cmid) + b2_ref[...], 0.0)  # (S, Cout)

    o_ref[...] = out.reshape(1, Hp, Wp, Cout).astype(o_ref.dtype)


def _fold_bn_into_conv(conv_w, gamma, beta, mean, var, eps):
    """Fold eval-mode BN into an OIHW conv weight; return per-dy stacked weights.

    Returns w of shape (3, 3*Cin, Cout) in bf16, where w[dy, dx*Cin + c, o] is
    the BN-scaled tap W[o, c, dy, dx], plus the folded bias (1, Cout) in f32.
    """
    scale = gamma / jnp.sqrt(var + eps)                      # (Cout,)
    w_eff = conv_w * scale[:, None, None, None]              # (Cout, Cin, 3, 3)
    bias = beta - mean * scale                               # (Cout,)
    cout, cin = w_eff.shape[0], w_eff.shape[1]
    # (Cout, Cin, ky, kx) -> (ky, kx, Cin, Cout) -> (3, 3*Cin, Cout)
    w_dy = jnp.transpose(w_eff, (2, 3, 1, 0)).reshape(3, 3 * cin, cout)
    return w_dy.astype(jnp.bfloat16), bias.reshape(1, cout).astype(jnp.float32)


def down_pallas(x, conv1_w, bn1, conv2_w, bn2, *, eps=1e-5):
    """Down block forward.  x: (B, Cin, H, W) f32 NCHW (PyTorch layout).
    conv*_w: (Cout, Cin, 3, 3) OIHW.  bn* = (gamma, beta, running_mean, running_var)."""
    B, Cin, H, W = x.shape
    assert H % 2 == 0 and W % 2 == 0, "MaxPool2d(2) requires even spatial dims"
    Hp, Wp = H // 2, W // 2
    Cmid = conv1_w.shape[0]
    Cout = conv2_w.shape[0]

    w1_taps, b1 = _fold_bn_into_conv(conv1_w, *bn1, eps)    # (3, 3*Cin, Cmid), (1, Cmid)
    w2_taps, b2 = _fold_bn_into_conv(conv2_w, *bn2, eps)    # (3, 3*Cmid, Cout), (1, Cout)

    # NCHW -> NHWC, cast to bf16 (MXU operand dtype, halves input HBM traffic),
    # then pre-split the 2x2 pool windows with the W-subsample merged into the
    # channel/lane axis:  (B, H, W, Cin) -> (B*Hp, 2, Wp, 2*Cin).
    # Trailing block dims are (Wp, 2*Cin) -> no (8,128) tile-padding blowup.
    x_p = (jnp.transpose(x, (0, 2, 3, 1))
           .astype(jnp.bfloat16)
           .reshape(B * Hp, 2, Wp, 2 * Cin))

    out_nhwc = pl.pallas_call(
        down_kernel,
        out_shape=jax.ShapeDtypeStruct((B, Hp, Wp, Cout), x.dtype),
        grid_spec=pltpu.PrefetchScalarGridSpec(
            num_scalar_prefetch=0,
            grid=(B,),
            in_specs=[
                pl.BlockSpec((Hp, 2, Wp, 2 * Cin), lambda b: (b, 0, 0, 0)),
                pl.BlockSpec((3, 3 * Cin, Cmid), lambda b: (0, 0, 0)),
                pl.BlockSpec((1, Cmid), lambda b: (0, 0)),
                pl.BlockSpec((3, 3 * Cmid, Cout), lambda b: (0, 0, 0)),
                pl.BlockSpec((1, Cout), lambda b: (0, 0)),
            ],
            out_specs=pl.BlockSpec((1, Hp, Wp, Cout), lambda b: (b, 0, 0, 0)),
            scratch_shapes=[
                pltpu.VMEM((Hp + 2, Wp, 3 * Cin), jnp.float32),    # im2col for conv1
                pltpu.VMEM((Hp + 2, Wp, 3 * Cmid), jnp.float32),   # im2col for conv2
            ],
        ),
        compiler_params=pltpu.CompilerParams(
            dimension_semantics=("parallel",),        # B blocks -> both v7x TCs
            # Per-step working set is only a couple of MiB at these shapes;
            # 48 MiB keeps headroom on every generation (<=48 MiB on v7x).
            vmem_limit_bytes=48 * 1024 * 1024,
        ),
    )(x_p, w1_taps, b1, w2_taps, b2)

    return jnp.transpose(out_nhwc, (0, 3, 1, 2))      # back to NCHW


def down_reference(x, conv1_w, bn1, conv2_w, bn2, eps=1e-5):
    """Pure-JAX f32 reference for Down (eval-mode BatchNorm)."""
    B, C, H, W = x.shape
    p = x.reshape(B, C, H // 2, 2, W // 2, 2).max(axis=(3, 5))

    def conv_bn_relu(h, w, bn):
        g, b, m, v = bn
        y = jax.lax.conv_general_dilated(
            h, w, window_strides=(1, 1), padding=((1, 1), (1, 1)),
            dimension_numbers=("NCHW", "OIHW", "NCHW"),
            precision=jax.lax.Precision.HIGHEST)
        scale = (g / jnp.sqrt(v + eps))[None, :, None, None]
        y = (y - m[None, :, None, None]) * scale + b[None, :, None, None]
        return jnp.maximum(y, 0.0)

    h = conv_bn_relu(p, conv1_w, bn1)
    return conv_bn_relu(h, conv2_w, bn2)


if __name__ == "__main__":
    key = jax.random.PRNGKey(0)
    ks = jax.random.split(key, 11)

    # Down(64, 128) on a 32x32 image: typical U-Net channel doubling, kept small.
    B, Cin, Cout, H, W = 2, 64, 128, 32, 32
    Cmid = Cout

    x = jax.random.normal(ks[0], (B, Cin, H, W), dtype=jnp.float32)

    conv1_w = jax.random.normal(ks[1], (Cmid, Cin, 3, 3), jnp.float32) * (2.0 / (9 * Cin)) ** 0.5
    conv2_w = jax.random.normal(ks[2], (Cout, Cmid, 3, 3), jnp.float32) * (2.0 / (9 * Cmid)) ** 0.5

    bn1 = (jax.random.uniform(ks[3], (Cmid,), jnp.float32, 0.5, 1.5),   # gamma
           jax.random.normal(ks[4], (Cmid,), jnp.float32) * 0.1,        # beta
           jax.random.normal(ks[5], (Cmid,), jnp.float32) * 0.1,        # running_mean
           jax.random.uniform(ks[6], (Cmid,), jnp.float32, 0.5, 1.5))   # running_var
    bn2 = (jax.random.uniform(ks[7], (Cout,), jnp.float32, 0.5, 1.5),
           jax.random.normal(ks[8], (Cout,), jnp.float32) * 0.1,
           jax.random.normal(ks[9], (Cout,), jnp.float32) * 0.1,
           jax.random.uniform(ks[10], (Cout,), jnp.float32, 0.5, 1.5))

    out = down_pallas(x, conv1_w, bn1, conv2_w, bn2)
    out = jax.block_until_ready(out)

    ref = down_reference(x, conv1_w, bn1, conv2_w, bn2)
    assert out.shape == (B, Cout, H // 2, W // 2), out.shape
    # Tolerance covers bf16 MXU operands (input + BN-folded weights) vs the
    # f32 Precision.HIGHEST reference; structural bugs produce O(1) errors.
    max_diff = jnp.max(jnp.abs(out - ref))
    assert jnp.allclose(out, ref, atol=5e-2, rtol=5e-2), f"mismatch: max abs diff = {max_diff}"
    print("KERNEL_OK")
</pallas_src>

<mosaic_0001>
module attributes {stable_mosaic.version = 11 : i64} {
  func.func @down_kernel(%arg0: i32, %arg1: memref<16x2x16x128xbf16, #tpu.memory_space<vmem>>, %arg2: memref<3x192x128xbf16, #tpu.memory_space<vmem>>, %arg3: memref<1x128xf32, #tpu.memory_space<vmem>>, %arg4: memref<3x384x128xbf16, #tpu.memory_space<vmem>>, %arg5: memref<1x128xf32, #tpu.memory_space<vmem>>, %arg6: memref<1x16x16x128xf32, #tpu.memory_space<vmem>>, %arg7: memref<18x16x192xf32, #tpu.memory_space<vmem>>, %arg8: memref<18x16x384xf32, #tpu.memory_space<vmem>>) attributes {dimension_semantics = [#tpu.dimension_semantics<parallel>], iteration_bounds = array<i64: 2>, scalar_prefetch = 0 : i64, scratch_operands = 2 : i64, tpu.core_type = #tpu.core_type<tc>, window_params = [{transform_indices = @transform_0, window_bounds = array<i64: 16, 2, 16, 128>}, {pipeline_mode = #tpu.pipeline_mode<synchronous>, transform_indices = @transform_1, window_bounds = array<i64: 3, 192, 128>}, {pipeline_mode = #tpu.pipeline_mode<synchronous>, transform_indices = @transform_2, window_bounds = array<i64: 1, 128>}, {pipeline_mode = #tpu.pipeline_mode<synchronous>, transform_indices = @transform_3, window_bounds = array<i64: 3, 384, 128>}, {pipeline_mode = #tpu.pipeline_mode<synchronous>, transform_indices = @transform_4, window_bounds = array<i64: 1, 128>}, {transform_indices = @transform_5, window_bounds = array<i64: 1, 16, 16, 128>}]} {
    %c0 = arith.constant 0 : index
    %c0_0 = arith.constant 0 : index
    %c0_1 = arith.constant 0 : index
    %c0_2 = arith.constant 0 : index
    %0 = vector.load %arg1[%c0, %c0_0, %c0_1, %c0_2] : memref<16x2x16x128xbf16, #tpu.memory_space<vmem>>, vector<16x2x16x128xbf16>
    %1 = vector.extract_strided_slice %0 {offsets = [0, 0, 0, 0], sizes = [16, 1, 16, 128], strides = [1, 1, 1, 1]} : vector<16x2x16x128xbf16> to vector<16x1x16x128xbf16>
    %2 = vector.shape_cast %1 : vector<16x1x16x128xbf16> to vector<16x16x128xbf16>
    %3 = vector.extract_strided_slice %0 {offsets = [0, 1, 0, 0], sizes = [16, 1, 16, 128], strides = [1, 1, 1, 1]} : vector<16x2x16x128xbf16> to vector<16x1x16x128xbf16>
    %4 = vector.shape_cast %3 : vector<16x1x16x128xbf16> to vector<16x16x128xbf16>
    %5 = arith.maximumf %2, %4 : vector<16x16x128xbf16>
    %6 = vector.extract_strided_slice %5 {offsets = [0, 0, 0], sizes = [16, 16, 64], strides = [1, 1, 1]} : vector<16x16x128xbf16> to vector<16x16x64xbf16>
    %7 = vector.extract_strided_slice %5 {offsets = [0, 0, 64], sizes = [16, 16, 64], strides = [1, 1, 1]} : vector<16x16x128xbf16> to vector<16x16x64xbf16>
    %8 = arith.maximumf %6, %7 : vector<16x16x64xbf16>
    %9 = arith.extf %8 : vector<16x16x64xbf16> to vector<16x16x64xf32>
    %cst = arith.constant 0.000000e+00 : f32
    %10 = vector.broadcast %cst : f32 to vector<1x16x192xf32>
    %cst_3 = arith.constant 0.000000e+00 : f32
    %11 = vector.broadcast %cst_3 : f32 to vector<16x1x64xf32>
    %c0_4 = arith.constant 0 : index
    %c0_5 = arith.constant 0 : index
    %c0_6 = arith.constant 0 : index
    %12 = vector.load %arg7[%c0_4, %c0_5, %c0_6] : memref<18x16x192xf32, #tpu.memory_space<vmem>>, vector<1x16x192xf32>
    tpu.vector_store %arg7[%c0_4, %c0_5, %c0_6], %10 {strides = array<i32>} : memref<18x16x192xf32, #tpu.memory_space<vmem>>, vector<1x16x192xf32>,
    %c17 = arith.constant 17 : index
    %c0_7 = arith.constant 0 : index
    %c0_8 = arith.constant 0 : index
    %13 = vector.load %arg7[%c17, %c0_7, %c0_8] : memref<18x16x192xf32, #tpu.memory_space<vmem>>, vector<1x16x192xf32>
    tpu.vector_store %arg7[%c17, %c0_7, %c0_8], %10 {strides = array<i32>} : memref<18x16x192xf32, #tpu.memory_space<vmem>>, vector<1x16x192xf32>,
    %c1 = arith.constant 1 : index
    %c0_9 = arith.constant 0 : index
    %c0_10 = arith.constant 0 : index
    %14 = vector.load %arg7[%c1, %c0_9, %c0_10] : memref<18x16x192xf32, #tpu.memory_space<vmem>>, vector<16x1x64xf32>
    tpu.vector_store %arg7[%c1, %c0_9, %c0_10], %11 {strides = array<i32>} : memref<18x16x192xf32, #tpu.memory_space<vmem>>, vector<16x1x64xf32>,
    %c1_11 = arith.constant 1 : index
    %c15 = arith.constant 15 : index
    %c128 = arith.constant 128 : index
    %15 = vector.load %arg7[%c1_11, %c15, %c128] : memref<18x16x192xf32, #tpu.memory_space<vmem>>, vector<16x1x64xf32>
    tpu.vector_store %arg7[%c1_11, %c15, %c128], %11 {strides = array<i32>} : memref<18x16x192xf32, #tpu.memory_space<vmem>>, vector<16x1x64xf32>,
    %16 = vector.extract_strided_slice %9 {offsets = [0, 0, 0], sizes = [16, 15, 64], strides = [1, 1, 1]} : vector<16x16x64xf32> to vector<16x15x64xf32>
    %c1_12 = arith.constant 1 : index
    %c1_13 = arith.constant 1 : index
    %c0_14 = arith.constant 0 : index
    %17 = vector.load %arg7[%c1_12, %c1_13, %c0_14] : memref<18x16x192xf32, #tpu.memory_space<vmem>>, vector<16x15x64xf32>
    tpu.vector_store %arg7[%c1_12, %c1_13, %c0_14], %16 {strides = array<i32>} : memref<18x16x192xf32, #tpu.memory_space<vmem>>, vector<16x15x64xf32>,
    %c1_15 = arith.constant 1 : index
    %c0_16 = arith.constant 0 : index
    %c64 = arith.constant 64 : index
    %18 = vector.load %arg7[%c1_15, %c0_16, %c64] : memref<18x16x192xf32, #tpu.memory_space<vmem>>, vector<16x16x64xf32>
    tpu.vector_store %arg7[%c1_15, %c0_16, %c64], %9 {strides = array<i32>} : memref<18x16x192xf32, #tpu.memory_space<vmem>>, vector<16x16x64xf32>,
    %19 = vector.extract_strided_slice %9 {offsets = [0, 1, 0], sizes = [16, 15, 64], strides = [1, 1, 1]} : vector<16x16x64xf32> to vector<16x15x64xf32>
    %c1_17 = arith.constant 1 : index
    %c0_18 = arith.constant 0 : index
    %c128_19 = arith.constant 128 : index
    %20 = vector.load %arg7[%c1_17, %c0_18, %c128_19] : memref<18x16x192xf32, #tpu.memory_space<vmem>>, vector<16x15x64xf32>
    tpu.vector_store %arg7[%c1_17, %c0_18, %c128_19], %19 {strides = array<i32>} : memref<18x16x192xf32, #tpu.memory_space<vmem>>, vector<16x15x64xf32>,
    %c0_20 = arith.constant 0 : index
    %c0_21 = arith.constant 0 : index
    %c0_22 = arith.constant 0 : index
    %21 = vector.load %arg7[%c0_20, %c0_21, %c0_22] : memref<18x16x192xf32, #tpu.memory_space<vmem>>, vector<16x16x192xf32>
    %22 = vector.shape_cast %21 : vector<16x16x192xf32> to vector<256x192xf32>
    %23 = arith.truncf %22 : vector<256x192xf32> to vector<256x192xbf16>
    %c0_23 = arith.constant 0 : index
    %c0_24 = arith.constant 0 : index
    %c0_25 = arith.constant 0 : index
    %24 = vector.load %arg2[%c0_23, %c0_24, %c0_25] : memref<3x192x128xbf16, #tpu.memory_space<vmem>>, vector<1x192x128xbf16>
    %25 = vector.shape_cast %24 : vector<1x192x128xbf16> to vector<192x128xbf16>
    %cst_26 = arith.constant dense<0.000000e+00> : vector<256x128xf32>
    %26 = tpu.matmul %23, %25, %cst_26 {dimension_numbers = #tpu.dot_dimension_numbers<[1], [0], [0], [1], [0, 0, 1, 1], [], []>} : vector<256x192xbf16>, vector<192x128xbf16>, vector<256x128xf32> -> vector<256x128xf32>
    %c1_27 = arith.constant 1 : index
    %c0_28 = arith.constant 0 : index
    %c0_29 = arith.constant 0 : index
    %27 = vector.load %arg7[%c1_27, %c0_28, %c0_29] : memref<18x16x192xf32, #tpu.memory_space<vmem>>, vector<16x16x192xf32>
    %28 = vector.shape_cast %27 : vector<16x16x192xf32> to vector<256x192xf32>
    %29 = arith.truncf %28 : vector<256x192xf32> to vector<256x192xbf16>
    %c1_30 = arith.constant 1 : index
    %c0_31 = arith.constant 0 : index
    %c0_32 = arith.constant 0 : index
    %30 = vector.load %arg2[%c1_30, %c0_31, %c0_32] : memref<3x192x128xbf16, #tpu.memory_space<vmem>>, vector<1x192x128xbf16>
    %31 = vector.shape_cast %30 : vector<1x192x128xbf16> to vector<192x128xbf16>
    %cst_33 = arith.constant dense<0.000000e+00> : vector<256x128xf32>
    %32 = tpu.matmul %29, %31, %cst_33 {dimension_numbers = #tpu.dot_dimension_numbers<[1], [0], [0], [1], [0, 0, 1, 1], [], []>} : vector<256x192xbf16>, vector<192x128xbf16>, vector<256x128xf32> -> vector<256x128xf32>
    %33 = arith.addf %26, %32 : vector<256x128xf32>
    %c2 = arith.constant 2 : index
    %c0_34 = arith.constant 0 : index
    %c0_35 = arith.constant 0 : index
    %34 = vector.load %arg7[%c2, %c0_34, %c0_35] : memref<18x16x192xf32, #tpu.memory_space<vmem>>, vector<16x16x192xf32>
    %35 = vector.shape_cast %34 : vector<16x16x192xf32> to vector<256x192xf32>
    %36 = arith.truncf %35 : vector<256x192xf32> to vector<256x192xbf16>
    %c2_36 = arith.constant 2 : index
    %c0_37 = arith.constant 0 : index
    %c0_38 = arith.constant 0 : index
    %37 = vector.load %arg2[%c2_36, %c0_37, %c0_38] : memref<3x192x128xbf16, #tpu.memory_space<vmem>>, vector<1x192x128xbf16>
    %38 = vector.shape_cast %37 : vector<1x192x128xbf16> to vector<192x128xbf16>
    %cst_39 = arith.constant dense<0.000000e+00> : vector<256x128xf32>
    %39 = tpu.matmul %36, %38, %cst_39 {dimension_numbers = #tpu.dot_dimension_numbers<[1], [0], [0], [1], [0, 0, 1, 1], [], []>} : vector<256x192xbf16>, vector<192x128xbf16>, vector<256x128xf32> -> vector<256x128xf32>
    %40 = arith.addf %33, %39 : vector<256x128xf32>
    %c0_40 = arith.constant 0 : index
    %c0_41 = arith.constant 0 : index
    %41 = vector.load %arg3[%c0_40, %c0_41] : memref<1x128xf32, #tpu.memory_space<vmem>>, vector<1x128xf32>
    %42 = vector.broadcast %41 : vector<1x128xf32> to vector<256x128xf32>
    %43 = arith.addf %40, %42 : vector<256x128xf32>
    %cst_42 = arith.constant 0.000000e+00 : f32
    %44 = vector.broadcast %cst_42 : f32 to vector<256x128xf32>
    %45 = arith.maximumf %43, %44 : vector<256x128xf32>
    %46 = vector.shape_cast %45 : vector<256x128xf32> to vector<16x16x128xf32>
    %cst_43 = arith.constant 0.000000e+00 : f32
    %47 = vector.broadcast %cst_43 : f32 to vector<1x16x384xf32>
    %cst_44 = arith.constant 0.000000e+00 : f32
    %48 = vector.broadcast %cst_44 : f32 to vector<16x1x128xf32>
    %c0_45 = arith.constant 0 : index
    %c0_46 = arith.constant 0 : index
    %c0_47 = arith.constant 0 : index
    %49 = vector.load %arg8[%c0_45, %c0_46, %c0_47] : memref<18x16x384xf32, #tpu.memory_space<vmem>>, vector<1x16x384xf32>
    tpu.vector_store %arg8[%c0_45, %c0_46, %c0_47], %47 {strides = array<i32>} : memref<18x16x384xf32, #tpu.memory_space<vmem>>, vector<1x16x384xf32>,
    %c17_48 = arith.constant 17 : index
    %c0_49 = arith.constant 0 : index
    %c0_50 = arith.constant 0 : index
    %50 = vector.load %arg8[%c17_48, %c0_49, %c0_50] : memref<18x16x384xf32, #tpu.memory_space<vmem>>, vector<1x16x384xf32>
    tpu.vector_store %arg8[%c17_48, %c0_49, %c0_50], %47 {strides = array<i32>} : memref<18x16x384xf32, #tpu.memory_space<vmem>>, vector<1x16x384xf32>,
    %c1_51 = arith.constant 1 : index
    %c0_52 = arith.constant 0 : index
    %c0_53 = arith.constant 0 : index
    %51 = vector.load %arg8[%c1_51, %c0_52, %c0_53] : memref<18x16x384xf32, #tpu.memory_space<vmem>>, vector<16x1x128xf32>
    tpu.vector_store %arg8[%c1_51, %c0_52, %c0_53], %48 {strides = array<i32>} : memref<18x16x384xf32, #tpu.memory_space<vmem>>, vector<16x1x128xf32>,
    %c1_54 = arith.constant 1 : index
    %c15_55 = arith.constant 15 : index
    %c256 = arith.constant 256 : index
    %52 = vector.load %arg8[%c1_54, %c15_55, %c256] : memref<18x16x384xf32, #tpu.memory_space<vmem>>, vector<16x1x128xf32>
    tpu.vector_store %arg8[%c1_54, %c15_55, %c256], %48 {strides = array<i32>} : memref<18x16x384xf32, #tpu.memory_space<vmem>>, vector<16x1x128xf32>,
    %53 = vector.extract_strided_slice %46 {offsets = [0, 0, 0], sizes = [16, 15, 128], strides = [1, 1, 1]} : vector<16x16x128xf32> to vector<16x15x128xf32>
    %c1_56 = arith.constant 1 : index
    %c1_57 = arith.constant 1 : index
    %c0_58 = arith.constant 0 : index
    %54 = vector.load %arg8[%c1_56, %c1_57, %c0_58] : memref<18x16x384xf32, #tpu.memory_space<vmem>>, vector<16x15x128xf32>
    tpu.vector_store %arg8[%c1_56, %c1_57, %c0_58], %53 {strides = array<i32>} : memref<18x16x384xf32, #tpu.memory_space<vmem>>, vector<16x15x128xf32>,
    %c1_59 = arith.constant 1 : index
    %c0_60 = arith.constant 0 : index
    %c128_61 = arith.constant 128 : index
    %55 = vector.load %arg8[%c1_59, %c0_60, %c128_61] : memref<18x16x384xf32, #tpu.memory_space<vmem>>, vector<16x16x128xf32>
    tpu.vector_store %arg8[%c1_59, %c0_60, %c128_61], %46 {strides = array<i32>} : memref<18x16x384xf32, #tpu.memory_space<vmem>>, vector<16x16x128xf32>,
    %56 = vector.extract_strided_slice %46 {offsets = [0, 1, 0], sizes = [16, 15, 128], strides = [1, 1, 1]} : vector<16x16x128xf32> to vector<16x15x128xf32>
    %c1_62 = arith.constant 1 : index
    %c0_63 = arith.constant 0 : index
    %c256_64 = arith.constant 256 : index
    %57 = vector.load %arg8[%c1_62, %c0_63, %c256_64] : memref<18x16x384xf32, #tpu.memory_space<vmem>>, vector<16x15x128xf32>
    tpu.vector_store %arg8[%c1_62, %c0_63, %c256_64], %56 {strides = array<i32>} : memref<18x16x384xf32, #tpu.memory_space<vmem>>, vector<16x15x128xf32>,
    %c0_65 = arith.constant 0 : index
    %c0_66 = arith.constant 0 : index
    %c0_67 = arith.constant 0 : index
    %58 = vector.load %arg8[%c0_65, %c0_66, %c0_67] : memref<18x16x384xf32, #tpu.memory_space<vmem>>, vector<16x16x384xf32>
    %59 = vector.shape_cast %58 : vector<16x16x384xf32> to vector<256x384xf32>
    %60 = arith.truncf %59 : vector<256x384xf32> to vector<256x384xbf16>
    %c0_68 = arith.constant 0 : index
    %c0_69 = arith.constant 0 : index
    %c0_70 = arith.constant 0 : index
    %61 = vector.load %arg4[%c0_68, %c0_69, %c0_70] : memref<3x384x128xbf16, #tpu.memory_space<vmem>>, vector<1x384x128xbf16>
    %62 = vector.shape_cast %61 : vector<1x384x128xbf16> to vector<384x128xbf16>
    %cst_71 = arith.constant dense<0.000000e+00> : vector<256x128xf32>
    %63 = tpu.matmul %60, %62, %cst_71 {dimension_numbers = #tpu.dot_dimension_numbers<[1], [0], [0], [1], [0, 0, 1, 1], [], []>} : vector<256x384xbf16>, vector<384x128xbf16>, vector<256x128xf32> -> vector<256x128xf32>
    %c1_72 = arith.constant 1 : index
    %c0_73 = arith.constant 0 : index
    %c0_74 = arith.constant 0 : index
    %64 = vector.load %arg8[%c1_72, %c0_73, %c0_74] : memref<18x16x384xf32, #tpu.memory_space<vmem>>, vector<16x16x384xf32>
    %65 = vector.shape_cast %64 : vector<16x16x384xf32> to vector<256x384xf32>
    %66 = arith.truncf %65 : vector<256x384xf32> to vector<256x384xbf16>
    %c1_75 = arith.constant 1 : index
    %c0_76 = arith.constant 0 : index
    %c0_77 = arith.constant 0 : index
    %67 = vector.load %arg4[%c1_75, %c0_76, %c0_77] : memref<3x384x128xbf16, #tpu.memory_space<vmem>>, vector<1x384x128xbf16>
    %68 = vector.shape_cast %67 : vector<1x384x128xbf16> to vector<384x128xbf16>
    %cst_78 = arith.constant dense<0.000000e+00> : vector<256x128xf32>
    %69 = tpu.matmul %66, %68, %cst_78 {dimension_numbers = #tpu.dot_dimension_numbers<[1], [0], [0], [1], [0, 0, 1, 1], [], []>} : vector<256x384xbf16>, vector<384x128xbf16>, vector<256x128xf32> -> vector<256x128xf32>
    %70 = arith.addf %63, %69 : vector<256x128xf32>
    %c2_79 = arith.constant 2 : index
    %c0_80 = arith.constant 0 : index
    %c0_81 = arith.constant 0 : index
    %71 = vector.load %arg8[%c2_79, %c0_80, %c0_81] : memref<18x16x384xf32, #tpu.memory_space<vmem>>, vector<16x16x384xf32>
    %72 = vector.shape_cast %71 : vector<16x16x384xf32> to vector<256x384xf32>
    %73 = arith.truncf %72 : vector<256x384xf32> to vector<256x384xbf16>
    %c2_82 = arith.constant 2 : index
    %c0_83 = arith.constant 0 : index
    %c0_84 = arith.constant 0 : index
    %74 = vector.load %arg4[%c2_82, %c0_83, %c0_84] : memref<3x384x128xbf16, #tpu.memory_space<vmem>>, vector<1x384x128xbf16>
    %75 = vector.shape_cast %74 : vector<1x384x128xbf16> to vector<384x128xbf16>
    %cst_85 = arith.constant dense<0.000000e+00> : vector<256x128xf32>
    %76 = tpu.matmul %73, %75, %cst_85 {dimension_numbers = #tpu.dot_dimension_numbers<[1], [0], [0], [1], [0, 0, 1, 1], [], []>} : vector<256x384xbf16>, vector<384x128xbf16>, vector<256x128xf32> -> vector<256x128xf32>
    %77 = arith.addf %70, %76 : vector<256x128xf32>
    %c0_86 = arith.constant 0 : index
    %c0_87 = arith.constant 0 : index
    %78 = vector.load %arg5[%c0_86, %c0_87] : memref<1x128xf32, #tpu.memory_space<vmem>>, vector<1x128xf32>
    %79 = vector.broadcast %78 : vector<1x128xf32> to vector<256x128xf32>
    %80 = arith.addf %77, %79 : vector<256x128xf32>
    %cst_88 = arith.constant 0.000000e+00 : f32
    %81 = vector.broadcast %cst_88 : f32 to vector<256x128xf32>
    %82 = arith.maximumf %80, %81 : vector<256x128xf32>
    %83 = vector.shape_cast %82 : vector<256x128xf32> to vector<1x16x16x128xf32>
    %c0_89 = arith.constant 0 : index
    %c0_90 = arith.constant 0 : index
    %c0_91 = arith.constant 0 : index
    %c0_92 = arith.constant 0 : index
    %84 = vector.load %arg6[%c0_89, %c0_90, %c0_91, %c0_92] : memref<1x16x16x128xf32, #tpu.memory_space<vmem>>, vector<1x16x16x128xf32>
    tpu.vector_store %arg6[%c0_89, %c0_90, %c0_91, %c0_92], %83 {strides = array<i32>} : memref<1x16x16x128xf32, #tpu.memory_space<vmem>>, vector<1x16x16x128xf32>,
    return
  }
  func.func @transform_0(%arg0: i32) -> (i32, i32, i32, i32) {
    %c0_i32 = arith.constant 0 : i32
    %c0_i32_0 = arith.constant 0 : i32
    %c0_i32_1 = arith.constant 0 : i32
    %c0_i32_2 = arith.constant 0 : i32
    return %arg0, %c0_i32, %c0_i32_0, %c0_i32_1 : i32, i32, i32, i32
  }
  func.func @transform_1(%arg0: i32) -> (i32, i32, i32) {
    %c0_i32 = arith.constant 0 : i32
    %c0_i32_0 = arith.constant 0 : i32
    %c0_i32_1 = arith.constant 0 : i32
    %c0_i32_2 = arith.constant 0 : i32
    return %c0_i32, %c0_i32_0, %c0_i32_1 : i32, i32, i32
  }
  func.func @transform_2(%arg0: i32) -> (i32, i32) {
    %c0_i32 = arith.constant 0 : i32
    %c0_i32_0 = arith.constant 0 : i32
    %c0_i32_1 = arith.constant 0 : i32
    return %c0_i32, %c0_i32_0 : i32, i32
  }
  func.func @transform_3(%arg0: i32) -> (i32, i32, i32) {
    %c0_i32 = arith.constant 0 : i32
    %c0_i32_0 = arith.constant 0 : i32
    %c0_i32_1 = arith.constant 0 : i32
    %c0_i32_2 = arith.constant 0 : i32
    return %c0_i32, %c0_i32_0, %c0_i32_1 : i32, i32, i32
  }
  func.func @transform_4(%arg0: i32) -> (i32, i32) {
    %c0_i32 = arith.constant 0 : i32
    %c0_i32_0 = arith.constant 0 : i32
    %c0_i32_1 = arith.constant 0 : i32
    return %c0_i32, %c0_i32_0 : i32, i32
  }
  func.func @transform_5(%arg0: i32) -> (i32, i32, i32, i32) {
    %c0_i32 = arith.constant 0 : i32
    %c0_i32_0 = arith.constant 0 : i32
    %c0_i32_1 = arith.constant 0 : i32
    %c0_i32_2 = arith.constant 0 : i32
    return %arg0, %c0_i32, %c0_i32_0, %c0_i32_1 : i32, i32, i32, i32
  }
}

</mosaic_0001>

<llo_original>
// kernel: tpu_custom_call.1
$region0: #{tpu_custom_call.1}
  #allocation0 [shape = 'u32[]', space=smem, size = 0x4, offset = 0x4, fixed_abs, tag = 'smem constant byte address 0x4 - core index']
  #allocation1 [shape = 'u32[144,128]{1,0:T(1,128)}', space=vmem, size = 0x12000, scoped, tag = 'internal scratch']
  #allocation2 [shape = 'f32[18,16,192]{2,1,0:T(8,128)}', space=vmem, size = 0x48000, scoped, tag = 'scratch operand']
  #allocation3 [shape = 'f32[18,16,384]{2,1,0:T(8,128)}', space=vmem, size = 0x6c000, scoped, tag = 'scratch operand']
  %s0 = inlined_call_operand.hbm [shape: bf16[32,2,16,128], index: 0, kind: input, shape index: {}]
  %s1 = inlined_call_operand.hbm [shape: bf16[3,192,128], index: 1, kind: input, shape index: {}]
  %s2 = inlined_call_operand.vmem [shape: f32[1,128], index: 2, kind: input, shape index: {}]
  %s3 = inlined_call_operand.hbm [shape: bf16[3,384,128], index: 3, kind: input, shape index: {}]
  %s4 = inlined_call_operand.vmem [shape: f32[1,128], index: 4, kind: input, shape index: {}]
  %s5 = inlined_call_operand.hbm [shape: f32[2,16,16,128], index: 5, kind: output, shape index: {}]
  %s6 = sld [smem:[#allocation0]]
  $region65: #{tpu_custom_call.1} parent=0
    _
  %s8 = ssub.s32 1, %s6
  %s9 = scalar_select 0, %s8, %s6
  $region1: #{tpu_custom_call.1} parent=0
    #allocation4 [shape = 'u8[262144]{0}', space=vmem, size = 0x40000, scoped, tag = 'input window, operand 0']
    #allocation5 [shape = 's32[2]{0}', space=sflag, size = 0x8, scoped, tag = 'scoped memory for tpu_custom_call.1']
    #allocation6 [shape = 's32[2]{0}', space=sflag, size = 0x8, scoped, tag = 'scoped memory for tpu_custom_call.1']
    #allocation7 [shape = 'u8[147456]{0}', space=vmem, size = 0x24000, scoped, tag = 'input window, operand 1, single buffered']
    #allocation8 [shape = 's32[1]{0}', space=sflag, size = 0x4, scoped, tag = 'scoped memory for tpu_custom_call.1']
    #allocation9 [shape = 'u8[294912]{0}', space=vmem, size = 0x48000, scoped, tag = 'input window, operand 3, single buffered']
    #allocation10 [shape = 'u8[262144]{0}', space=vmem, size = 0x40000, scoped, tag = 'output window, operand 0']
    %10 = vsyncpa [#allocation5], 0
    %s11 = scalar_lea.sflag [#allocation5], 1
    %12 = vsyncpa %s11, 0
    %13 = vsyncpa [#allocation8], 0
    %14 = vsyncpa [#allocation6], 0
    %s15 = scalar_lea.sflag [#allocation6], 1
    %16 = vsyncpa %s15, 0
    loop: start=0, step=1, limit=4
    $region2: #{tpu_custom_call.1} parent=1 // loop_pre_header
      _
    $region3: #{tpu_custom_call.1} parent=1 // loop_header
      %s18 = sphi 0, %s22
      %p19 = scmp.ge.s32.totalorder %s18, 4
      %s28 = sphi 0, %s30
      %s31 = sphi 0, %s28
      %s32 = sphi 0, %s31
      %s48 = sphi 0, %s32
      %s52 = sphi 0, %s52
      %s54 = sphi 0, %s52
      %s55 = sphi 0, %s54
      %s69 = sphi 0, %s55
      %s73 = sphi 0, %s73
      %s75 = sphi 0, %s73
      %s76 = sphi 0, %s75
      %s90 = sphi 0, %s76
      %s94 = sphi 0, %s94
      %s96 = sphi 0, %s94
      %s97 = sphi 0, %s96
      %s111 = sphi 0, %s97
      %s115 = sphi 0, %s115
      %s117 = sphi 0, %s115
      %s118 = sphi 0, %s117
      %s132 = sphi 0, %s118
      %s138 = sphi 0, %s140
      %s141 = sphi 0, %s138
      %s142 = sphi 0, %s141
      %s158 = sphi 0, %s142
    $region4: #{tpu_custom_call.1} parent=1 // loop_header_branch
      %21 = sbr.rel (%p19) target = $region8
    $region5: #{tpu_custom_call.1} parent=1 // loop_body
      %s23 = ssub.s32 %s18, 1
      %s24 = ssub.s32 %s18, 2
      %s25 = sadd.s32 %s18, 1
      %s26 = ssub.s32 %s18, %s25
      %p27 = scmp.eq.s32.totalorder %s26, 0
      %s29 = sadd.s32 %s28, 1
      %s30 = scalar_select %p27, %s28, %s29
      %p33 = pneg %p27
      %p34 = scmp.eq.s32.totalorder %s18, 1
      %p35 = por %p33, %p34
      %p36 = scmp.ne.s32.totalorder %s28, %s31
      %p37 = scmp.eq.s32.totalorder %s18, 0
      %p38 = por %p36, %p37
      %p39 = scmp.ne.s32.totalorder %s28, %s31
      %p40 = scmp.eq.s32.totalorder %s23, 1
      %p41 = por %p39, %p40
      %p42 = scmp.ne.s32.totalorder %s31, %s32
      %p43 = scmp.eq.s32.totalorder %s23, 0
      %p44 = por %p42, %p43
      %p45 = scmp.ne.s32.totalorder %s31, %s32
      %p46 = scmp.eq.s32.totalorder %s24, 1
      %p47 = por %p45, %p46
      %p49 = scmp.ne.s32.totalorder %s32, %s48
      %p50 = scmp.eq.s32.totalorder %s24, 0
      %p51 = por %p49, %p50
      %s53 = sadd.s32 %s52, 1
      %p56 = scmp.eq.s32.totalorder %s18, 1
      %p57 = scmp.ne.s32.totalorder %s52, %s54
      %p58 = scmp.eq.s32.totalorder %s18, 0
      %p59 = por %p57, %p58
      %p60 = scmp.ne.s32.totalorder %s52, %s54
      %p61 = scmp.eq.s32.totalorder %s23, 1
      %p62 = por %p60, %p61
      %p63 = scmp.ne.s32.totalorder %s54, %s55
      %p64 = scmp.eq.s32.totalorder %s23, 0
      %p65 = por %p63, %p64
      %p66 = scmp.ne.s32.totalorder %s54, %s55
      %p67 = scmp.eq.s32.totalorder %s24, 1
      %p68 = por %p66, %p67
      %p70 = scmp.ne.s32.totalorder %s55, %s69
      %p71 = scmp.eq.s32.totalorder %s24, 0
      %p72 = por %p70, %p71
      %s74 = sadd.s32 %s73, 1
      %p77 = scmp.eq.s32.totalorder %s18, 1
      %p78 = scmp.ne.s32.totalorder %s73, %s75
      %p79 = scmp.eq.s32.totalorder %s18, 0
      %p80 = por %p78, %p79
      %p81 = scmp.ne.s32.totalorder %s73, %s75
      %p82 = scmp.eq.s32.totalorder %s23, 1
      %p83 = por %p81, %p82
      %p84 = scmp.ne.s32.totalorder %s75, %s76
      %p85 = scmp.eq.s32.totalorder %s23, 0
      %p86 = por %p84, %p85
      %p87 = scmp.ne.s32.totalorder %s75, %s76
      %p88 = scmp.eq.s32.totalorder %s24, 1
      %p89 = por %p87, %p88
      %p91 = scmp.ne.s32.totalorder %s76, %s90
      %p92 = scmp.eq.s32.totalorder %s24, 0
      %p93 = por %p91, %p92
      %s95 = sadd.s32 %s94, 1
      %p98 = scmp.eq.s32.totalorder %s18, 1
      %p99 = scmp.ne.s32.totalorder %s94, %s96
      %p100 = scmp.eq.s32.totalorder %s18, 0
      %p101 = por %p99, %p100
      %p102 = scmp.ne.s32.totalorder %s94, %s96
      %p103 = scmp.eq.s32.totalorder %s23, 1
      %p104 = por %p102, %p103
      %p105 = scmp.ne.s32.totalorder %s96, %s97
      %p106 = scmp.eq.s32.totalorder %s23, 0
      %p107 = por %p105, %p106
      %p108 = scmp.ne.s32.totalorder %s96, %s97
      %p109 = scmp.eq.s32.totalorder %s24, 1
      %p110 = por %p108, %p109
      %p112 = scmp.ne.s32.totalorder %s97, %s111
      %p113 = scmp.eq.s32.totalorder %s24, 0
      %p114 = por %p112, %p113
      %s116 = sadd.s32 %s115, 1
      %p119 = scmp.eq.s32.totalorder %s18, 1
      %p120 = scmp.ne.s32.totalorder %s115, %s117
      %p121 = scmp.eq.s32.totalorder %s18, 0
      %p122 = por %p120, %p121
      %p123 = scmp.ne.s32.totalorder %s115, %s117
      %p124 = scmp.eq.s32.totalorder %s23, 1
      %p125 = por %p123, %p124
      %p126 = scmp.ne.s32.totalorder %s117, %s118
      %p127 = scmp.eq.s32.totalorder %s23, 0
      %p128 = por %p126, %p127
      %p129 = scmp.ne.s32.totalorder %s117, %s118
      %p130 = scmp.eq.s32.totalorder %s24, 1
      %p131 = por %p129, %p130
      %p133 = scmp.ne.s32.totalorder %s118, %s132
      %p134 = scmp.eq.s32.totalorder %s24, 0
      %p135 = por %p133, %p134
      %s136 = ssub.s32 %s18, %s25
      %p137 = scmp.eq.s32.totalorder %s136, 0
      %s139 = sadd.s32 %s138, 1
      %s140 = scalar_select %p137, %s138, %s139
      %p143 = pneg %p137
      %p144 = scmp.eq.s32.totalorder %s18, 1
      %p145 = por %p143, %p144
      %p146 = scmp.ne.s32.totalorder %s138, %s141
      %p147 = scmp.eq.s32.totalorder %s18, 0
      %p148 = por %p146, %p147
      %p149 = scmp.ne.s32.totalorder %s138, %s141
      %p150 = scmp.eq.s32.totalorder %s23, 1
      %p151 = por %p149, %p150
      %p152 = scmp.ne.s32.totalorder %s141, %s142
      %p153 = scmp.eq.s32.totalorder %s23, 0
      %p154 = por %p152, %p153
      %p155 = scmp.ne.s32.totalorder %s141, %s142
      %p156 = scmp.eq.s32.totalorder %s24, 1
      %p157 = por %p155, %p156
      %p159 = scmp.ne.s32.totalorder %s142, %s158
      %p160 = scmp.eq.s32.totalorder %s24, 0
      %p161 = por %p159, %p160
      %p162 = scmp.le.s32.totalorder 1, %s18
      %p163 = scmp.lt.s32.totalorder %s18, 3
      %p164 = pnand %p162, %p163
      %p165 = pneg %p164
      // Predicated region
      $region9: #{tpu_custom_call.1} parent=5 // pred_check
        _
      $region10: #{tpu_custom_call.1} parent=5 // pred_check_branch
        %167 = sbr.rel (%p164) target = $region12
      $region11: #{tpu_custom_call.1} parent=5 // pred_region
        %s168 = ssub.s32 %s18, 1
        // Predicated region
        $region13: #{tpu_custom_call.1} parent=11 // pred_check
          %p169 = pneg %p65
        $region14: #{tpu_custom_call.1} parent=11 // pred_check_branch
          %171 = sbr.rel (%p169) target = $region16
        $region15: #{tpu_custom_call.1} parent=11 // pred_region
          %s173 = ssub.s32 4608, 4608
          %174 = vsyncadd [#allocation8], %s173
          %s175 = sshll.u32 [#allocation7], 4
          %s176 = int_to_ptr.vmem [resolvable:$true] %s175
          %181 = dma.hbm_to_vmem [thread:$0]  %s1, 4608, %s176, [#allocation8], 64, 64, 4
        $region16: #{tpu_custom_call.1} parent=11 // pred_fallthru
          _
        // Predicated region
        $region17: #{tpu_custom_call.1} parent=11 // pred_check
          %p182 = pneg %p86
        $region18: #{tpu_custom_call.1} parent=11 // pred_check_branch
          %184 = sbr.rel (%p182) target = $region20
        $region19: #{tpu_custom_call.1} parent=11 // pred_region
          _
        $region20: #{tpu_custom_call.1} parent=11 // pred_fallthru
          _
        // Predicated region
        $region21: #{tpu_custom_call.1} parent=11 // pred_check
          %p185 = pneg %p107
        $region22: #{tpu_custom_call.1} parent=11 // pred_check_branch
          %187 = sbr.rel (%p185) target = $region24
        $region23: #{tpu_custom_call.1} parent=11 // pred_region
          %s189 = ssub.s32 9216, 9216
          %190 = vsyncadd [#allocation8], %s189
          %s191 = sshll.u32 [#allocation9], 4
          %s192 = int_to_ptr.vmem [resolvable:$true] %s191
          %197 = dma.hbm_to_vmem [thread:$0]  %s3, 9216, %s192, [#allocation8], 64, 64, 4
        $region24: #{tpu_custom_call.1} parent=11 // pred_fallthru
          _
        // Predicated region
        $region25: #{tpu_custom_call.1} parent=11 // pred_check
          %p198 = pneg %p128
        $region26: #{tpu_custom_call.1} parent=11 // pred_check_branch
          %200 = sbr.rel (%p198) target = $region28
        $region27: #{tpu_custom_call.1} parent=11 // pred_region
          _
        $region28: #{tpu_custom_call.1} parent=11 // pred_fallthru
          _
      $region12: #{tpu_custom_call.1} parent=5 // pred_fallthru
        _
      %p201 = scmp.lt.s32.totalorder %s18, 2
      // Predicated region
      $region29: #{tpu_custom_call.1} parent=5 // pred_check
        %p202 = pneg %p201
      $region30: #{tpu_custom_call.1} parent=5 // pred_check_branch
        %204 = sbr.rel (%p202) target = $region32
      $region31: #{tpu_custom_call.1} parent=5 // pred_region
        // Predicated region
        $region33: #{tpu_custom_call.1} parent=31 // pred_check
          %p205 = pneg %p38
        $region34: #{tpu_custom_call.1} parent=31 // pred_check_branch
          %207 = sbr.rel (%p205) target = $region36
        $region35: #{tpu_custom_call.1} parent=31 // pred_region
          %s208 = sand.u32 %s28, 1
          %s209 = scalar_lea.sflag [#allocation5], %s208
          %s210 = sand.u32 %s28, 1
          %s211 = smul.addr %s210, 256
          %s212 = scalar_lea.vmem [#allocation4], %s211
          %s213 = smul.u32 16, %s18
          %s215 = ssub.s32 4096, 4096
          %216 = vsyncadd %s209, %s215
          %s217 = smul.addr %s213, 4
          %s218 = smul.addr %s217, 64
          %s219 = scalar_lea.hbm %s0, %s218
          %s220 = sshll.u32 %s212, 4
          %s221 = int_to_ptr.vmem [resolvable:$true] %s220
          %226 = dma.hbm_to_vmem [thread:$0]  %s219, 4096, %s221, %s209, 64, 64, 4
        $region36: #{tpu_custom_call.1} parent=31 // pred_fallthru
          _
      $region32: #{tpu_custom_call.1} parent=5 // pred_fallthru
        _
      %p227 = scmp.le.s32.totalorder 1, %s18
      %p228 = scmp.lt.s32.totalorder %s18, 3
      %p229 = pnand %p227, %p228
      %p230 = pneg %p229
      // Predicated region
      $region37: #{tpu_custom_call.1} parent=5 // pred_check
        _
      $region38: #{tpu_custom_call.1} parent=5 // pred_check_branch
        %232 = sbr.rel (%p229) target = $region40
      $region39: #{tpu_custom_call.1} parent=5 // pred_region
        %s233 = ssub.s32 %s18, 1
        %s234 = sand.u32 %s31, 1
        %s235 = scalar_lea.sflag [#allocation5], %s234
        %s236 = sand.u32 %s31, 1
        %s237 = smul.addr %s236, 256
        %s238 = scalar_lea.vmem [#allocation4], %s237
        // Predicated region
        $region41: #{tpu_custom_call.1} parent=39 // pred_check
          %p239 = pneg %p44
        $region42: #{tpu_custom_call.1} parent=39 // pred_check_branch
          %241 = sbr.rel (%p239) target = $region44
        $region43: #{tpu_custom_call.1} parent=39 // pred_region
          %242 = dma.done %s235, 4096
        $region44: #{tpu_custom_call.1} parent=39 // pred_fallthru
          _
        // Predicated region
        $region45: #{tpu_custom_call.1} parent=39 // pred_check
          %p243 = pneg %p65
        $region46: #{tpu_custom_call.1} parent=39 // pred_check_branch
          %245 = sbr.rel (%p243) target = $region48
        $region47: #{tpu_custom_call.1} parent=39 // pred_region
          %246 = dma.done [#allocation8], 4608
        $region48: #{tpu_custom_call.1} parent=39 // pred_fallthru
          _
        // Predicated region
        $region49: #{tpu_custom_call.1} parent=39 // pred_check
          %p247 = pneg %p107
        $region50: #{tpu_custom_call.1} parent=39 // pred_check_branch
          %249 = sbr.rel (%p247) target = $region52
        $region51: #{tpu_custom_call.1} parent=39 // pred_region
          %250 = dma.done [#allocation8], 9216
        $region52: #{tpu_custom_call.1} parent=39 // pred_fallthru
          _
        %s251 = sand.u32 %s31, 1
        %s252 = scalar_lea.sflag [#allocation5], %s251
        %s253 = sand.u32 %s31, 1
        %s254 = smul.addr %s253, 256
        %s255 = scalar_lea.vmem [#allocation4], %s254
        %p256 = pneg %p44
        %p257 = pneg %p41
        %p258 = pneg %p65
        %p259 = pneg %p62
        %p260 = pneg %p86
        %p261 = pneg %p83
        %p262 = pneg %p107
        %p263 = pneg %p104
        %p264 = pneg %p128
        %p265 = pneg %p125
        %p266 = pneg %p154
        %p267 = pneg %p151
        %s268 = sand.u32 %s141, 1
        %s269 = scalar_lea.sflag [#allocation6], %s268
        %s270 = sand.u32 %s141, 1
        %s271 = smul.addr %s270, 256
        %s272 = scalar_lea.vmem [#allocation10], %s271
        %s273 = smul.u32 16, %s23
        %v275 = vld [vmem:[%s238] sm:$0xf]
        %v276 = vld [vmem:[%s238 + $0x4] sm:$0xf]
        %v277 = vld [vmem:[%s238 + $0x8] sm:$0xf]
        %v278 = vld [vmem:[%s238 + $0xc] sm:$0xf]
        %v279 = vld [vmem:[%s238 + $0x10] sm:$0xf]
        %v280 = vld [vmem:[%s238 + $0x14] sm:$0xf]
        %v281 = vld [vmem:[%s238 + $0x18] sm:$0xf]
        %v282 = vld [vmem:[%s238 + $0x1c] sm:$0xf]
        %v283 = vld [vmem:[%s238 + $0x20] sm:$0xf]
        %v284 = vld [vmem:[%s238 + $0x24] sm:$0xf]
        %v285 = vld [vmem:[%s238 + $0x28] sm:$0xf]
        %v286 = vld [vmem:[%s238 + $0x2c] sm:$0xf]
        %v287 = vld [vmem:[%s238 + $0x30] sm:$0xf]
        %v288 = vld [vmem:[%s238 + $0x34] sm:$0xf]
        %v289 = vld [vmem:[%s238 + $0x38] sm:$0xf]
        %v290 = vld [vmem:[%s238 + $0x3c] sm:$0xf]
        %v291 = vld [vmem:[%s238 + $0x40] sm:$0xf]
        %v292 = vld [vmem:[%s238 + $0x44] sm:$0xf]
        %v293 = vld [vmem:[%s238 + $0x48] sm:$0xf]
        %v294 = vld [vmem:[%s238 + $0x4c] sm:$0xf]
        %v295 = vld [vmem:[%s238 + $0x50] sm:$0xf]
        %v296 = vld [vmem:[%s238 + $0x54] sm:$0xf]
        %v297 = vld [vmem:[%s238 + $0x58] sm:$0xf]
        %v298 = vld [vmem:[%s238 + $0x5c] sm:$0xf]
        %v299 = vld [vmem:[%s238 + $0x60] sm:$0xf]
        %v300 = vld [vmem:[%s238 + $0x64] sm:$0xf]
        %v301 = vld [vmem:[%s238 + $0x68] sm:$0xf]
        %v302 = vld [vmem:[%s238 + $0x6c] sm:$0xf]
        %v303 = vld [vmem:[%s238 + $0x70] sm:$0xf]
        %v304 = vld [vmem:[%s238 + $0x74] sm:$0xf]
        %v305 = vld [vmem:[%s238 + $0x78] sm:$0xf]
        %v306 = vld [vmem:[%s238 + $0x7c] sm:$0xf]
        %v307 = vld [vmem:[%s238 + $0x80] sm:$0xf]
        %v308 = vld [vmem:[%s238 + $0x84] sm:$0xf]
        %v309 = vld [vmem:[%s238 + $0x88] sm:$0xf]
        %v310 = vld [vmem:[%s238 + $0x8c] sm:$0xf]
        %v311 = vld [vmem:[%s238 + $0x90] sm:$0xf]
        %v312 = vld [vmem:[%s238 + $0x94] sm:$0xf]
        %v313 = vld [vmem:[%s238 + $0x98] sm:$0xf]
        %v314 = vld [vmem:[%s238 + $0x9c] sm:$0xf]
        %v315 = vld [vmem:[%s238 + $0xa0] sm:$0xf]
        %v316 = vld [vmem:[%s238 + $0xa4] sm:$0xf]
        %v317 = vld [vmem:[%s238 + $0xa8] sm:$0xf]
        %v318 = vld [vmem:[%s238 + $0xac] sm:$0xf]
        %v319 = vld [vmem:[%s238 + $0xb0] sm:$0xf]
        %v320 = vld [vmem:[%s238 + $0xb4] sm:$0xf]
        %v321 = vld [vmem:[%s238 + $0xb8] sm:$0xf]
        %v322 = vld [vmem:[%s238 + $0xbc] sm:$0xf]
        %v323 = vld [vmem:[%s238 + $0xc0] sm:$0xf]
        %v324 = vld [vmem:[%s238 + $0xc4] sm:$0xf]
        %v325 = vld [vmem:[%s238 + $0xc8] sm:$0xf]
        %v326 = vld [vmem:[%s238 + $0xcc] sm:$0xf]
        %v327 = vld [vmem:[%s238 + $0xd0] sm:$0xf]
        %v328 = vld [vmem:[%s238 + $0xd4] sm:$0xf]
        %v329 = vld [vmem:[%s238 + $0xd8] sm:$0xf]
        %v330 = vld [vmem:[%s238 + $0xdc] sm:$0xf]
        %v331 = vld [vmem:[%s238 + $0xe0] sm:$0xf]
        %v332 = vld [vmem:[%s238 + $0xe4] sm:$0xf]
        %v333 = vld [vmem:[%s238 + $0xe8] sm:$0xf]
        %v334 = vld [vmem:[%s238 + $0xec] sm:$0xf]
        %v335 = vld [vmem:[%s238 + $0xf0] sm:$0xf]
        %v336 = vld [vmem:[%s238 + $0xf4] sm:$0xf]
        %v337 = vld [vmem:[%s238 + $0xf8] sm:$0xf]
        %v338 = vld [vmem:[%s238 + $0xfc] sm:$0xf]
        %v339 = vmax.bf16 %v275, %v277
        %v340 = vmax.bf16 %v276, %v278
        %v341 = vmax.bf16 %v279, %v281
        %v342 = vmax.bf16 %v280, %v282
        %v343 = vmax.bf16 %v283, %v285
        %v344 = vmax.bf16 %v284, %v286
        %v345 = vmax.bf16 %v287, %v289
        %v346 = vmax.bf16 %v288, %v290
        %v347 = vmax.bf16 %v291, %v293
        %v348 = vmax.bf16 %v292, %v294
        %v349 = vmax.bf16 %v295, %v297
        %v350 = vmax.bf16 %v296, %v298
        %v351 = vmax.bf16 %v299, %v301
        %v352 = vmax.bf16 %v300, %v302
        %v353 = vmax.bf16 %v303, %v305
        %v354 = vmax.bf16 %v304, %v306
        %v355 = vmax.bf16 %v307, %v309
        %v356 = vmax.bf16 %v308, %v310
        %v357 = vmax.bf16 %v311, %v313
        %v358 = vmax.bf16 %v312, %v314
        %v359 = vmax.bf16 %v315, %v317
        %v360 = vmax.bf16 %v316, %v318
        %v361 = vmax.bf16 %v319, %v321
        %v362 = vmax.bf16 %v320, %v322
        %v363 = vmax.bf16 %v323, %v325
        %v364 = vmax.bf16 %v324, %v326
        %v365 = vmax.bf16 %v327, %v329
        %v366 = vmax.bf16 %v328, %v330
        %v367 = vmax.bf16 %v331, %v333
        %v368 = vmax.bf16 %v332, %v334
        %v369 = vmax.bf16 %v335, %v337
        %v370 = vmax.bf16 %v336, %v338
        %403 = vrot.lane.b32.xlu0 %v339, 64
        %v404 = vpop.permute.xlu0 %403
        %405 = vrot.lane.b32.xlu0 %v340, 64
        %v406 = vpop.permute.xlu0 %405
        %407 = vrot.lane.b32.xlu0 %v341, 64
        %v408 = vpop.permute.xlu0 %407
        %409 = vrot.lane.b32.xlu0 %v342, 64
        %v410 = vpop.permute.xlu0 %409
        %411 = vrot.lane.b32.xlu0 %v343, 64
        %v412 = vpop.permute.xlu0 %411
        %413 = vrot.lane.b32.xlu0 %v344, 64
        %v414 = vpop.permute.xlu0 %413
        %415 = vrot.lane.b32.xlu0 %v345, 64
        %v416 = vpop.permute.xlu0 %415
        %417 = vrot.lane.b32.xlu0 %v346, 64
        %v418 = vpop.permute.xlu0 %417
        %419 = vrot.lane.b32.xlu0 %v347, 64
        %v420 = vpop.permute.xlu0 %419
        %421 = vrot.lane.b32.xlu0 %v348, 64
        %v422 = vpop.permute.xlu0 %421
        %423 = vrot.lane.b32.xlu0 %v349, 64
        %v424 = vpop.permute.xlu0 %423
        %425 = vrot.lane.b32.xlu0 %v350, 64
        %v426 = vpop.permute.xlu0 %425
        %427 = vrot.lane.b32.xlu0 %v351, 64
        %v428 = vpop.permute.xlu0 %427
        %429 = vrot.lane.b32.xlu0 %v352, 64
        %v430 = vpop.permute.xlu0 %429
        %431 = vrot.lane.b32.xlu0 %v353, 64
        %v432 = vpop.permute.xlu0 %431
        %433 = vrot.lane.b32.xlu0 %v354, 64
        %v434 = vpop.permute.xlu0 %433
        %435 = vrot.lane.b32.xlu0 %v355, 64
        %v436 = vpop.permute.xlu0 %435
        %437 = vrot.lane.b32.xlu0 %v356, 64
        %v438 = vpop.permute.xlu0 %437
        %439 = vrot.lane.b32.xlu0 %v357, 64
        %v440 = vpop.permute.xlu0 %439
        %441 = vrot.lane.b32.xlu0 %v358, 64
        %v442 = vpop.permute.xlu0 %441
        %443 = vrot.lane.b32.xlu0 %v359, 64
        %v444 = vpop.permute.xlu0 %443
        %445 = vrot.lane.b32.xlu0 %v360, 64
        %v446 = vpop.permute.xlu0 %445
        %447 = vrot.lane.b32.xlu0 %v361, 64
        %v448 = vpop.permute.xlu0 %447
        %449 = vrot.lane.b32.xlu0 %v362, 64
        %v450 = vpop.permute.xlu0 %449
        %451 = vrot.lane.b32.xlu0 %v363, 64
        %v452 = vpop.permute.xlu0 %451
        %453 = vrot.lane.b32.xlu0 %v364, 64
        %v454 = vpop.permute.xlu0 %453
        %455 = vrot.lane.b32.xlu0 %v365, 64
        %v456 = vpop.permute.xlu0 %455
        %457 = vrot.lane.b32.xlu0 %v366, 64
        %v458 = vpop.permute.xlu0 %457
        %459 = vrot.lane.b32.xlu0 %v367, 64
        %v460 = vpop.permute.xlu0 %459
        %461 = vrot.lane.b32.xlu0 %v368, 64
        %v462 = vpop.permute.xlu0 %461
        %463 = vrot.lane.b32.xlu0 %v369, 64
        %v464 = vpop.permute.xlu0 %463
        %465 = vrot.lane.b32.xlu0 %v370, 64
        %v466 = vpop.permute.xlu0 %465
        %v499 = vmax.bf16 %v339, %v404
        %v500 = vmax.bf16 %v340, %v406
        %v501 = vmax.bf16 %v341, %v408
        %v502 = vmax.bf16 %v342, %v410
        %v503 = vmax.bf16 %v343, %v412
        %v504 = vmax.bf16 %v344, %v414
        %v505 = vmax.bf16 %v345, %v416
        %v506 = vmax.bf16 %v346, %v418
        %v507 = vmax.bf16 %v347, %v420
        %v508 = vmax.bf16 %v348, %v422
        %v509 = vmax.bf16 %v349, %v424
        %v510 = vmax.bf16 %v350, %v426
        %v511 = vmax.bf16 %v351, %v428
        %v512 = vmax.bf16 %v352, %v430
        %v513 = vmax.bf16 %v353, %v432
        %v514 = vmax.bf16 %v354, %v434
        %v515 = vmax.bf16 %v355, %v436
        %v516 = vmax.bf16 %v356, %v438
        %v517 = vmax.bf16 %v357, %v440
        %v518 = vmax.bf16 %v358, %v442
        %v519 = vmax.bf16 %v359, %v444
        %v520 = vmax.bf16 %v360, %v446
        %v521 = vmax.bf16 %v361, %v448
        %v522 = vmax.bf16 %v362, %v450
        %v523 = vmax.bf16 %v363, %v452
        %v524 = vmax.bf16 %v364, %v454
        %v525 = vmax.bf16 %v365, %v456
        %v526 = vmax.bf16 %v366, %v458
        %v527 = vmax.bf16 %v367, %v460
        %v528 = vmax.bf16 %v368, %v462
        %v529 = vmax.bf16 %v369, %v464
        %v530 = vmax.bf16 %v370, %v466
        %v531 = vunpack.c.l.bf16 %v499
        %v532 = vunpack.c.l.bf16 %v500
        %v533 = vunpack.c.l.bf16 %v501
        %v534 = vunpack.c.l.bf16 %v502
        %v535 = vunpack.c.l.bf16 %v503
        %v536 = vunpack.c.l.bf16 %v504
        %v537 = vunpack.c.l.bf16 %v505
        %v538 = vunpack.c.l.bf16 %v506
        %v539 = vunpack.c.l.bf16 %v507
        %v540 = vunpack.c.l.bf16 %v508
        %v541 = vunpack.c.l.bf16 %v509
        %v542 = vunpack.c.l.bf16 %v510
        %v543 = vunpack.c.l.bf16 %v511
        %v544 = vunpack.c.l.bf16 %v512
        %v545 = vunpack.c.l.bf16 %v513
        %v546 = vunpack.c.l.bf16 %v514
        %v547 = vunpack.c.l.bf16 %v515
        %v548 = vunpack.c.l.bf16 %v516
        %v549 = vunpack.c.l.bf16 %v517
        %v550 = vunpack.c.l.bf16 %v518
        %v551 = vunpack.c.l.bf16 %v519
        %v552 = vunpack.c.l.bf16 %v520
        %v553 = vunpack.c.l.bf16 %v521
        %v554 = vunpack.c.l.bf16 %v522
        %v555 = vunpack.c.l.bf16 %v523
        %v556 = vunpack.c.l.bf16 %v524
        %v557 = vunpack.c.l.bf16 %v525
        %v558 = vunpack.c.l.bf16 %v526
        %v559 = vunpack.c.l.bf16 %v527
        %v560 = vunpack.c.l.bf16 %v528
        %v561 = vunpack.c.l.bf16 %v529
        %v562 = vunpack.c.l.bf16 %v530
        %563 = vst [vmem:[#allocation2] sm:$0xff] 0.0
        %vm564 = vcmask 523264
        %565 = vst.msk [vmem:[#allocation2 + $0x8] sm:$0xff] %vm564, 0.0
        %566 = vst [vmem:[#allocation2 + $0x10] sm:$0xff] 0.0
        %567 = vst.msk [vmem:[#allocation2 + $0x18] sm:$0xff] %vm564, 0.0
        %s568 = scalar_lea.vmem [#allocation2], 544
        %569 = vst [vmem:[%s568] sm:$0xff] 0.0
        %570 = vst.msk [vmem:[%s568 + $0x8] sm:$0xff] %vm564, 0.0
        %571 = vst [vmem:[%s568 + $0x10] sm:$0xff] 0.0
        %572 = vst.msk [vmem:[%s568 + $0x18] sm:$0xff] %vm564, 0.0
        %s573 = scalar_lea.vmem [#allocation2], 32
        %vm574 = vcmask 516096
        %575 = vst.msk [vmem:[%s573] sm:$0x1] %vm574, 0.0
        %576 = vst.msk [vmem:[%s573 + $0x20] sm:$0x1] %vm574, 0.0
        %577 = vst.msk [vmem:[%s573 + $0x40] sm:$0x1] %vm574, 0.0
        %578 = vst.msk [vmem:[%s573 + $0x60] sm:$0x1] %vm574, 0.0
        %579 = vst.msk [vmem:[%s573 + $0x80] sm:$0x1] %vm574, 0.0
        %580 = vst.msk [vmem:[%s573 + $0xa0] sm:$0x1] %vm574, 0.0
        %581 = vst.msk [vmem:[%s573 + $0xc0] sm:$0x1] %vm574, 0.0
        %582 = vst.msk [vmem:[%s573 + $0xe0] sm:$0x1] %vm574, 0.0
        %583 = vst.msk [vmem:[%s573 + $0x100] sm:$0x1] %vm574, 0.0
        %584 = vst.msk [vmem:[%s573 + $0x120] sm:$0x1] %vm574, 0.0
        %585 = vst.msk [vmem:[%s573 + $0x140] sm:$0x1] %vm574, 0.0
        %586 = vst.msk [vmem:[%s573 + $0x160] sm:$0x1] %vm574, 0.0
        %587 = vst.msk [vmem:[%s573 + $0x180] sm:$0x1] %vm574, 0.0
        %588 = vst.msk [vmem:[%s573 + $0x1a0] sm:$0x1] %vm574, 0.0
        %589 = vst.msk [vmem:[%s573 + $0x1c0] sm:$0x1] %vm574, 0.0
        %590 = vst.msk [vmem:[%s573 + $0x1e0] sm:$0x1] %vm574, 0.0
        %591 = vst.msk [vmem:[%s573 + $0x1f] sm:$0x1] %vm574, 0.0
        %592 = vst.msk [vmem:[%s573 + $0x3f] sm:$0x1] %vm574, 0.0
        %593 = vst.msk [vmem:[%s573 + $0x5f] sm:$0x1] %vm574, 0.0
        %594 = vst.msk [vmem:[%s573 + $0x7f] sm:$0x1] %vm574, 0.0
        %595 = vst.msk [vmem:[%s573 + $0x9f] sm:$0x1] %vm574, 0.0
        %596 = vst.msk [vmem:[%s573 + $0xbf] sm:$0x1] %vm574, 0.0
        %597 = vst.msk [vmem:[%s573 + $0xdf] sm:$0x1] %vm574, 0.0
        %598 = vst.msk [vmem:[%s573 + $0xff] sm:$0x1] %vm574, 0.0
        %599 = vst.msk [vmem:[%s573 + $0x11f] sm:$0x1] %vm574, 0.0
        %600 = vst.msk [vmem:[%s573 + $0x13f] sm:$0x1] %vm574, 0.0
        %601 = vst.msk [vmem:[%s573 + $0x15f] sm:$0x1] %vm574, 0.0
        %602 = vst.msk [vmem:[%s573 + $0x17f] sm:$0x1] %vm574, 0.0
        %603 = vst.msk [vmem:[%s573 + $0x19f] sm:$0x1] %vm574, 0.0
        %604 = vst.msk [vmem:[%s573 + $0x1bf] sm:$0x1] %vm574, 0.0
        %605 = vst.msk [vmem:[%s573 + $0x1df] sm:$0x1] %vm574, 0.0
        %606 = vst.msk [vmem:[%s573 + $0x1ff] sm:$0x1] %vm574, 0.0
        %vm639 = vcmask 1040384
        %v640 = vrot.slane %v531, 7
        %v641 = vrot.slane %v532, 7
        %v642 = vsel %vm639, %v640, %v641
        %v643 = vrot.slane %v533, 7
        %v644 = vrot.slane %v534, 7
        %v645 = vsel %vm639, %v643, %v644
        %v646 = vrot.slane %v535, 7
        %v647 = vrot.slane %v536, 7
        %v648 = vsel %vm639, %v646, %v647
        %v649 = vrot.slane %v537, 7
        %v650 = vrot.slane %v538, 7
        %v651 = vsel %vm639, %v649, %v650
        %v652 = vrot.slane %v539, 7
        %v653 = vrot.slane %v540, 7
        %v654 = vsel %vm639, %v652, %v653
        %v655 = vrot.slane %v541, 7
        %v656 = vrot.slane %v542, 7
        %v657 = vsel %vm639, %v655, %v656
        %v658 = vrot.slane %v543, 7
        %v659 = vrot.slane %v544, 7
        %v660 = vsel %vm639, %v658, %v659
        %v661 = vrot.slane %v545, 7
        %v662 = vrot.slane %v546, 7
        %v663 = vsel %vm639, %v661, %v662
        %v664 = vrot.slane %v547, 7
        %v665 = vrot.slane %v548, 7
        %v666 = vsel %vm639, %v664, %v665
        %v667 = vrot.slane %v549, 7
        %v668 = vrot.slane %v550, 7
        %v669 = vsel %vm639, %v667, %v668
        %v670 = vrot.slane %v551, 7
        %v671 = vrot.slane %v552, 7
        %v672 = vsel %vm639, %v670, %v671
        %v673 = vrot.slane %v553, 7
        %v674 = vrot.slane %v554, 7
        %v675 = vsel %vm639, %v673, %v674
        %v676 = vrot.slane %v555, 7
        %v677 = vrot.slane %v556, 7
        %v678 = vsel %vm639, %v676, %v677
        %v679 = vrot.slane %v557, 7
        %v680 = vrot.slane %v558, 7
        %v681 = vsel %vm639, %v679, %v680
        %v682 = vrot.slane %v559, 7
        %v683 = vrot.slane %v560, 7
        %v684 = vsel %vm639, %v682, %v683
        %v685 = vrot.slane %v561, 7
        %v686 = vrot.slane %v562, 7
        %v687 = vsel %vm639, %v685, %v686
        %vm720 = vcmask 523265
        %721 = vst.msk [vmem:[%s573] sm:$0xfe] %vm720, %v640
        %722 = vst.msk [vmem:[%s573 + $0x10] sm:$0xff] %vm564, %v642
        %723 = vst.msk [vmem:[%s573 + $0x20] sm:$0xfe] %vm720, %v643
        %724 = vst.msk [vmem:[%s573 + $0x30] sm:$0xff] %vm564, %v645
        %725 = vst.msk [vmem:[%s573 + $0x40] sm:$0xfe] %vm720, %v646
        %726 = vst.msk [vmem:[%s573 + $0x50] sm:$0xff] %vm564, %v648
        %727 = vst.msk [vmem:[%s573 + $0x60] sm:$0xfe] %vm720, %v649
        %728 = vst.msk [vmem:[%s573 + $0x70] sm:$0xff] %vm564, %v651
        %729 = vst.msk [vmem:[%s573 + $0x80] sm:$0xfe] %vm720, %v652
        %730 = vst.msk [vmem:[%s573 + $0x90] sm:$0xff] %vm564, %v654
        %731 = vst.msk [vmem:[%s573 + $0xa0] sm:$0xfe] %vm720, %v655
        %732 = vst.msk [vmem:[%s573 + $0xb0] sm:$0xff] %vm564, %v657
        %733 = vst.msk [vmem:[%s573 + $0xc0] sm:$0xfe] %vm720, %v658
        %734 = vst.msk [vmem:[%s573 + $0xd0] sm:$0xff] %vm564, %v660
        %735 = vst.msk [vmem:[%s573 + $0xe0] sm:$0xfe] %vm720, %v661
        %736 = vst.msk [vmem:[%s573 + $0xf0] sm:$0xff] %vm564, %v663
        %737 = vst.msk [vmem:[%s573 + $0x100] sm:$0xfe] %vm720, %v664
        %738 = vst.msk [vmem:[%s573 + $0x110] sm:$0xff] %vm564, %v666
        %739 = vst.msk [vmem:[%s573 + $0x120] sm:$0xfe] %vm720, %v667
        %740 = vst.msk [vmem:[%s573 + $0x130] sm:$0xff] %vm564, %v669
        %741 = vst.msk [vmem:[%s573 + $0x140] sm:$0xfe] %vm720, %v670
        %742 = vst.msk [vmem:[%s573 + $0x150] sm:$0xff] %vm564, %v672
        %743 = vst.msk [vmem:[%s573 + $0x160] sm:$0xfe] %vm720, %v673
        %744 = vst.msk [vmem:[%s573 + $0x170] sm:$0xff] %vm564, %v675
        %745 = vst.msk [vmem:[%s573 + $0x180] sm:$0xfe] %vm720, %v676
        %746 = vst.msk [vmem:[%s573 + $0x190] sm:$0xff] %vm564, %v678
        %747 = vst.msk [vmem:[%s573 + $0x1a0] sm:$0xfe] %vm720, %v679
        %748 = vst.msk [vmem:[%s573 + $0x1b0] sm:$0xff] %vm564, %v681
        %749 = vst.msk [vmem:[%s573 + $0x1c0] sm:$0xfe] %vm720, %v682
        %750 = vst.msk [vmem:[%s573 + $0x1d0] sm:$0xff] %vm564, %v684
        %751 = vst.msk [vmem:[%s573 + $0x1e0] sm:$0xfe] %vm720, %v685
        %752 = vst.msk [vmem:[%s573 + $0x1f0] sm:$0xff] %vm564, %v687
        %753 = vrot.lane.b32.xlu0 %v531, 64
        %v754 = vpop.permute.xlu0 %753
        %755 = vrot.lane.b32.xlu0 %v532, 64
        %v756 = vpop.permute.xlu0 %755
        %757 = vrot.lane.b32.xlu0 %v533, 64
        %v758 = vpop.permute.xlu0 %757
        %759 = vrot.lane.b32.xlu0 %v534, 64
        %v760 = vpop.permute.xlu0 %759
        %761 = vrot.lane.b32.xlu0 %v535, 64
        %v762 = vpop.permute.xlu0 %761
        %763 = vrot.lane.b32.xlu0 %v536, 64
        %v764 = vpop.permute.xlu0 %763
        %765 = vrot.lane.b32.xlu0 %v537, 64
        %v766 = vpop.permute.xlu0 %765
        %767 = vrot.lane.b32.xlu0 %v538, 64
        %v768 = vpop.permute.xlu0 %767
        %769 = vrot.lane.b32.xlu0 %v539, 64
        %v770 = vpop.permute.xlu0 %769
        %771 = vrot.lane.b32.xlu0 %v540, 64
        %v772 = vpop.permute.xlu0 %771
        %773 = vrot.lane.b32.xlu0 %v541, 64
        %v774 = vpop.permute.xlu0 %773
        %775 = vrot.lane.b32.xlu0 %v542, 64
        %v776 = vpop.permute.xlu0 %775
        %777 = vrot.lane.b32.xlu0 %v543, 64
        %v778 = vpop.permute.xlu0 %777
        %779 = vrot.lane.b32.xlu0 %v544, 64
        %v780 = vpop.permute.xlu0 %779
        %781 = vrot.lane.b32.xlu0 %v545, 64
        %v782 = vpop.permute.xlu0 %781
        %783 = vrot.lane.b32.xlu0 %v546, 64
        %v784 = vpop.permute.xlu0 %783
        %785 = vrot.lane.b32.xlu0 %v547, 64
        %v786 = vpop.permute.xlu0 %785
        %787 = vrot.lane.b32.xlu0 %v548, 64
        %v788 = vpop.permute.xlu0 %787
        %789 = vrot.lane.b32.xlu0 %v549, 64
        %v790 = vpop.permute.xlu0 %789
        %791 = vrot.lane.b32.xlu0 %v550, 64
        %v792 = vpop.permute.xlu0 %791
        %793 = vrot.lane.b32.xlu0 %v551, 64
        %v794 = vpop.permute.xlu0 %793
        %795 = vrot.lane.b32.xlu0 %v552, 64
        %v796 = vpop.permute.xlu0 %795
        %797 = vrot.lane.b32.xlu0 %v553, 64
        %v798 = vpop.permute.xlu0 %797
        %799 = vrot.lane.b32.xlu0 %v554, 64
        %v800 = vpop.permute.xlu0 %799
        %801 = vrot.lane.b32.xlu0 %v555, 64
        %v802 = vpop.permute.xlu0 %801
        %803 = vrot.lane.b32.xlu0 %v556, 64
        %v804 = vpop.permute.xlu0 %803
        %805 = vrot.lane.b32.xlu0 %v557, 64
        %v806 = vpop.permute.xlu0 %805
        %807 = vrot.lane.b32.xlu0 %v558, 64
        %v808 = vpop.permute.xlu0 %807
        %809 = vrot.lane.b32.xlu0 %v559, 64
        %v810 = vpop.permute.xlu0 %809
        %811 = vrot.lane.b32.xlu0 %v560, 64
        %v812 = vpop.permute.xlu0 %811
        %813 = vrot.lane.b32.xlu0 %v561, 64
        %v814 = vpop.permute.xlu0 %813
        %815 = vrot.lane.b32.xlu0 %v562, 64
        %v816 = vpop.permute.xlu0 %815
        %vm849 = vcmask 1048064
        %850 = vst.msk [vmem:[%s573] sm:$0xff] %vm849, %v754
        %851 = vst.msk [vmem:[%s573 + $0x10] sm:$0xff] %vm849, %v756
        %852 = vst.msk [vmem:[%s573 + $0x20] sm:$0xff] %vm849, %v758
        %853 = vst.msk [vmem:[%s573 + $0x30] sm:$0xff] %vm849, %v760
        %854 = vst.msk [vmem:[%s573 + $0x40] sm:$0xff] %vm849, %v762
        %855 = vst.msk [vmem:[%s573 + $0x50] sm:$0xff] %vm849, %v764
        %856 = vst.msk [vmem:[%s573 + $0x60] sm:$0xff] %vm849, %v766
        %857 = vst.msk [vmem:[%s573 + $0x70] sm:$0xff] %vm849, %v768
        %858 = vst.msk [vmem:[%s573 + $0x80] sm:$0xff] %vm849, %v770
        %859 = vst.msk [vmem:[%s573 + $0x90] sm:$0xff] %vm849, %v772
        %860 = vst.msk [vmem:[%s573 + $0xa0] sm:$0xff] %vm849, %v774
        %861 = vst.msk [vmem:[%s573 + $0xb0] sm:$0xff] %vm849, %v776
        %862 = vst.msk [vmem:[%s573 + $0xc0] sm:$0xff] %vm849, %v778
        %863 = vst.msk [vmem:[%s573 + $0xd0] sm:$0xff] %vm849, %v780
        %864 = vst.msk [vmem:[%s573 + $0xe0] sm:$0xff] %vm849, %v782
        %865 = vst.msk [vmem:[%s573 + $0xf0] sm:$0xff] %vm849, %v784
        %866 = vst.msk [vmem:[%s573 + $0x100] sm:$0xff] %vm849, %v786
        %867 = vst.msk [vmem:[%s573 + $0x110] sm:$0xff] %vm849, %v788
        %868 = vst.msk [vmem:[%s573 + $0x120] sm:$0xff] %vm849, %v790
        %869 = vst.msk [vmem:[%s573 + $0x130] sm:$0xff] %vm849, %v792
        %870 = vst.msk [vmem:[%s573 + $0x140] sm:$0xff] %vm849, %v794
        %871 = vst.msk [vmem:[%s573 + $0x150] sm:$0xff] %vm849, %v796
        %872 = vst.msk [vmem:[%s573 + $0x160] sm:$0xff] %vm849, %v798
        %873 = vst.msk [vmem:[%s573 + $0x170] sm:$0xff] %vm849, %v800
        %874 = vst.msk [vmem:[%s573 + $0x180] sm:$0xff] %vm849, %v802
        %875 = vst.msk [vmem:[%s573 + $0x190] sm:$0xff] %vm849, %v804
        %876 = vst.msk [vmem:[%s573 + $0x1a0] sm:$0xff] %vm849, %v806
        %877 = vst.msk [vmem:[%s573 + $0x1b0] sm:$0xff] %vm849, %v808
        %878 = vst.msk [vmem:[%s573 + $0x1c0] sm:$0xff] %vm849, %v810
        %879 = vst.msk [vmem:[%s573 + $0x1d0] sm:$0xff] %vm849, %v812
        %880 = vst.msk [vmem:[%s573 + $0x1e0] sm:$0xff] %vm849, %v814
        %881 = vst.msk [vmem:[%s573 + $0x1f0] sm:$0xff] %vm849, %v816
        %vm882 = vcmask 1046528
        %v883 = vrot.slane %v531, 1
        %v884 = vrot.slane %v532, 1
        %v885 = vsel %vm882, %v883, %v884
        %v886 = vrot.slane %v533, 1
        %v887 = vrot.slane %v534, 1
        %v888 = vsel %vm882, %v886, %v887
        %v889 = vrot.slane %v535, 1
        %v890 = vrot.slane %v536, 1
        %v891 = vsel %vm882, %v889, %v890
        %v892 = vrot.slane %v537, 1
        %v893 = vrot.slane %v538, 1
        %v894 = vsel %vm882, %v892, %v893
        %v895 = vrot.slane %v539, 1
        %v896 = vrot.slane %v540, 1
        %v897 = vsel %vm882, %v895, %v896
        %v898 = vrot.slane %v541, 1
        %v899 = vrot.slane %v542, 1
        %v900 = vsel %vm882, %v898, %v899
        %v901 = vrot.slane %v543, 1
        %v902 = vrot.slane %v544, 1
        %v903 = vsel %vm882, %v901, %v902
        %v904 = vrot.slane %v545, 1
        %v905 = vrot.slane %v546, 1
        %v906 = vsel %vm882, %v904, %v905
        %v907 = vrot.slane %v547, 1
        %v908 = vrot.slane %v548, 1
        %v909 = vsel %vm882, %v907, %v908
        %v910 = vrot.slane %v549, 1
        %v911 = vrot.slane %v550, 1
        %v912 = vsel %vm882, %v910, %v911
        %v913 = vrot.slane %v551, 1
        %v914 = vrot.slane %v552, 1
        %v915 = vsel %vm882, %v913, %v914
        %v916 = vrot.slane %v553, 1
        %v917 = vrot.slane %v554, 1
        %v918 = vsel %vm882, %v916, %v917
        %v919 = vrot.slane %v555, 1
        %v920 = vrot.slane %v556, 1
        %v921 = vsel %vm882, %v919, %v920
        %v922 = vrot.slane %v557, 1
        %v923 = vrot.slane %v558, 1
        %v924 = vsel %vm882, %v922, %v923
        %v925 = vrot.slane %v559, 1
        %v926 = vrot.slane %v560, 1
        %v927 = vsel %vm882, %v925, %v926
        %v928 = vrot.slane %v561, 1
        %v929 = vrot.slane %v562, 1
        %v930 = vsel %vm882, %v928, %v929
        %963 = vst.msk [vmem:[%s573 + $0x8] sm:$0xff] %vm564, %v885
        %vm964 = vcmask 522240
        %965 = vst.msk [vmem:[%s573 + $0x18] sm:$0x7f] %vm964, %v884
        %966 = vst.msk [vmem:[%s573 + $0x28] sm:$0xff] %vm564, %v888
        %967 = vst.msk [vmem:[%s573 + $0x38] sm:$0x7f] %vm964, %v887
        %968 = vst.msk [vmem:[%s573 + $0x48] sm:$0xff] %vm564, %v891
        %969 = vst.msk [vmem:[%s573 + $0x58] sm:$0x7f] %vm964, %v890
        %970 = vst.msk [vmem:[%s573 + $0x68] sm:$0xff] %vm564, %v894
        %971 = vst.msk [vmem:[%s573 + $0x78] sm:$0x7f] %vm964, %v893
        %972 = vst.msk [vmem:[%s573 + $0x88] sm:$0xff] %vm564, %v897
        %973 = vst.msk [vmem:[%s573 + $0x98] sm:$0x7f] %vm964, %v896
        %974 = vst.msk [vmem:[%s573 + $0xa8] sm:$0xff] %vm564, %v900
        %975 = vst.msk [vmem:[%s573 + $0xb8] sm:$0x7f] %vm964, %v899
        %976 = vst.msk [vmem:[%s573 + $0xc8] sm:$0xff] %vm564, %v903
        %977 = vst.msk [vmem:[%s573 + $0xd8] sm:$0x7f] %vm964, %v902
        %978 = vst.msk [vmem:[%s573 + $0xe8] sm:$0xff] %vm564, %v906
        %979 = vst.msk [vmem:[%s573 + $0xf8] sm:$0x7f] %vm964, %v905
        %980 = vst.msk [vmem:[%s573 + $0x108] sm:$0xff] %vm564, %v909
        %981 = vst.msk [vmem:[%s573 + $0x118] sm:$0x7f] %vm964, %v908
        %982 = vst.msk [vmem:[%s573 + $0x128] sm:$0xff] %vm564, %v912
        %983 = vst.msk [vmem:[%s573 + $0x138] sm:$0x7f] %vm964, %v911
        %984 = vst.msk [vmem:[%s573 + $0x148] sm:$0xff] %vm564, %v915
        %985 = vst.msk [vmem:[%s573 + $0x158] sm:$0x7f] %vm964, %v914
        %986 = vst.msk [vmem:[%s573 + $0x168] sm:$0xff] %vm564, %v918
        %987 = vst.msk [vmem:[%s573 + $0x178] sm:$0x7f] %vm964, %v917
        %988 = vst.msk [vmem:[%s573 + $0x188] sm:$0xff] %vm564, %v921
        %989 = vst.msk [vmem:[%s573 + $0x198] sm:$0x7f] %vm964, %v920
        %990 = vst.msk [vmem:[%s573 + $0x1a8] sm:$0xff] %vm564, %v924
        %991 = vst.msk [vmem:[%s573 + $0x1b8] sm:$0x7f] %vm964, %v923
        %992 = vst.msk [vmem:[%s573 + $0x1c8] sm:$0xff] %vm564, %v927
        %993 = vst.msk [vmem:[%s573 + $0x1d8] sm:$0x7f] %vm964, %v926
        %994 = vst.msk [vmem:[%s573 + $0x1e8] sm:$0xff] %vm564, %v930
        %995 = vst.msk [vmem:[%s573 + $0x1f8] sm:$0x7f] %vm964, %v929
        %v996 = vld [vmem:[#allocation2] sm:$0xff]
        %v997 = vld [vmem:[#allocation2 + $0x8] sm:$0xff]
        %v998 = vld [vmem:[#allocation2 + $0x10] sm:$0xff]
        %v999 = vld [vmem:[#allocation2 + $0x18] sm:$0xff]
        %v1000 = vld [vmem:[#allocation2 + $0x20] sm:$0xff]
        %v1001 = vld [vmem:[#allocation2 + $0x28] sm:$0xff]
        %v1002 = vld [vmem:[#allocation2 + $0x30] sm:$0xff]
        %v1003 = vld [vmem:[#allocation2 + $0x38] sm:$0xff]
        %v1004 = vld [vmem:[#allocation2 + $0x40] sm:$0xff]
        %v1005 = vld [vmem:[#allocation2 + $0x48] sm:$0xff]
        %v1006 = vld [vmem:[#allocation2 + $0x50] sm:$0xff]
        %v1007 = vld [vmem:[#allocation2 + $0x58] sm:$0xff]
        %v1008 = vld [vmem:[#allocation2 + $0x60] sm:$0xff]
        %v1009 = vld [vmem:[#allocation2 + $0x68] sm:$0xff]
        %v1010 = vld [vmem:[#allocation2 + $0x70] sm:$0xff]
        %v1011 = vld [vmem:[#allocation2 + $0x78] sm:$0xff]
        %v1012 = vld [vmem:[#allocation2 + $0x80] sm:$0xff]
        %v1013 = vld [vmem:[#allocation2 + $0x88] sm:$0xff]
        %v1014 = vld [vmem:[#allocation2 + $0x90] sm:$0xff]
        %v1015 = vld [vmem:[#allocation2 + $0x98] sm:$0xff]
        %v1016 = vld [vmem:[#allocation2 + $0xa0] sm:$0xff]
        %v1017 = vld [vmem:[#allocation2 + $0xa8] sm:$0xff]
        %v1018 = vld [vmem:[#allocation2 + $0xb0] sm:$0xff]
        %v1019 = vld [vmem:[#allocation2 + $0xb8] sm:$0xff]
        %v1020 = vld [vmem:[#allocation2 + $0xc0] sm:$0xff]
        %v1021 = vld [vmem:[#allocation2 + $0xc8] sm:$0xff]
        %v1022 = vld [vmem:[#allocation2 + $0xd0] sm:$0xff]
        %v1023 = vld [vmem:[#allocation2 + $0xd8] sm:$0xff]
        %v1024 = vld [vmem:[#allocation2 + $0xe0] sm:$0xff]
        %v1025 = vld [vmem:[#allocation2 + $0xe8] sm:$0xff]
        %v1026 = vld [vmem:[#allocation2 + $0xf0] sm:$0xff]
        %v1027 = vld [vmem:[#allocation2 + $0xf8] sm:$0xff]
        %v1028 = vld [vmem:[#allocation2 + $0x100] sm:$0xff]
        %v1029 = vld [vmem:[#allocation2 + $0x108] sm:$0xff]
        %v1030 = vld [vmem:[#allocation2 + $0x110] sm:$0xff]
        %v1031 = vld [vmem:[#allocation2 + $0x118] sm:$0xff]
        %v1032 = vld [vmem:[#allocation2 + $0x120] sm:$0xff]
        %v1033 = vld [vmem:[#allocation2 + $0x128] sm:$0xff]
        %v1034 = vld [vmem:[#allocation2 + $0x130] sm:$0xff]
        %v1035 = vld [vmem:[#allocation2 + $0x138] sm:$0xff]
        %v1036 = vld [vmem:[#allocation2 + $0x140] sm:$0xff]
        %v1037 = vld [vmem:[#allocation2 + $0x148] sm:$0xff]
        %v1038 = vld [vmem:[#allocation2 + $0x150] sm:$0xff]
        %v1039 = vld [vmem:[#allocation2 + $0x158] sm:$0xff]
        %v1040 = vld [vmem:[#allocation2 + $0x160] sm:$0xff]
        %v1041 = vld [vmem:[#allocation2 + $0x168] sm:$0xff]
        %v1042 = vld [vmem:[#allocation2 + $0x170] sm:$0xff]
        %v1043 = vld [vmem:[#allocation2 + $0x178] sm:$0xff]
        %v1044 = vld [vmem:[#allocation2 + $0x180] sm:$0xff]
        %v1045 = vld [vmem:[#allocation2 + $0x188] sm:$0xff]
        %v1046 = vld [vmem:[#allocation2 + $0x190] sm:$0xff]
        %v1047 = vld [vmem:[#allocation2 + $0x198] sm:$0xff]
        %v1048 = vld [vmem:[#allocation2 + $0x1a0] sm:$0xff]
        %v1049 = vld [vmem:[#allocation2 + $0x1a8] sm:$0xff]
        %v1050 = vld [vmem:[#allocation2 + $0x1b0] sm:$0xff]
        %v1051 = vld [vmem:[#allocation2 + $0x1b8] sm:$0xff]
        %v1052 = vld [vmem:[#allocation2 + $0x1c0] sm:$0xff]
        %v1053 = vld [vmem:[#allocation2 + $0x1c8] sm:$0xff]
        %v1054 = vld [vmem:[#allocation2 + $0x1d0] sm:$0xff]
        %v1055 = vld [vmem:[#allocation2 + $0x1d8] sm:$0xff]
        %v1056 = vld [vmem:[#allocation2 + $0x1e0] sm:$0xff]
        %v1057 = vld [vmem:[#allocation2 + $0x1e8] sm:$0xff]
        %v1058 = vld [vmem:[#allocation2 + $0x1f0] sm:$0xff]
        %v1059 = vld [vmem:[#allocation2 + $0x1f8] sm:$0xff]
        %v1060 = vpack.c.bf16 %v998, %v996
        %v1061 = vpack.c.bf16 %v999, %v997
        %v1062 = vpack.c.bf16 %v1002, %v1000
        %v1063 = vpack.c.bf16 %v1003, %v1001
        %v1064 = vpack.c.bf16 %v1006, %v1004
        %v1065 = vpack.c.bf16 %v1007, %v1005
        %v1066 = vpack.c.bf16 %v1010, %v1008
        %v1067 = vpack.c.bf16 %v1011, %v1009
        %v1068 = vpack.c.bf16 %v1014, %v1012
        %v1069 = vpack.c.bf16 %v1015, %v1013
        %v1070 = vpack.c.bf16 %v1018, %v1016
        %v1071 = vpack.c.bf16 %v1019, %v1017
        %v1072 = vpack.c.bf16 %v1022, %v1020
        %v1073 = vpack.c.bf16 %v1023, %v1021
        %v1074 = vpack.c.bf16 %v1026, %v1024
        %v1075 = vpack.c.bf16 %v1027, %v1025
        %v1076 = vpack.c.bf16 %v1030, %v1028
        %v1077 = vpack.c.bf16 %v1031, %v1029
        %v1078 = vpack.c.bf16 %v1034, %v1032
        %v1079 = vpack.c.bf16 %v1035, %v1033
        %v1080 = vpack.c.bf16 %v1038, %v1036
        %v1081 = vpack.c.bf16 %v1039, %v1037
        %v1082 = vpack.c.bf16 %v1042, %v1040
        %v1083 = vpack.c.bf16 %v1043, %v1041
        %v1084 = vpack.c.bf16 %v1046, %v1044
        %v1085 = vpack.c.bf16 %v1047, %v1045
        %v1086 = vpack.c.bf16 %v1050, %v1048
        %v1087 = vpack.c.bf16 %v1051, %v1049
        %v1088 = vpack.c.bf16 %v1054, %v1052
        %v1089 = vpack.c.bf16 %v1055, %v1053
        %v1090 = vpack.c.bf16 %v1058, %v1056
        %v1091 = vpack.c.bf16 %v1059, %v1057
        %v1092 = vld [vmem:[#allocation7] sm:$0xf]
        %v1093 = vld [vmem:[#allocation7 + $0x4] sm:$0xf]
        %v1094 = vld [vmem:[#allocation7 + $0x8] sm:$0xf]
        %v1095 = vld [vmem:[#allocation7 + $0xc] sm:$0xf]
        %v1096 = vld [vmem:[#allocation7 + $0x10] sm:$0xf]
        %v1097 = vld [vmem:[#allocation7 + $0x14] sm:$0xf]
        %v1098 = vld [vmem:[#allocation7 + $0x18] sm:$0xf]
        %v1099 = vld [vmem:[#allocation7 + $0x1c] sm:$0xf]
        %v1100 = vld [vmem:[#allocation7 + $0x20] sm:$0xf]
        %v1101 = vld [vmem:[#allocation7 + $0x24] sm:$0xf]
        %v1102 = vld [vmem:[#allocation7 + $0x28] sm:$0xf]
        %v1103 = vld [vmem:[#allocation7 + $0x2c] sm:$0xf]
        %v1104 = vld [vmem:[#allocation7 + $0x30] sm:$0xf]
        %v1105 = vld [vmem:[#allocation7 + $0x34] sm:$0xf]
        %v1106 = vld [vmem:[#allocation7 + $0x38] sm:$0xf]
        %v1107 = vld [vmem:[#allocation7 + $0x3c] sm:$0xf]
        %v1108 = vld [vmem:[#allocation7 + $0x40] sm:$0xf]
        %v1109 = vld [vmem:[#allocation7 + $0x44] sm:$0xf]
        %v1110 = vld [vmem:[#allocation7 + $0x48] sm:$0xf]
        %v1111 = vld [vmem:[#allocation7 + $0x4c] sm:$0xf]
        %v1112 = vld [vmem:[#allocation7 + $0x50] sm:$0xf]
        %v1113 = vld [vmem:[#allocation7 + $0x54] sm:$0xf]
        %v1114 = vld [vmem:[#allocation7 + $0x58] sm:$0xf]
        %v1115 = vld [vmem:[#allocation7 + $0x5c] sm:$0xf]
        %v1116 = vld [vmem:[%s573] sm:$0xff]
        %v1117 = vld [vmem:[%s573 + $0x8] sm:$0xff]
        %v1118 = vld [vmem:[%s573 + $0x10] sm:$0xff]
        %v1119 = vld [vmem:[%s573 + $0x18] sm:$0xff]
        %v1120 = vld [vmem:[%s573 + $0x20] sm:$0xff]
        %v1121 = vld [vmem:[%s573 + $0x28] sm:$0xff]
        %v1122 = vld [vmem:[%s573 + $0x30] sm:$0xff]
        %v1123 = vld [vmem:[%s573 + $0x38] sm:$0xff]
        %v1124 = vld [vmem:[%s573 + $0x40] sm:$0xff]
        %v1125 = vld [vmem:[%s573 + $0x48] sm:$0xff]
        %v1126 = vld [vmem:[%s573 + $0x50] sm:$0xff]
        %v1127 = vld [vmem:[%s573 + $0x58] sm:$0xff]
        %v1128 = vld [vmem:[%s573 + $0x60] sm:$0xff]
        %v1129 = vld [vmem:[%s573 + $0x68] sm:$0xff]
        %v1130 = vld [vmem:[%s573 + $0x70] sm:$0xff]
        %v1131 = vld [vmem:[%s573 + $0x78] sm:$0xff]
        %v1132 = vld [vmem:[%s573 + $0x80] sm:$0xff]
        %v1133 = vld [vmem:[%s573 + $0x88] sm:$0xff]
        %v1134 = vld [vmem:[%s573 + $0x90] sm:$0xff]
        %v1135 = vld [vmem:[%s573 + $0x98] sm:$0xff]
        %v1136 = vld [vmem:[%s573 + $0xa0] sm:$0xff]
        %v1137 = vld [vmem:[%s573 + $0xa8] sm:$0xff]
        %v1138 = vld [vmem:[%s573 + $0xb0] sm:$0xff]
        %v1139 = vld [vmem:[%s573 + $0xb8] sm:$0xff]
        %v1140 = vld [vmem:[%s573 + $0xc0] sm:$0xff]
        %v1141 = vld [vmem:[%s573 + $0xc8] sm:$0xff]
        %v1142 = vld [vmem:[%s573 + $0xd0] sm:$0xff]
        %v1143 = vld [vmem:[%s573 + $0xd8] sm:$0xff]
        %v1144 = vld [vmem:[%s573 + $0xe0] sm:$0xff]
        %v1145 = vld [vmem:[%s573 + $0xe8] sm:$0xff]
        %v1146 = vld [vmem:[%s573 + $0xf0] sm:$0xff]
        %v1147 = vld [vmem:[%s573 + $0xf8] sm:$0xff]
        %v1148 = vld [vmem:[%s573 + $0x100] sm:$0xff]
        %v1149 = vld [vmem:[%s573 + $0x108] sm:$0xff]
        %v1150 = vld [vmem:[%s573 + $0x110] sm:$0xff]
        %v1151 = vld [vmem:[%s573 + $0x118] sm:$0xff]
        %v1152 = vld [vmem:[%s573 + $0x120] sm:$0xff]
        %v1153 = vld [vmem:[%s573 + $0x128] sm:$0xff]
        %v1154 = vld [vmem:[%s573 + $0x130] sm:$0xff]
        %v1155 = vld [vmem:[%s573 + $0x138] sm:$0xff]
        %v1156 = vld [vmem:[%s573 + $0x140] sm:$0xff]
        %v1157 = vld [vmem:[%s573 + $0x148] sm:$0xff]
        %v1158 = vld [vmem:[%s573 + $0x150] sm:$0xff]
        %v1159 = vld [vmem:[%s573 + $0x158] sm:$0xff]
        %v1160 = vld [vmem:[%s573 + $0x160] sm:$0xff]
        %v1161 = vld [vmem:[%s573 + $0x168] sm:$0xff]
        %v1162 = vld [vmem:[%s573 + $0x170] sm:$0xff]
        %v1163 = vld [vmem:[%s573 + $0x178] sm:$0xff]
        %v1164 = vld [vmem:[%s573 + $0x180] sm:$0xff]
        %v1165 = vld [vmem:[%s573 + $0x188] sm:$0xff]
        %v1166 = vld [vmem:[%s573 + $0x190] sm:$0xff]
        %v1167 = vld [vmem:[%s573 + $0x198] sm:$0xff]
        %v1168 = vld [vmem:[%s573 + $0x1a0] sm:$0xff]
        %v1169 = vld [vmem:[%s573 + $0x1a8] sm:$0xff]
        %v1170 = vld [vmem:[%s573 + $0x1b0] sm:$0xff]
        %v1171 = vld [vmem:[%s573 + $0x1b8] sm:$0xff]
        %v1172 = vld [vmem:[%s573 + $0x1c0] sm:$0xff]
        %v1173 = vld [vmem:[%s573 + $0x1c8] sm:$0xff]
        %v1174 = vld [vmem:[%s573 + $0x1d0] sm:$0xff]
        %v1175 = vld [vmem:[%s573 + $0x1d8] sm:$0xff]
        %v1176 = vld [vmem:[%s573 + $0x1e0] sm:$0xff]
        %v1177 = vld [vmem:[%s573 + $0x1e8] sm:$0xff]
        %v1178 = vld [vmem:[%s573 + $0x1f0] sm:$0xff]
        %v1179 = vld [vmem:[%s573 + $0x1f8] sm:$0xff]
        %v1180 = vpack.c.bf16 %v1118, %v1116
        %v1181 = vpack.c.bf16 %v1119, %v1117
        %v1182 = vpack.c.bf16 %v1122, %v1120
        %v1183 = vpack.c.bf16 %v1123, %v1121
        %v1184 = vpack.c.bf16 %v1126, %v1124
        %v1185 = vpack.c.bf16 %v1127, %v1125
        %v1186 = vpack.c.bf16 %v1130, %v1128
        %v1187 = vpack.c.bf16 %v1131, %v1129
        %v1188 = vpack.c.bf16 %v1134, %v1132
        %v1189 = vpack.c.bf16 %v1135, %v1133
        %v1190 = vpack.c.bf16 %v1138, %v1136
        %v1191 = vpack.c.bf16 %v1139, %v1137
        %v1192 = vpack.c.bf16 %v1142, %v1140
        %v1193 = vpack.c.bf16 %v1143, %v1141
        %v1194 = vpack.c.bf16 %v1146, %v1144
        %v1195 = vpack.c.bf16 %v1147, %v1145
        %v1196 = vpack.c.bf16 %v1150, %v1148
        %v1197 = vpack.c.bf16 %v1151, %v1149
        %v1198 = vpack.c.bf16 %v1154, %v1152
        %v1199 = vpack.c.bf16 %v1155, %v1153
        %v1200 = vpack.c.bf16 %v1158, %v1156
        %v1201 = vpack.c.bf16 %v1159, %v1157
        %v1202 = vpack.c.bf16 %v1162, %v1160
        %v1203 = vpack.c.bf16 %v1163, %v1161
        %v1204 = vpack.c.bf16 %v1166, %v1164
        %v1205 = vpack.c.bf16 %v1167, %v1165
        %v1206 = vpack.c.bf16 %v1170, %v1168
        %v1207 = vpack.c.bf16 %v1171, %v1169
        %v1208 = vpack.c.bf16 %v1174, %v1172
        %v1209 = vpack.c.bf16 %v1175, %v1173
        %v1210 = vpack.c.bf16 %v1178, %v1176
        %v1211 = vpack.c.bf16 %v1179, %v1177
        %s1212 = scalar_lea.vmem [#allocation7], 96
        %v1213 = vld [vmem:[%s1212] sm:$0xf]
        %v1214 = vld [vmem:[%s1212 + $0x4] sm:$0xf]
        %v1215 = vld [vmem:[%s1212 + $0x8] sm:$0xf]
        %v1216 = vld [vmem:[%s1212 + $0xc] sm:$0xf]
        %v1217 = vld [vmem:[%s1212 + $0x10] sm:$0xf]
        %v1218 = vld [vmem:[%s1212 + $0x14] sm:$0xf]
        %v1219 = vld [vmem:[%s1212 + $0x18] sm:$0xf]
        %v1220 = vld [vmem:[%s1212 + $0x1c] sm:$0xf]
        %v1221 = vld [vmem:[%s1212 + $0x20] sm:$0xf]
        %v1222 = vld [vmem:[%s1212 + $0x24] sm:$0xf]
        %v1223 = vld [vmem:[%s1212 + $0x28] sm:$0xf]
        %v1224 = vld [vmem:[%s1212 + $0x2c] sm:$0xf]
        %v1225 = vld [vmem:[%s1212 + $0x30] sm:$0xf]
        %v1226 = vld [vmem:[%s1212 + $0x34] sm:$0xf]
        %v1227 = vld [vmem:[%s1212 + $0x38] sm:$0xf]
        %v1228 = vld [vmem:[%s1212 + $0x3c] sm:$0xf]
        %v1229 = vld [vmem:[%s1212 + $0x40] sm:$0xf]
        %v1230 = vld [vmem:[%s1212 + $0x44] sm:$0xf]
        %v1231 = vld [vmem:[%s1212 + $0x48] sm:$0xf]
        %v1232 = vld [vmem:[%s1212 + $0x4c] sm:$0xf]
        %v1233 = vld [vmem:[%s1212 + $0x50] sm:$0xf]
        %v1234 = vld [vmem:[%s1212 + $0x54] sm:$0xf]
        %v1235 = vld [vmem:[%s1212 + $0x58] sm:$0xf]
        %v1236 = vld [vmem:[%s1212 + $0x5c] sm:$0xf]
        %v1261 = vunpack.c.l.b16 %v1213
        %v1262 = vunpack.c.l.b16 %v1214
        %v1263 = vunpack.c.l.b16 %v1215
        %v1264 = vunpack.c.l.b16 %v1216
        %v1265 = vunpack.c.l.b16 %v1217
        %v1266 = vunpack.c.l.b16 %v1218
        %v1267 = vunpack.c.l.b16 %v1219
        %v1268 = vunpack.c.l.b16 %v1220
        %v1269 = vunpack.c.l.b16 %v1221
        %v1270 = vunpack.c.l.b16 %v1222
        %v1271 = vunpack.c.l.b16 %v1223
        %v1272 = vunpack.c.l.b16 %v1224
        %v1273 = vunpack.c.l.b16 %v1225
        %v1274 = vunpack.c.l.b16 %v1226
        %v1275 = vunpack.c.l.b16 %v1227
        %v1276 = vunpack.c.l.b16 %v1228
        %v1277 = vunpack.c.l.b16 %v1229
        %v1278 = vunpack.c.l.b16 %v1230
        %v1279 = vunpack.c.l.b16 %v1231
        %v1280 = vunpack.c.l.b16 %v1232
        %v1281 = vunpack.c.l.b16 %v1233
        %v1282 = vunpack.c.l.b16 %v1234
        %v1283 = vunpack.c.l.b16 %v1235
        %v1284 = vunpack.c.l.b16 %v1236
        %v1285 = vpack.c.b16 %v1262, %v1261
        %v1286 = vpack.c.b16 %v1264, %v1263
        %v1287 = vpack.c.b16 %v1266, %v1265
        %v1288 = vpack.c.b16 %v1268, %v1267
        %v1289 = vpack.c.b16 %v1270, %v1269
        %v1290 = vpack.c.b16 %v1272, %v1271
        %v1291 = vpack.c.b16 %v1274, %v1273
        %v1292 = vpack.c.b16 %v1276, %v1275
        %v1293 = vpack.c.b16 %v1278, %v1277
        %v1294 = vpack.c.b16 %v1280, %v1279
        %v1295 = vpack.c.b16 %v1282, %v1281
        %v1296 = vpack.c.b16 %v1284, %v1283
        %v1310 = vsel %vm564, %v1181, 0
        %v1313 = vsel %vm564, %v1183, 0
        %v1316 = vsel %vm564, %v1185, 0
        %v1319 = vsel %vm564, %v1187, 0
        %v1322 = vsel %vm564, %v1189, 0
        %v1325 = vsel %vm564, %v1191, 0
        %v1328 = vsel %vm564, %v1193, 0
        %v1331 = vsel %vm564, %v1195, 0
        %v1334 = vsel %vm564, %v1197, 0
        %v1337 = vsel %vm564, %v1199, 0
        %v1340 = vsel %vm564, %v1201, 0
        %v1343 = vsel %vm564, %v1203, 0
        %v1346 = vsel %vm564, %v1205, 0
        %v1349 = vsel %vm564, %v1207, 0
        %v1352 = vsel %vm564, %v1209, 0
        %v1355 = vsel %vm564, %v1211, 0
        %1357 = vmatprep.subr.bf16.mxu0 0
        %1358 = vmatpush1.bf16.msra.mxu0 %v1292
        %1359 = vmatprep.subr.bf16.mxu0 0
        %1360 = vmatpush1.bf16.msra.mxu0 %v1291
        %1361 = vmatprep.subr.bf16.mxu0 0
        %1362 = vmatpush1.bf16.msra.mxu0 %v1290
        %1363 = vmatprep.subr.bf16.mxu0 0
        %1364 = vmatpush1.bf16.msra.mxu0 %v1289
        %1365 = vmatprep.subr.bf16.mxu0 0
        %1366 = vmatpush1.bf16.msra.mxu0 %v1288
        %1367 = vmatprep.subr.bf16.mxu0 0
        %1368 = vmatpush1.bf16.msra.mxu0 %v1287
        %1369 = vmatprep.subr.bf16.mxu0 0
        %1370 = vmatpush1.bf16.msra.mxu0 %v1286
        %1371 = vmatprep.subr.bf16.mxu0 0
        %1372 = vmatpush1.bf16.msra.mxu0 %v1285
        %1373 = vmatprep.subr.bf16.mxu0 0
        %1374 = vmatpush2.bf16.msra.mxu0 0
        %1375 = vmatprep.subr.bf16.mxu0 0
        %1376 = vmatpush2.bf16.msra.mxu0 0
        %1377 = vmatprep.subr.bf16.mxu0 0
        %1378 = vmatpush2.bf16.msra.mxu0 0
        %1379 = vmatprep.subr.bf16.mxu0 0
        %1380 = vmatpush2.bf16.msra.mxu0 0
        %1381 = vmatprep.subr.bf16.mxu0 0
        %1382 = vmatpush2.bf16.msra.mxu0 %v1296
        %1383 = vmatprep.subr.bf16.mxu0 0
        %1384 = vmatpush2.bf16.msra.mxu0 %v1295
        %1385 = vmatprep.subr.bf16.mxu0 0
        %1386 = vmatpush2.bf16.msra.mxu0 %v1294
        %1387 = vmatprep.subr.bf16.mxu0 0
        %1388 = vmatpush2.bf16.msra.mxu0 %v1293
        %1389 = vmatprep.mubr.bf16.mxu0 %v1310
        %1390 = vmatmul.mubr.bf16.gmra.mxu0 %v1180
        %v1391 = vpop.f32.mrf.mxu0
        %v1392 = vadd.f32 0.0, %v1391
        %v1393 = vpop.f32.mrf.mxu0
        %v1394 = vpop.f32.mrf.mxu0
        %v1395 = vadd.f32 0.0, %v1394
        %v1396 = vpop.f32.mrf.mxu0
        %1397 = vmatprep.mubr.bf16.mxu0 %v1313
        %1398 = vmatmul.mubr.bf16.gmra.mxu0 %v1182
        %v1399 = vpop.f32.mrf.mxu0
        %v1400 = vadd.f32 0.0, %v1399
        %v1401 = vpop.f32.mrf.mxu0
        %v1402 = vpop.f32.mrf.mxu0
        %v1403 = vadd.f32 0.0, %v1402
        %v1404 = vpop.f32.mrf.mxu0
        %1405 = vmatprep.mubr.bf16.mxu0 %v1316
        %1406 = vmatmul.mubr.bf16.gmra.mxu0 %v1184
        %v1407 = vpop.f32.mrf.mxu0
        %v1408 = vadd.f32 0.0, %v1407
        %v1409 = vpop.f32.mrf.mxu0
        %v1410 = vpop.f32.mrf.mxu0
        %v1411 = vadd.f32 0.0, %v1410
        %v1412 = vpop.f32.mrf.mxu0
        %1413 = vmatprep.mubr.bf16.mxu0 %v1319
        %1414 = vmatmul.mubr.bf16.gmra.mxu0 %v1186
        %v1415 = vpop.f32.mrf.mxu0
        %v1416 = vadd.f32 0.0, %v1415
        %v1417 = vpop.f32.mrf.mxu0
        %v1418 = vpop.f32.mrf.mxu0
        %v1419 = vadd.f32 0.0, %v1418
        %v1420 = vpop.f32.mrf.mxu0
        %1421 = vmatprep.mubr.bf16.mxu0 %v1322
        %1422 = vmatmul.mubr.bf16.gmra.mxu0 %v1188
        %v1423 = vpop.f32.mrf.mxu0
        %v1424 = vadd.f32 0.0, %v1423
        %v1425 = vpop.f32.mrf.mxu0
        %v1426 = vpop.f32.mrf.mxu0
        %v1427 = vadd.f32 0.0, %v1426
        %v1428 = vpop.f32.mrf.mxu0
        %1429 = vmatprep.mubr.bf16.mxu0 %v1325
        %1430 = vmatmul.mubr.bf16.gmra.mxu0 %v1190
        %v1431 = vpop.f32.mrf.mxu0
        %v1432 = vadd.f32 0.0, %v1431
        %v1433 = vpop.f32.mrf.mxu0
        %v1434 = vpop.f32.mrf.mxu0
        %v1435 = vadd.f32 0.0, %v1434
        %v1436 = vpop.f32.mrf.mxu0
        %1437 = vmatprep.mubr.bf16.mxu0 %v1328
        %1438 = vmatmul.mubr.bf16.gmra.mxu0 %v1192
        %v1439 = vpop.f32.mrf.mxu0
        %v1440 = vadd.f32 0.0, %v1439
        %v1441 = vpop.f32.mrf.mxu0
        %v1442 = vpop.f32.mrf.mxu0
        %v1443 = vadd.f32 0.0, %v1442
        %v1444 = vpop.f32.mrf.mxu0
        %1445 = vmatprep.mubr.bf16.mxu0 %v1331
        %1446 = vmatmul.mubr.bf16.gmra.mxu0 %v1194
        %v1447 = vpop.f32.mrf.mxu0
        %v1448 = vadd.f32 0.0, %v1447
        %v1449 = vpop.f32.mrf.mxu0
        %v1450 = vpop.f32.mrf.mxu0
        %v1451 = vadd.f32 0.0, %v1450
        %v1452 = vpop.f32.mrf.mxu0
        %1453 = vmatprep.mubr.bf16.mxu0 %v1334
        %1454 = vmatmul.mubr.bf16.gmra.mxu0 %v1196
        %v1455 = vpop.f32.mrf.mxu0
        %v1456 = vadd.f32 0.0, %v1455
        %v1457 = vpop.f32.mrf.mxu0
        %v1458 = vpop.f32.mrf.mxu0
        %v1459 = vadd.f32 0.0, %v1458
        %v1460 = vpop.f32.mrf.mxu0
        %1461 = vmatprep.mubr.bf16.mxu0 %v1337
        %1462 = vmatmul.mubr.bf16.gmra.mxu0 %v1198
        %v1463 = vpop.f32.mrf.mxu0
        %v1464 = vadd.f32 0.0, %v1463
        %v1465 = vpop.f32.mrf.mxu0
        %v1466 = vpop.f32.mrf.mxu0
        %v1467 = vadd.f32 0.0, %v1466
        %v1468 = vpop.f32.mrf.mxu0
        %1469 = vmatprep.mubr.bf16.mxu0 %v1340
        %1470 = vmatmul.mubr.bf16.gmra.mxu0 %v1200
        %v1471 = vpop.f32.mrf.mxu0
        %v1472 = vadd.f32 0.0, %v1471
        %v1473 = vpop.f32.mrf.mxu0
        %v1474 = vpop.f32.mrf.mxu0
        %v1475 = vadd.f32 0.0, %v1474
        %v1476 = vpop.f32.mrf.mxu0
        %1477 = vmatprep.mubr.bf16.mxu0 %v1343
        %1478 = vmatmul.mubr.bf16.gmra.mxu0 %v1202
        %v1479 = vpop.f32.mrf.mxu0
        %v1480 = vadd.f32 0.0, %v1479
        %v1481 = vpop.f32.mrf.mxu0
        %v1482 = vpop.f32.mrf.mxu0
        %v1483 = vadd.f32 0.0, %v1482
        %v1484 = vpop.f32.mrf.mxu0
        %1485 = vmatprep.mubr.bf16.mxu0 %v1346
        %1486 = vmatmul.mubr.bf16.gmra.mxu0 %v1204
        %v1487 = vpop.f32.mrf.mxu0
        %v1488 = vadd.f32 0.0, %v1487
        %v1489 = vpop.f32.mrf.mxu0
        %v1490 = vpop.f32.mrf.mxu0
        %v1491 = vadd.f32 0.0, %v1490
        %v1492 = vpop.f32.mrf.mxu0
        %1493 = vmatprep.mubr.bf16.mxu0 %v1349
        %1494 = vmatmul.mubr.bf16.gmra.mxu0 %v1206
        %v1495 = vpop.f32.mrf.mxu0
        %v1496 = vadd.f32 0.0, %v1495
        %v1497 = vpop.f32.mrf.mxu0
        %v1498 = vpop.f32.mrf.mxu0
        %v1499 = vadd.f32 0.0, %v1498
        %v1500 = vpop.f32.mrf.mxu0
        %1501 = vmatprep.mubr.bf16.mxu0 %v1352
        %1502 = vmatmul.mubr.bf16.gmra.mxu0 %v1208
        %v1503 = vpop.f32.mrf.mxu0
        %v1504 = vadd.f32 0.0, %v1503
        %v1505 = vpop.f32.mrf.mxu0
        %v1506 = vpop.f32.mrf.mxu0
        %v1507 = vadd.f32 0.0, %v1506
        %v1508 = vpop.f32.mrf.mxu0
        %1509 = vmatprep.mubr.bf16.mxu0 %v1355
        %1510 = vmatmul.mubr.bf16.gmra.mxu0 %v1210
        %v1511 = vpop.f32.mrf.mxu0
        %v1512 = vadd.f32 0.0, %v1511
        %v1513 = vpop.f32.mrf.mxu0
        %v1514 = vpop.f32.mrf.mxu0
        %v1515 = vadd.f32 0.0, %v1514
        %v1516 = vpop.f32.mrf.mxu0
        %1517 = vdwg.mxu0
        %v1542 = vunpack.c.l.b16 %v1092
        %v1543 = vunpack.c.l.b16 %v1093
        %v1544 = vunpack.c.l.b16 %v1094
        %v1545 = vunpack.c.l.b16 %v1095
        %v1546 = vunpack.c.l.b16 %v1096
        %v1547 = vunpack.c.l.b16 %v1097
        %v1548 = vunpack.c.l.b16 %v1098
        %v1549 = vunpack.c.l.b16 %v1099
        %v1550 = vunpack.c.l.b16 %v1100
        %v1551 = vunpack.c.l.b16 %v1101
        %v1552 = vunpack.c.l.b16 %v1102
        %v1553 = vunpack.c.l.b16 %v1103
        %v1554 = vunpack.c.l.b16 %v1104
        %v1555 = vunpack.c.l.b16 %v1105
        %v1556 = vunpack.c.l.b16 %v1106
        %v1557 = vunpack.c.l.b16 %v1107
        %v1558 = vunpack.c.l.b16 %v1108
        %v1559 = vunpack.c.l.b16 %v1109
        %v1560 = vunpack.c.l.b16 %v1110
        %v1561 = vunpack.c.l.b16 %v1111
        %v1562 = vunpack.c.l.b16 %v1112
        %v1563 = vunpack.c.l.b16 %v1113
        %v1564 = vunpack.c.l.b16 %v1114
        %v1565 = vunpack.c.l.b16 %v1115
        %v1566 = vpack.c.b16 %v1543, %v1542
        %v1567 = vpack.c.b16 %v1545, %v1544
        %v1568 = vpack.c.b16 %v1547, %v1546
        %v1569 = vpack.c.b16 %v1549, %v1548
        %v1570 = vpack.c.b16 %v1551, %v1550
        %v1571 = vpack.c.b16 %v1553, %v1552
        %v1572 = vpack.c.b16 %v1555, %v1554
        %v1573 = vpack.c.b16 %v1557, %v1556
        %v1574 = vpack.c.b16 %v1559, %v1558
        %v1575 = vpack.c.b16 %v1561, %v1560
        %v1576 = vpack.c.b16 %v1563, %v1562
        %v1577 = vpack.c.b16 %v1565, %v1564
        %v1591 = vsel %vm564, %v1061, 0
        %v1594 = vsel %vm564, %v1063, 0
        %v1597 = vsel %vm564, %v1065, 0
        %v1600 = vsel %vm564, %v1067, 0
        %v1603 = vsel %vm564, %v1069, 0
        %v1606 = vsel %vm564, %v1071, 0
        %v1609 = vsel %vm564, %v1073, 0
        %v1612 = vsel %vm564, %v1075, 0
        %v1615 = vsel %vm564, %v1077, 0
        %v1618 = vsel %vm564, %v1079, 0
        %v1621 = vsel %vm564, %v1081, 0
        %v1624 = vsel %vm564, %v1083, 0
        %v1627 = vsel %vm564, %v1085, 0
        %v1630 = vsel %vm564, %v1087, 0
        %v1633 = vsel %vm564, %v1089, 0
        %v1636 = vsel %vm564, %v1091, 0
        %1638 = vmatprep.subr.bf16.mxu0 0
        %1639 = vmatpush1.bf16.msra.mxu0 %v1573
        %1640 = vmatprep.subr.bf16.mxu0 0
        %1641 = vmatpush1.bf16.msra.mxu0 %v1572
        %1642 = vmatprep.subr.bf16.mxu0 0
        %1643 = vmatpush1.bf16.msra.mxu0 %v1571
        %1644 = vmatprep.subr.bf16.mxu0 0
        %1645 = vmatpush1.bf16.msra.mxu0 %v1570
        %1646 = vmatprep.subr.bf16.mxu0 0
        %1647 = vmatpush1.bf16.msra.mxu0 %v1569
        %1648 = vmatprep.subr.bf16.mxu0 0
        %1649 = vmatpush1.bf16.msra.mxu0 %v1568
        %1650 = vmatprep.subr.bf16.mxu0 0
        %1651 = vmatpush1.bf16.msra.mxu0 %v1567
        %1652 = vmatprep.subr.bf16.mxu0 0
        %1653 = vmatpush1.bf16.msra.mxu0 %v1566
        %1654 = vmatprep.subr.bf16.mxu0 0
        %1655 = vmatpush2.bf16.msra.mxu0 0
        %1656 = vmatprep.subr.bf16.mxu0 0
        %1657 = vmatpush2.bf16.msra.mxu0 0
        %1658 = vmatprep.subr.bf16.mxu0 0
        %1659 = vmatpush2.bf16.msra.mxu0 0
        %1660 = vmatprep.subr.bf16.mxu0 0
        %1661 = vmatpush2.bf16.msra.mxu0 0
        %1662 = vmatprep.subr.bf16.mxu0 0
        %1663 = vmatpush2.bf16.msra.mxu0 %v1577
        %1664 = vmatprep.subr.bf16.mxu0 0
        %1665 = vmatpush2.bf16.msra.mxu0 %v1576
        %1666 = vmatprep.subr.bf16.mxu0 0
        %1667 = vmatpush2.bf16.msra.mxu0 %v1575
        %1668 = vmatprep.subr.bf16.mxu0 0
        %1669 = vmatpush2.bf16.msra.mxu0 %v1574
        %1670 = vmatprep.mubr.bf16.mxu0 %v1591
        %1671 = vmatmul.mubr.bf16.gmra.mxu0 %v1060
        %v1672 = vpop.f32.mrf.mxu0
        %v1673 = vadd.f32 %v1392, %v1672
        %v1674 = vpop.f32.mrf.mxu0
        %v1675 = vpop.f32.mrf.mxu0
        %v1676 = vadd.f32 %v1395, %v1675
        %v1677 = vpop.f32.mrf.mxu0
        %1678 = vmatprep.mubr.bf16.mxu0 %v1594
        %1679 = vmatmul.mubr.bf16.gmra.mxu0 %v1062
        %v1680 = vpop.f32.mrf.mxu0
        %v1681 = vadd.f32 %v1400, %v1680
        %v1682 = vpop.f32.mrf.mxu0
        %v1683 = vpop.f32.mrf.mxu0
        %v1684 = vadd.f32 %v1403, %v1683
        %v1685 = vpop.f32.mrf.mxu0
        %1686 = vmatprep.mubr.bf16.mxu0 %v1597
        %1687 = vmatmul.mubr.bf16.gmra.mxu0 %v1064
        %v1688 = vpop.f32.mrf.mxu0
        %v1689 = vadd.f32 %v1408, %v1688
        %v1690 = vpop.f32.mrf.mxu0
        %v1691 = vpop.f32.mrf.mxu0
        %v1692 = vadd.f32 %v1411, %v1691
        %v1693 = vpop.f32.mrf.mxu0
        %1694 = vmatprep.mubr.bf16.mxu0 %v1600
        %1695 = vmatmul.mubr.bf16.gmra.mxu0 %v1066
        %v1696 = vpop.f32.mrf.mxu0
        %v1697 = vadd.f32 %v1416, %v1696
        %v1698 = vpop.f32.mrf.mxu0
        %v1699 = vpop.f32.mrf.mxu0
        %v1700 = vadd.f32 %v1419, %v1699
        %v1701 = vpop.f32.mrf.mxu0
        %1702 = vmatprep.mubr.bf16.mxu0 %v1603
        %1703 = vmatmul.mubr.bf16.gmra.mxu0 %v1068
        %v1704 = vpop.f32.mrf.mxu0
        %v1705 = vadd.f32 %v1424, %v1704
        %v1706 = vpop.f32.mrf.mxu0
        %v1707 = vpop.f32.mrf.mxu0
        %v1708 = vadd.f32 %v1427, %v1707
        %v1709 = vpop.f32.mrf.mxu0
        %1710 = vmatprep.mubr.bf16.mxu0 %v1606
        %1711 = vmatmul.mubr.bf16.gmra.mxu0 %v1070
        %v1712 = vpop.f32.mrf.mxu0
        %v1713 = vadd.f32 %v1432, %v1712
        %v1714 = vpop.f32.mrf.mxu0
        %v1715 = vpop.f32.mrf.mxu0
        %v1716 = vadd.f32 %v1435, %v1715
        %v1717 = vpop.f32.mrf.mxu0
        %1718 = vmatprep.mubr.bf16.mxu0 %v1609
        %1719 = vmatmul.mubr.bf16.gmra.mxu0 %v1072
        %v1720 = vpop.f32.mrf.mxu0
        %v1721 = vadd.f32 %v1440, %v1720
        %v1722 = vpop.f32.mrf.mxu0
        %v1723 = vpop.f32.mrf.mxu0
        %v1724 = vadd.f32 %v1443, %v1723
        %v1725 = vpop.f32.mrf.mxu0
        %1726 = vmatprep.mubr.bf16.mxu0 %v1612
        %1727 = vmatmul.mubr.bf16.gmra.mxu0 %v1074
        %v1728 = vpop.f32.mrf.mxu0
        %v1729 = vadd.f32 %v1448, %v1728
        %v1730 = vpop.f32.mrf.mxu0
        %v1731 = vpop.f32.mrf.mxu0
        %v1732 = vadd.f32 %v1451, %v1731
        %v1733 = vpop.f32.mrf.mxu0
        %1734 = vmatprep.mubr.bf16.mxu0 %v1615
        %1735 = vmatmul.mubr.bf16.gmra.mxu0 %v1076
        %v1736 = vpop.f32.mrf.mxu0
        %v1737 = vadd.f32 %v1456, %v1736
        %v1738 = vpop.f32.mrf.mxu0
        %v1739 = vpop.f32.mrf.mxu0
        %v1740 = vadd.f32 %v1459, %v1739
        %v1741 = vpop.f32.mrf.mxu0
        %1742 = vmatprep.mubr.bf16.mxu0 %v1618
        %1743 = vmatmul.mubr.bf16.gmra.mxu0 %v1078
        %v1744 = vpop.f32.mrf.mxu0
        %v1745 = vadd.f32 %v1464, %v1744
        %v1746 = vpop.f32.mrf.mxu0
        %v1747 = vpop.f32.mrf.mxu0
        %v1748 = vadd.f32 %v1467, %v1747
        %v1749 = vpop.f32.mrf.mxu0
        %1750 = vmatprep.mubr.bf16.mxu0 %v1621
        %1751 = vmatmul.mubr.bf16.gmra.mxu0 %v1080
        %v1752 = vpop.f32.mrf.mxu0
        %v1753 = vadd.f32 %v1472, %v1752
        %v1754 = vpop.f32.mrf.mxu0
        %v1755 = vpop.f32.mrf.mxu0
        %v1756 = vadd.f32 %v1475, %v1755
        %v1757 = vpop.f32.mrf.mxu0
        %1758 = vmatprep.mubr.bf16.mxu0 %v1624
        %1759 = vmatmul.mubr.bf16.gmra.mxu0 %v1082
        %v1760 = vpop.f32.mrf.mxu0
        %v1761 = vadd.f32 %v1480, %v1760
        %v1762 = vpop.f32.mrf.mxu0
        %v1763 = vpop.f32.mrf.mxu0
        %v1764 = vadd.f32 %v1483, %v1763
        %v1765 = vpop.f32.mrf.mxu0
        %1766 = vmatprep.mubr.bf16.mxu0 %v1627
        %1767 = vmatmul.mubr.bf16.gmra.mxu0 %v1084
        %v1768 = vpop.f32.mrf.mxu0
        %v1769 = vadd.f32 %v1488, %v1768
        %v1770 = vpop.f32.mrf.mxu0
        %v1771 = vpop.f32.mrf.mxu0
        %v1772 = vadd.f32 %v1491, %v1771
        %v1773 = vpop.f32.mrf.mxu0
        %1774 = vmatprep.mubr.bf16.mxu0 %v1630
        %1775 = vmatmul.mubr.bf16.gmra.mxu0 %v1086
        %v1776 = vpop.f32.mrf.mxu0
        %v1777 = vadd.f32 %v1496, %v1776
        %v1778 = vpop.f32.mrf.mxu0
        %v1779 = vpop.f32.mrf.mxu0
        %v1780 = vadd.f32 %v1499, %v1779
        %v1781 = vpop.f32.mrf.mxu0
        %1782 = vmatprep.mubr.bf16.mxu0 %v1633
        %1783 = vmatmul.mubr.bf16.gmra.mxu0 %v1088
        %v1784 = vpop.f32.mrf.mxu0
        %v1785 = vadd.f32 %v1504, %v1784
        %v1786 = vpop.f32.mrf.mxu0
        %v1787 = vpop.f32.mrf.mxu0
        %v1788 = vadd.f32 %v1507, %v1787
        %v1789 = vpop.f32.mrf.mxu0
        %1790 = vmatprep.mubr.bf16.mxu0 %v1636
        %1791 = vmatmul.mubr.bf16.gmra.mxu0 %v1090
        %v1792 = vpop.f32.mrf.mxu0
        %v1793 = vadd.f32 %v1512, %v1792
        %v1794 = vpop.f32.mrf.mxu0
        %v1795 = vpop.f32.mrf.mxu0
        %v1796 = vadd.f32 %v1515, %v1795
        %v1797 = vpop.f32.mrf.mxu0
        %1798 = vdwg.mxu0
        %s1799 = scalar_lea.vmem [#allocation2], 64
        %v1800 = vld [vmem:[%s1799] sm:$0xff]
        %v1801 = vld [vmem:[%s1799 + $0x8] sm:$0xff]
        %v1802 = vld [vmem:[%s1799 + $0x10] sm:$0xff]
        %v1803 = vld [vmem:[%s1799 + $0x18] sm:$0xff]
        %v1804 = vld [vmem:[%s1799 + $0x20] sm:$0xff]
        %v1805 = vld [vmem:[%s1799 + $0x28] sm:$0xff]
        %v1806 = vld [vmem:[%s1799 + $0x30] sm:$0xff]
        %v1807 = vld [vmem:[%s1799 + $0x38] sm:$0xff]
        %v1808 = vld [vmem:[%s1799 + $0x40] sm:$0xff]
        %v1809 = vld [vmem:[%s1799 + $0x48] sm:$0xff]
        %v1810 = vld [vmem:[%s1799 + $0x50] sm:$0xff]
        %v1811 = vld [vmem:[%s1799 + $0x58] sm:$0xff]
        %v1812 = vld [vmem:[%s1799 + $0x60] sm:$0xff]
        %v1813 = vld [vmem:[%s1799 + $0x68] sm:$0xff]
        %v1814 = vld [vmem:[%s1799 + $0x70] sm:$0xff]
        %v1815 = vld [vmem:[%s1799 + $0x78] sm:$0xff]
        %v1816 = vld [vmem:[%s1799 + $0x80] sm:$0xff]
        %v1817 = vld [vmem:[%s1799 + $0x88] sm:$0xff]
        %v1818 = vld [vmem:[%s1799 + $0x90] sm:$0xff]
        %v1819 = vld [vmem:[%s1799 + $0x98] sm:$0xff]
        %v1820 = vld [vmem:[%s1799 + $0xa0] sm:$0xff]
        %v1821 = vld [vmem:[%s1799 + $0xa8] sm:$0xff]
        %v1822 = vld [vmem:[%s1799 + $0xb0] sm:$0xff]
        %v1823 = vld [vmem:[%s1799 + $0xb8] sm:$0xff]
        %v1824 = vld [vmem:[%s1799 + $0xc0] sm:$0xff]
        %v1825 = vld [vmem:[%s1799 + $0xc8] sm:$0xff]
        %v1826 = vld [vmem:[%s1799 + $0xd0] sm:$0xff]
        %v1827 = vld [vmem:[%s1799 + $0xd8] sm:$0xff]
        %v1828 = vld [vmem:[%s1799 + $0xe0] sm:$0xff]
        %v1829 = vld [vmem:[%s1799 + $0xe8] sm:$0xff]
        %v1830 = vld [vmem:[%s1799 + $0xf0] sm:$0xff]
        %v1831 = vld [vmem:[%s1799 + $0xf8] sm:$0xff]
        %v1832 = vld [vmem:[%s1799 + $0x100] sm:$0xff]
        %v1833 = vld [vmem:[%s1799 + $0x108] sm:$0xff]
        %v1834 = vld [vmem:[%s1799 + $0x110] sm:$0xff]
        %v1835 = vld [vmem:[%s1799 + $0x118] sm:$0xff]
        %v1836 = vld [vmem:[%s1799 + $0x120] sm:$0xff]
        %v1837 = vld [vmem:[%s1799 + $0x128] sm:$0xff]
        %v1838 = vld [vmem:[%s1799 + $0x130] sm:$0xff]
        %v1839 = vld [vmem:[%s1799 + $0x138] sm:$0xff]
        %v1840 = vld [vmem:[%s1799 + $0x140] sm:$0xff]
        %v1841 = vld [vmem:[%s1799 + $0x148] sm:$0xff]
        %v1842 = vld [vmem:[%s1799 + $0x150] sm:$0xff]
        %v1843 = vld [vmem:[%s1799 + $0x158] sm:$0xff]
        %v1844 = vld [vmem:[%s1799 + $0x160] sm:$0xff]
        %v1845 = vld [vmem:[%s1799 + $0x168] sm:$0xff]
        %v1846 = vld [vmem:[%s1799 + $0x170] sm:$0xff]
        %v1847 = vld [vmem:[%s1799 + $0x178] sm:$0xff]
        %v1848 = vld [vmem:[%s1799 + $0x180] sm:$0xff]
        %v1849 = vld [vmem:[%s1799 + $0x188] sm:$0xff]
        %v1850 = vld [vmem:[%s1799 + $0x190] sm:$0xff]
        %v1851 = vld [vmem:[%s1799 + $0x198] sm:$0xff]
        %v1852 = vld [vmem:[%s1799 + $0x1a0] sm:$0xff]
        %v1853 = vld [vmem:[%s1799 + $0x1a8] sm:$0xff]
        %v1854 = vld [vmem:[%s1799 + $0x1b0] sm:$0xff]
        %v1855 = vld [vmem:[%s1799 + $0x1b8] sm:$0xff]
        %v1856 = vld [vmem:[%s1799 + $0x1c0] sm:$0xff]
        %v1857 = vld [vmem:[%s1799 + $0x1c8] sm:$0xff]
        %v1858 = vld [vmem:[%s1799 + $0x1d0] sm:$0xff]
        %v1859 = vld [vmem:[%s1799 + $0x1d8] sm:$0xff]
        %v1860 = vld [vmem:[%s1799 + $0x1e0] sm:$0xff]
        %v1861 = vld [vmem:[%s1799 + $0x1e8] sm:$0xff]
        %v1862 = vld [vmem:[%s1799 + $0x1f0] sm:$0xff]
        %v1863 = vld [vmem:[%s1799 + $0x1f8] sm:$0xff]
        %v1864 = vpack.c.bf16 %v1802, %v1800
        %v1865 = vpack.c.bf16 %v1803, %v1801
        %v1866 = vpack.c.bf16 %v1806, %v1804
        %v1867 = vpack.c.bf16 %v1807, %v1805
        %v1868 = vpack.c.bf16 %v1810, %v1808
        %v1869 = vpack.c.bf16 %v1811, %v1809
        %v1870 = vpack.c.bf16 %v1814, %v1812
        %v1871 = vpack.c.bf16 %v1815, %v1813
        %v1872 = vpack.c.bf16 %v1818, %v1816
        %v1873 = vpack.c.bf16 %v1819, %v1817
        %v1874 = vpack.c.bf16 %v1822, %v1820
        %v1875 = vpack.c.bf16 %v1823, %v1821
        %v1876 = vpack.c.bf16 %v1826, %v1824
        %v1877 = vpack.c.bf16 %v1827, %v1825
        %v1878 = vpack.c.bf16 %v1830, %v1828
        %v1879 = vpack.c.bf16 %v1831, %v1829
        %v1880 = vpack.c.bf16 %v1834, %v1832
        %v1881 = vpack.c.bf16 %v1835, %v1833
        %v1882 = vpack.c.bf16 %v1838, %v1836
        %v1883 = vpack.c.bf16 %v1839, %v1837
        %v1884 = vpack.c.bf16 %v1842, %v1840
        %v1885 = vpack.c.bf16 %v1843, %v1841
        %v1886 = vpack.c.bf16 %v1846, %v1844
        %v1887 = vpack.c.bf16 %v1847, %v1845
        %v1888 = vpack.c.bf16 %v1850, %v1848
        %v1889 = vpack.c.bf16 %v1851, %v1849
        %v1890 = vpack.c.bf16 %v1854, %v1852
        %v1891 = vpack.c.bf16 %v1855, %v1853
        %v1892 = vpack.c.bf16 %v1858, %v1856
        %v1893 = vpack.c.bf16 %v1859, %v1857
        %v1894 = vpack.c.bf16 %v1862, %v1860
        %v1895 = vpack.c.bf16 %v1863, %v1861
        %s1896 = scalar_lea.vmem [#allocation7], 192
        %v1897 = vld [vmem:[%s1896] sm:$0xf]
        %v1898 = vld [vmem:[%s1896 + $0x4] sm:$0xf]
        %v1899 = vld [vmem:[%s1896 + $0x8] sm:$0xf]
        %v1900 = vld [vmem:[%s1896 + $0xc] sm:$0xf]
        %v1901 = vld [vmem:[%s1896 + $0x10] sm:$0xf]
        %v1902 = vld [vmem:[%s1896 + $0x14] sm:$0xf]
        %v1903 = vld [vmem:[%s1896 + $0x18] sm:$0xf]
        %v1904 = vld [vmem:[%s1896 + $0x1c] sm:$0xf]
        %v1905 = vld [vmem:[%s1896 + $0x20] sm:$0xf]
        %v1906 = vld [vmem:[%s1896 + $0x24] sm:$0xf]
        %v1907 = vld [vmem:[%s1896 + $0x28] sm:$0xf]
        %v1908 = vld [vmem:[%s1896 + $0x2c] sm:$0xf]
        %v1909 = vld [vmem:[%s1896 + $0x30] sm:$0xf]
        %v1910 = vld [vmem:[%s1896 + $0x34] sm:$0xf]
        %v1911 = vld [vmem:[%s1896 + $0x38] sm:$0xf]
        %v1912 = vld [vmem:[%s1896 + $0x3c] sm:$0xf]
        %v1913 = vld [vmem:[%s1896 + $0x40] sm:$0xf]
        %v1914 = vld [vmem:[%s1896 + $0x44] sm:$0xf]
        %v1915 = vld [vmem:[%s1896 + $0x48] sm:$0xf]
        %v1916 = vld [vmem:[%s1896 + $0x4c] sm:$0xf]
        %v1917 = vld [vmem:[%s1896 + $0x50] sm:$0xf]
        %v1918 = vld [vmem:[%s1896 + $0x54] sm:$0xf]
        %v1919 = vld [vmem:[%s1896 + $0x58] sm:$0xf]
        %v1920 = vld [vmem:[%s1896 + $0x5c] sm:$0xf]
        %v1945 = vunpack.c.l.b16 %v1897
        %v1946 = vunpack.c.l.b16 %v1898
        %v1947 = vunpack.c.l.b16 %v1899
        %v1948 = vunpack.c.l.b16 %v1900
        %v1949 = vunpack.c.l.b16 %v1901
        %v1950 = vunpack.c.l.b16 %v1902
        %v1951 = vunpack.c.l.b16 %v1903
        %v1952 = vunpack.c.l.b16 %v1904
        %v1953 = vunpack.c.l.b16 %v1905
        %v1954 = vunpack.c.l.b16 %v1906
        %v1955 = vunpack.c.l.b16 %v1907
        %v1956 = vunpack.c.l.b16 %v1908
        %v1957 = vunpack.c.l.b16 %v1909
        %v1958 = vunpack.c.l.b16 %v1910
        %v1959 = vunpack.c.l.b16 %v1911
        %v1960 = vunpack.c.l.b16 %v1912
        %v1961 = vunpack.c.l.b16 %v1913
        %v1962 = vunpack.c.l.b16 %v1914
        %v1963 = vunpack.c.l.b16 %v1915
        %v1964 = vunpack.c.l.b16 %v1916
        %v1965 = vunpack.c.l.b16 %v1917
        %v1966 = vunpack.c.l.b16 %v1918
        %v1967 = vunpack.c.l.b16 %v1919
        %v1968 = vunpack.c.l.b16 %v1920
        %v1969 = vpack.c.b16 %v1946, %v1945
        %v1970 = vpack.c.b16 %v1948, %v1947
        %v1971 = vpack.c.b16 %v1950, %v1949
        %v1972 = vpack.c.b16 %v1952, %v1951
        %v1973 = vpack.c.b16 %v1954, %v1953
        %v1974 = vpack.c.b16 %v1956, %v1955
        %v1975 = vpack.c.b16 %v1958, %v1957
        %v1976 = vpack.c.b16 %v1960, %v1959
        %v1977 = vpack.c.b16 %v1962, %v1961
        %v1978 = vpack.c.b16 %v1964, %v1963
        %v1979 = vpack.c.b16 %v1966, %v1965
        %v1980 = vpack.c.b16 %v1968, %v1967
        %v1994 = vsel %vm564, %v1865, 0
        %v1997 = vsel %vm564, %v1867, 0
        %v2000 = vsel %vm564, %v1869, 0
        %v2003 = vsel %vm564, %v1871, 0
        %v2006 = vsel %vm564, %v1873, 0
        %v2009 = vsel %vm564, %v1875, 0
        %v2012 = vsel %vm564, %v1877, 0
        %v2015 = vsel %vm564, %v1879, 0
        %v2018 = vsel %vm564, %v1881, 0
        %v2021 = vsel %vm564, %v1883, 0
        %v2024 = vsel %vm564, %v1885, 0
        %v2027 = vsel %vm564, %v1887, 0
        %v2030 = vsel %vm564, %v1889, 0
        %v2033 = vsel %vm564, %v1891, 0
        %v2036 = vsel %vm564, %v1893, 0
        %v2039 = vsel %vm564, %v1895, 0
        %2041 = vmatprep.subr.bf16.mxu0 0
        %2042 = vmatpush1.bf16.msra.mxu0 %v1976
        %2043 = vmatprep.subr.bf16.mxu0 0
        %2044 = vmatpush1.bf16.msra.mxu0 %v1975
        %2045 = vmatprep.subr.bf16.mxu0 0
        %2046 = vmatpush1.bf16.msra.mxu0 %v1974
        %2047 = vmatprep.subr.bf16.mxu0 0
        %2048 = vmatpush1.bf16.msra.mxu0 %v1973
        %2049 = vmatprep.subr.bf16.mxu0 0
        %2050 = vmatpush1.bf16.msra.mxu0 %v1972
        %2051 = vmatprep.subr.bf16.mxu0 0
        %2052 = vmatpush1.bf16.msra.mxu0 %v1971
        %2053 = vmatprep.subr.bf16.mxu0 0
        %2054 = vmatpush1.bf16.msra.mxu0 %v1970
        %2055 = vmatprep.subr.bf16.mxu0 0
        %2056 = vmatpush1.bf16.msra.mxu0 %v1969
        %2057 = vmatprep.subr.bf16.mxu0 0
        %2058 = vmatpush2.bf16.msra.mxu0 0
        %2059 = vmatprep.subr.bf16.mxu0 0
        %2060 = vmatpush2.bf16.msra.mxu0 0
        %2061 = vmatprep.subr.bf16.mxu0 0
        %2062 = vmatpush2.bf16.msra.mxu0 0
        %2063 = vmatprep.subr.bf16.mxu0 0
        %2064 = vmatpush2.bf16.msra.mxu0 0
        %2065 = vmatprep.subr.bf16.mxu0 0
        %2066 = vmatpush2.bf16.msra.mxu0 %v1980
        %2067 = vmatprep.subr.bf16.mxu0 0
        %2068 = vmatpush2.bf16.msra.mxu0 %v1979
        %2069 = vmatprep.subr.bf16.mxu0 0
        %2070 = vmatpush2.bf16.msra.mxu0 %v1978
        %2071 = vmatprep.subr.bf16.mxu0 0
        %2072 = vmatpush2.bf16.msra.mxu0 %v1977
        %2073 = vmatprep.mubr.bf16.mxu0 %v1994
        %2074 = vmatmul.mubr.bf16.gmra.mxu0 %v1864
        %v2075 = vpop.f32.mrf.mxu0
        %v2076 = vadd.f32 0.0, %v2075
        %v2077 = vpop.f32.mrf.mxu0
        %v2078 = vpop.f32.mrf.mxu0
        %v2079 = vadd.f32 0.0, %v2078
        %v2080 = vpop.f32.mrf.mxu0
        %2081 = vmatprep.mubr.bf16.mxu0 %v1997
        %2082 = vmatmul.mubr.bf16.gmra.mxu0 %v1866
        %v2083 = vpop.f32.mrf.mxu0
        %v2084 = vadd.f32 0.0, %v2083
        %v2085 = vpop.f32.mrf.mxu0
        %v2086 = vpop.f32.mrf.mxu0
        %v2087 = vadd.f32 0.0, %v2086
        %v2088 = vpop.f32.mrf.mxu0
        %2089 = vmatprep.mubr.bf16.mxu0 %v2000
        %2090 = vmatmul.mubr.bf16.gmra.mxu0 %v1868
        %v2091 = vpop.f32.mrf.mxu0
        %v2092 = vadd.f32 0.0, %v2091
        %v2093 = vpop.f32.mrf.mxu0
        %v2094 = vpop.f32.mrf.mxu0
        %v2095 = vadd.f32 0.0, %v2094
        %v2096 = vpop.f32.mrf.mxu0
        %2097 = vmatprep.mubr.bf16.mxu0 %v2003
        %2098 = vmatmul.mubr.bf16.gmra.mxu0 %v1870
        %v2099 = vpop.f32.mrf.mxu0
        %v2100 = vadd.f32 0.0, %v2099
        %v2101 = vpop.f32.mrf.mxu0
        %v2102 = vpop.f32.mrf.mxu0
        %v2103 = vadd.f32 0.0, %v2102
        %v2104 = vpop.f32.mrf.mxu0
        %2105 = vmatprep.mubr.bf16.mxu0 %v2006
        %2106 = vmatmul.mubr.bf16.gmra.mxu0 %v1872
        %v2107 = vpop.f32.mrf.mxu0
        %v2108 = vadd.f32 0.0, %v2107
        %v2109 = vpop.f32.mrf.mxu0
        %v2110 = vpop.f32.mrf.mxu0
        %v2111 = vadd.f32 0.0, %v2110
        %v2112 = vpop.f32.mrf.mxu0
        %2113 = vmatprep.mubr.bf16.mxu0 %v2009
        %2114 = vmatmul.mubr.bf16.gmra.mxu0 %v1874
        %v2115 = vpop.f32.mrf.mxu0
        %v2116 = vadd.f32 0.0, %v2115
        %v2117 = vpop.f32.mrf.mxu0
        %v2118 = vpop.f32.mrf.mxu0
        %v2119 = vadd.f32 0.0, %v2118
        %v2120 = vpop.f32.mrf.mxu0
        %2121 = vmatprep.mubr.bf16.mxu0 %v2012
        %2122 = vmatmul.mubr.bf16.gmra.mxu0 %v1876
        %v2123 = vpop.f32.mrf.mxu0
        %v2124 = vadd.f32 0.0, %v2123
        %v2125 = vpop.f32.mrf.mxu0
        %v2126 = vpop.f32.mrf.mxu0
        %v2127 = vadd.f32 0.0, %v2126
        %v2128 = vpop.f32.mrf.mxu0
        %2129 = vmatprep.mubr.bf16.mxu0 %v2015
        %2130 = vmatmul.mubr.bf16.gmra.mxu0 %v1878
        %v2131 = vpop.f32.mrf.mxu0
        %v2132 = vadd.f32 0.0, %v2131
        %v2133 = vpop.f32.mrf.mxu0
        %v2134 = vpop.f32.mrf.mxu0
        %v2135 = vadd.f32 0.0, %v2134
        %v2136 = vpop.f32.mrf.mxu0
        %2137 = vmatprep.mubr.bf16.mxu0 %v2018
        %2138 = vmatmul.mubr.bf16.gmra.mxu0 %v1880
        %v2139 = vpop.f32.mrf.mxu0
        %v2140 = vadd.f32 0.0, %v2139
        %v2141 = vpop.f32.mrf.mxu0
        %v2142 = vpop.f32.mrf.mxu0
        %v2143 = vadd.f32 0.0, %v2142
        %v2144 = vpop.f32.mrf.mxu0
        %2145 = vmatprep.mubr.bf16.mxu0 %v2021
        %2146 = vmatmul.mubr.bf16.gmra.mxu0 %v1882
        %v2147 = vpop.f32.mrf.mxu0
        %v2148 = vadd.f32 0.0, %v2147
        %v2149 = vpop.f32.mrf.mxu0
        %v2150 = vpop.f32.mrf.mxu0
        %v2151 = vadd.f32 0.0, %v2150
        %v2152 = vpop.f32.mrf.mxu0
        %2153 = vmatprep.mubr.bf16.mxu0 %v2024
        %2154 = vmatmul.mubr.bf16.gmra.mxu0 %v1884
        %v2155 = vpop.f32.mrf.mxu0
        %v2156 = vadd.f32 0.0, %v2155
        %v2157 = vpop.f32.mrf.mxu0
        %v2158 = vpop.f32.mrf.mxu0
        %v2159 = vadd.f32 0.0, %v2158
        %v2160 = vpop.f32.mrf.mxu0
        %2161 = vmatprep.mubr.bf16.mxu0 %v2027
        %2162 = vmatmul.mubr.bf16.gmra.mxu0 %v1886
        %v2163 = vpop.f32.mrf.mxu0
        %v2164 = vadd.f32 0.0, %v2163
        %v2165 = vpop.f32.mrf.mxu0
        %v2166 = vpop.f32.mrf.mxu0
        %v2167 = vadd.f32 0.0, %v2166
        %v2168 = vpop.f32.mrf.mxu0
        %2169 = vmatprep.mubr.bf16.mxu0 %v2030
        %2170 = vmatmul.mubr.bf16.gmra.mxu0 %v1888
        %v2171 = vpop.f32.mrf.mxu0
        %v2172 = vadd.f32 0.0, %v2171
        %v2173 = vpop.f32.mrf.mxu0
        %v2174 = vpop.f32.mrf.mxu0
        %v2175 = vadd.f32 0.0, %v2174
        %v2176 = vpop.f32.mrf.mxu0
        %2177 = vmatprep.mubr.bf16.mxu0 %v2033
        %2178 = vmatmul.mubr.bf16.gmra.mxu0 %v1890
        %v2179 = vpop.f32.mrf.mxu0
        %v2180 = vadd.f32 0.0, %v2179
        %v2181 = vpop.f32.mrf.mxu0
        %v2182 = vpop.f32.mrf.mxu0
        %v2183 = vadd.f32 0.0, %v2182
        %v2184 = vpop.f32.mrf.mxu0
        %2185 = vmatprep.mubr.bf16.mxu0 %v2036
        %2186 = vmatmul.mubr.bf16.gmra.mxu0 %v1892
        %v2187 = vpop.f32.mrf.mxu0
        %v2188 = vadd.f32 0.0, %v2187
        %v2189 = vpop.f32.mrf.mxu0
        %v2190 = vpop.f32.mrf.mxu0
        %v2191 = vadd.f32 0.0, %v2190
        %v2192 = vpop.f32.mrf.mxu0
        %2193 = vmatprep.mubr.bf16.mxu0 %v2039
        %2194 = vmatmul.mubr.bf16.gmra.mxu0 %v1894
        %v2195 = vpop.f32.mrf.mxu0
        %v2196 = vadd.f32 0.0, %v2195
        %v2197 = vpop.f32.mrf.mxu0
        %v2198 = vpop.f32.mrf.mxu0
        %v2199 = vadd.f32 0.0, %v2198
        %v2200 = vpop.f32.mrf.mxu0
        %2201 = vdwg.mxu0
        %v2202 = vadd.f32 %v1673, %v2076
        %v2203 = vadd.f32 %v1676, %v2079
        %v2204 = vadd.f32 %v1681, %v2084
        %v2205 = vadd.f32 %v1684, %v2087
        %v2206 = vadd.f32 %v1689, %v2092
        %v2207 = vadd.f32 %v1692, %v2095
        %v2208 = vadd.f32 %v1697, %v2100
        %v2209 = vadd.f32 %v1700, %v2103
        %v2210 = vadd.f32 %v1705, %v2108
        %v2211 = vadd.f32 %v1708, %v2111
        %v2212 = vadd.f32 %v1713, %v2116
        %v2213 = vadd.f32 %v1716, %v2119
        %v2214 = vadd.f32 %v1721, %v2124
        %v2215 = vadd.f32 %v1724, %v2127
        %v2216 = vadd.f32 %v1729, %v2132
        %v2217 = vadd.f32 %v1732, %v2135
        %v2218 = vadd.f32 %v1737, %v2140
        %v2219 = vadd.f32 %v1740, %v2143
        %v2220 = vadd.f32 %v1745, %v2148
        %v2221 = vadd.f32 %v1748, %v2151
        %v2222 = vadd.f32 %v1753, %v2156
        %v2223 = vadd.f32 %v1756, %v2159
        %v2224 = vadd.f32 %v1761, %v2164
        %v2225 = vadd.f32 %v1764, %v2167
        %v2226 = vadd.f32 %v1769, %v2172
        %v2227 = vadd.f32 %v1772, %v2175
        %v2228 = vadd.f32 %v1777, %v2180
        %v2229 = vadd.f32 %v1780, %v2183
        %v2230 = vadd.f32 %v1785, %v2188
        %v2231 = vadd.f32 %v1788, %v2191
        %v2232 = vadd.f32 %v1793, %v2196
        %v2233 = vadd.f32 %v1796, %v2199
        %v2234 = vld [vmem:[%s2] sm:$0x1]
        %v2236 = vlaneseq
        %v2237 = vshrl.u32 %v2236, 7
        %v2238 = vsub.s32 0, %v2237
        %v2239 = vrot.slane %v2234, %v2238
        %v2241 = vadd.f32 %v2202, %v2239
        %v2242 = vadd.f32 %v2203, %v2239
        %v2243 = vadd.f32 %v2204, %v2239
        %v2244 = vadd.f32 %v2205, %v2239
        %v2245 = vadd.f32 %v2206, %v2239
        %v2246 = vadd.f32 %v2207, %v2239
        %v2247 = vadd.f32 %v2208, %v2239
        %v2248 = vadd.f32 %v2209, %v2239
        %v2249 = vadd.f32 %v2210, %v2239
        %v2250 = vadd.f32 %v2211, %v2239
        %v2251 = vadd.f32 %v2212, %v2239
        %v2252 = vadd.f32 %v2213, %v2239
        %v2253 = vadd.f32 %v2214, %v2239
        %v2254 = vadd.f32 %v2215, %v2239
        %v2255 = vadd.f32 %v2216, %v2239
        %v2256 = vadd.f32 %v2217, %v2239
        %v2257 = vadd.f32 %v2218, %v2239
        %v2258 = vadd.f32 %v2219, %v2239
        %v2259 = vadd.f32 %v2220, %v2239
        %v2260 = vadd.f32 %v2221, %v2239
        %v2261 = vadd.f32 %v2222, %v2239
        %v2262 = vadd.f32 %v2223, %v2239
        %v2263 = vadd.f32 %v2224, %v2239
        %v2264 = vadd.f32 %v2225, %v2239
        %v2265 = vadd.f32 %v2226, %v2239
        %v2266 = vadd.f32 %v2227, %v2239
        %v2267 = vadd.f32 %v2228, %v2239
        %v2268 = vadd.f32 %v2229, %v2239
        %v2269 = vadd.f32 %v2230, %v2239
        %v2270 = vadd.f32 %v2231, %v2239
        %v2271 = vadd.f32 %v2232, %v2239
        %v2272 = vadd.f32 %v2233, %v2239
        %v2273 = vmax.f32 %v2241, 0.0
        %v2274 = vmax.f32 %v2242, 0.0
        %v2275 = vmax.f32 %v2243, 0.0
        %v2276 = vmax.f32 %v2244, 0.0
        %v2277 = vmax.f32 %v2245, 0.0
        %v2278 = vmax.f32 %v2246, 0.0
        %v2279 = vmax.f32 %v2247, 0.0
        %v2280 = vmax.f32 %v2248, 0.0
        %v2281 = vmax.f32 %v2249, 0.0
        %v2282 = vmax.f32 %v2250, 0.0
        %v2283 = vmax.f32 %v2251, 0.0
        %v2284 = vmax.f32 %v2252, 0.0
        %v2285 = vmax.f32 %v2253, 0.0
        %v2286 = vmax.f32 %v2254, 0.0
        %v2287 = vmax.f32 %v2255, 0.0
        %v2288 = vmax.f32 %v2256, 0.0
        %v2289 = vmax.f32 %v2257, 0.0
        %v2290 = vmax.f32 %v2258, 0.0
        %v2291 = vmax.f32 %v2259, 0.0
        %v2292 = vmax.f32 %v2260, 0.0
        %v2293 = vmax.f32 %v2261, 0.0
        %v2294 = vmax.f32 %v2262, 0.0
        %v2295 = vmax.f32 %v2263, 0.0
        %v2296 = vmax.f32 %v2264, 0.0
        %v2297 = vmax.f32 %v2265, 0.0
        %v2298 = vmax.f32 %v2266, 0.0
        %v2299 = vmax.f32 %v2267, 0.0
        %v2300 = vmax.f32 %v2268, 0.0
        %v2301 = vmax.f32 %v2269, 0.0
        %v2302 = vmax.f32 %v2270, 0.0
        %v2303 = vmax.f32 %v2271, 0.0
        %v2304 = vmax.f32 %v2272, 0.0
        %2305 = vst [vmem:[#allocation3] sm:$0xff] 0.0
        %2306 = vst [vmem:[#allocation3 + $0x8] sm:$0xff] 0.0
        %2307 = vst [vmem:[#allocation3 + $0x10] sm:$0xff] 0.0
        %2308 = vst [vmem:[#allocation3 + $0x18] sm:$0xff] 0.0
        %2309 = vst [vmem:[#allocation3 + $0x20] sm:$0xff] 0.0
        %2310 = vst [vmem:[#allocation3 + $0x28] sm:$0xff] 0.0
        %s2311 = scalar_lea.vmem [#allocation3], 816
        %2312 = vst [vmem:[%s2311] sm:$0xff] 0.0
        %2313 = vst [vmem:[%s2311 + $0x8] sm:$0xff] 0.0
        %2314 = vst [vmem:[%s2311 + $0x10] sm:$0xff] 0.0
        %2315 = vst [vmem:[%s2311 + $0x18] sm:$0xff] 0.0
        %2316 = vst [vmem:[%s2311 + $0x20] sm:$0xff] 0.0
        %2317 = vst [vmem:[%s2311 + $0x28] sm:$0xff] 0.0
        %s2318 = scalar_lea.vmem [#allocation3], 48
        %2319 = vst [vmem:[%s2318] sm:$0x1] 0.0
        %2320 = vst [vmem:[%s2318 + $0x30] sm:$0x1] 0.0
        %2321 = vst [vmem:[%s2318 + $0x60] sm:$0x1] 0.0
        %2322 = vst [vmem:[%s2318 + $0x90] sm:$0x1] 0.0
        %2323 = vst [vmem:[%s2318 + $0xc0] sm:$0x1] 0.0
        %2324 = vst [vmem:[%s2318 + $0xf0] sm:$0x1] 0.0
        %2325 = vst [vmem:[%s2318 + $0x120] sm:$0x1] 0.0
        %2326 = vst [vmem:[%s2318 + $0x150] sm:$0x1] 0.0
        %2327 = vst [vmem:[%s2318 + $0x180] sm:$0x1] 0.0
        %2328 = vst [vmem:[%s2318 + $0x1b0] sm:$0x1] 0.0
        %2329 = vst [vmem:[%s2318 + $0x1e0] sm:$0x1] 0.0
        %2330 = vst [vmem:[%s2318 + $0x210] sm:$0x1] 0.0
        %2331 = vst [vmem:[%s2318 + $0x240] sm:$0x1] 0.0
        %2332 = vst [vmem:[%s2318 + $0x270] sm:$0x1] 0.0
        %2333 = vst [vmem:[%s2318 + $0x2a0] sm:$0x1] 0.0
        %2334 = vst [vmem:[%s2318 + $0x2d0] sm:$0x1] 0.0
        %2335 = vst [vmem:[%s2318 + $0x2f] sm:$0x1] 0.0
        %2336 = vst [vmem:[%s2318 + $0x5f] sm:$0x1] 0.0
        %2337 = vst [vmem:[%s2318 + $0x8f] sm:$0x1] 0.0
        %2338 = vst [vmem:[%s2318 + $0xbf] sm:$0x1] 0.0
        %2339 = vst [vmem:[%s2318 + $0xef] sm:$0x1] 0.0
        %2340 = vst [vmem:[%s2318 + $0x11f] sm:$0x1] 0.0
        %2341 = vst [vmem:[%s2318 + $0x14f] sm:$0x1] 0.0
        %2342 = vst [vmem:[%s2318 + $0x17f] sm:$0x1] 0.0
        %2343 = vst [vmem:[%s2318 + $0x1af] sm:$0x1] 0.0
        %2344 = vst [vmem:[%s2318 + $0x1df] sm:$0x1] 0.0
        %2345 = vst [vmem:[%s2318 + $0x20f] sm:$0x1] 0.0
        %2346 = vst [vmem:[%s2318 + $0x23f] sm:$0x1] 0.0
        %2347 = vst [vmem:[%s2318 + $0x26f] sm:$0x1] 0.0
        %2348 = vst [vmem:[%s2318 + $0x29f] sm:$0x1] 0.0
        %2349 = vst [vmem:[%s2318 + $0x2cf] sm:$0x1] 0.0
        %2350 = vst [vmem:[%s2318 + $0x2ff] sm:$0x1] 0.0
        %v2383 = vrot.slane %v2273, 7
        %v2384 = vrot.slane %v2274, 7
        %v2385 = vsel %vm639, %v2383, %v2384
        %v2386 = vrot.slane %v2275, 7
        %v2387 = vrot.slane %v2276, 7
        %v2388 = vsel %vm639, %v2386, %v2387
        %v2389 = vrot.slane %v2277, 7
        %v2390 = vrot.slane %v2278, 7
        %v2391 = vsel %vm639, %v2389, %v2390
        %v2392 = vrot.slane %v2279, 7
        %v2393 = vrot.slane %v2280, 7
        %v2394 = vsel %vm639, %v2392, %v2393
        %v2395 = vrot.slane %v2281, 7
        %v2396 = vrot.slane %v2282, 7
        %v2397 = vsel %vm639, %v2395, %v2396
        %v2398 = vrot.slane %v2283, 7
        %v2399 = vrot.slane %v2284, 7
        %v2400 = vsel %vm639, %v2398, %v2399
        %v2401 = vrot.slane %v2285, 7
        %v2402 = vrot.slane %v2286, 7
        %v2403 = vsel %vm639, %v2401, %v2402
        %v2404 = vrot.slane %v2287, 7
        %v2405 = vrot.slane %v2288, 7
        %v2406 = vsel %vm639, %v2404, %v2405
        %v2407 = vrot.slane %v2289, 7
        %v2408 = vrot.slane %v2290, 7
        %v2409 = vsel %vm639, %v2407, %v2408
        %v2410 = vrot.slane %v2291, 7
        %v2411 = vrot.slane %v2292, 7
        %v2412 = vsel %vm639, %v2410, %v2411
        %v2413 = vrot.slane %v2293, 7
        %v2414 = vrot.slane %v2294, 7
        %v2415 = vsel %vm639, %v2413, %v2414
        %v2416 = vrot.slane %v2295, 7
        %v2417 = vrot.slane %v2296, 7
        %v2418 = vsel %vm639, %v2416, %v2417
        %v2419 = vrot.slane %v2297, 7
        %v2420 = vrot.slane %v2298, 7
        %v2421 = vsel %vm639, %v2419, %v2420
        %v2422 = vrot.slane %v2299, 7
        %v2423 = vrot.slane %v2300, 7
        %v2424 = vsel %vm639, %v2422, %v2423
        %v2425 = vrot.slane %v2301, 7
        %v2426 = vrot.slane %v2302, 7
        %v2427 = vsel %vm639, %v2425, %v2426
        %v2428 = vrot.slane %v2303, 7
        %v2429 = vrot.slane %v2304, 7
        %v2430 = vsel %vm639, %v2428, %v2429
        %2463 = vst [vmem:[%s2318] sm:$0xfe] %v2383
        %2464 = vst [vmem:[%s2318 + $0x18] sm:$0xff] %v2385
        %2465 = vst [vmem:[%s2318 + $0x30] sm:$0xfe] %v2386
        %2466 = vst [vmem:[%s2318 + $0x48] sm:$0xff] %v2388
        %2467 = vst [vmem:[%s2318 + $0x60] sm:$0xfe] %v2389
        %2468 = vst [vmem:[%s2318 + $0x78] sm:$0xff] %v2391
        %2469 = vst [vmem:[%s2318 + $0x90] sm:$0xfe] %v2392
        %2470 = vst [vmem:[%s2318 + $0xa8] sm:$0xff] %v2394
        %2471 = vst [vmem:[%s2318 + $0xc0] sm:$0xfe] %v2395
        %2472 = vst [vmem:[%s2318 + $0xd8] sm:$0xff] %v2397
        %2473 = vst [vmem:[%s2318 + $0xf0] sm:$0xfe] %v2398
        %2474 = vst [vmem:[%s2318 + $0x108] sm:$0xff] %v2400
        %2475 = vst [vmem:[%s2318 + $0x120] sm:$0xfe] %v2401
        %2476 = vst [vmem:[%s2318 + $0x138] sm:$0xff] %v2403
        %2477 = vst [vmem:[%s2318 + $0x150] sm:$0xfe] %v2404
        %2478 = vst [vmem:[%s2318 + $0x168] sm:$0xff] %v2406
        %2479 = vst [vmem:[%s2318 + $0x180] sm:$0xfe] %v2407
        %2480 = vst [vmem:[%s2318 + $0x198] sm:$0xff] %v2409
        %2481 = vst [vmem:[%s2318 + $0x1b0] sm:$0xfe] %v2410
        %2482 = vst [vmem:[%s2318 + $0x1c8] sm:$0xff] %v2412
        %2483 = vst [vmem:[%s2318 + $0x1e0] sm:$0xfe] %v2413
        %2484 = vst [vmem:[%s2318 + $0x1f8] sm:$0xff] %v2415
        %2485 = vst [vmem:[%s2318 + $0x210] sm:$0xfe] %v2416
        %2486 = vst [vmem:[%s2318 + $0x228] sm:$0xff] %v2418
        %2487 = vst [vmem:[%s2318 + $0x240] sm:$0xfe] %v2419
        %2488 = vst [vmem:[%s2318 + $0x258] sm:$0xff] %v2421
        %2489 = vst [vmem:[%s2318 + $0x270] sm:$0xfe] %v2422
        %2490 = vst [vmem:[%s2318 + $0x288] sm:$0xff] %v2424
        %2491 = vst [vmem:[%s2318 + $0x2a0] sm:$0xfe] %v2425
        %2492 = vst [vmem:[%s2318 + $0x2b8] sm:$0xff] %v2427
        %2493 = vst [vmem:[%s2318 + $0x2d0] sm:$0xfe] %v2428
        %2494 = vst [vmem:[%s2318 + $0x2e8] sm:$0xff] %v2430
        %2495 = vst [vmem:[%s2318 + $0x8] sm:$0xff] %v2273
        %2496 = vst [vmem:[%s2318 + $0x20] sm:$0xff] %v2274
        %2497 = vst [vmem:[%s2318 + $0x38] sm:$0xff] %v2275
        %2498 = vst [vmem:[%s2318 + $0x50] sm:$0xff] %v2276
        %2499 = vst [vmem:[%s2318 + $0x68] sm:$0xff] %v2277
        %2500 = vst [vmem:[%s2318 + $0x80] sm:$0xff] %v2278
        %2501 = vst [vmem:[%s2318 + $0x98] sm:$0xff] %v2279
        %2502 = vst [vmem:[%s2318 + $0xb0] sm:$0xff] %v2280
        %2503 = vst [vmem:[%s2318 + $0xc8] sm:$0xff] %v2281
        %2504 = vst [vmem:[%s2318 + $0xe0] sm:$0xff] %v2282
        %2505 = vst [vmem:[%s2318 + $0xf8] sm:$0xff] %v2283
        %2506 = vst [vmem:[%s2318 + $0x110] sm:$0xff] %v2284
        %2507 = vst [vmem:[%s2318 + $0x128] sm:$0xff] %v2285
        %2508 = vst [vmem:[%s2318 + $0x140] sm:$0xff] %v2286
        %2509 = vst [vmem:[%s2318 + $0x158] sm:$0xff] %v2287
        %2510 = vst [vmem:[%s2318 + $0x170] sm:$0xff] %v2288
        %2511 = vst [vmem:[%s2318 + $0x188] sm:$0xff] %v2289
        %2512 = vst [vmem:[%s2318 + $0x1a0] sm:$0xff] %v2290
        %2513 = vst [vmem:[%s2318 + $0x1b8] sm:$0xff] %v2291
        %2514 = vst [vmem:[%s2318 + $0x1d0] sm:$0xff] %v2292
        %2515 = vst [vmem:[%s2318 + $0x1e8] sm:$0xff] %v2293
        %2516 = vst [vmem:[%s2318 + $0x200] sm:$0xff] %v2294
        %2517 = vst [vmem:[%s2318 + $0x218] sm:$0xff] %v2295
        %2518 = vst [vmem:[%s2318 + $0x230] sm:$0xff] %v2296
        %2519 = vst [vmem:[%s2318 + $0x248] sm:$0xff] %v2297
        %2520 = vst [vmem:[%s2318 + $0x260] sm:$0xff] %v2298
        %2521 = vst [vmem:[%s2318 + $0x278] sm:$0xff] %v2299
        %2522 = vst [vmem:[%s2318 + $0x290] sm:$0xff] %v2300
        %2523 = vst [vmem:[%s2318 + $0x2a8] sm:$0xff] %v2301
        %2524 = vst [vmem:[%s2318 + $0x2c0] sm:$0xff] %v2302
        %2525 = vst [vmem:[%s2318 + $0x2d8] sm:$0xff] %v2303
        %2526 = vst [vmem:[%s2318 + $0x2f0] sm:$0xff] %v2304
        %v2527 = vrot.slane %v2273, 1
        %v2528 = vrot.slane %v2274, 1
        %v2529 = vsel %vm882, %v2527, %v2528
        %v2530 = vrot.slane %v2275, 1
        %v2531 = vrot.slane %v2276, 1
        %v2532 = vsel %vm882, %v2530, %v2531
        %v2533 = vrot.slane %v2277, 1
        %v2534 = vrot.slane %v2278, 1
        %v2535 = vsel %vm882, %v2533, %v2534
        %v2536 = vrot.slane %v2279, 1
        %v2537 = vrot.slane %v2280, 1
        %v2538 = vsel %vm882, %v2536, %v2537
        %v2539 = vrot.slane %v2281, 1
        %v2540 = vrot.slane %v2282, 1
        %v2541 = vsel %vm882, %v2539, %v2540
        %v2542 = vrot.slane %v2283, 1
        %v2543 = vrot.slane %v2284, 1
        %v2544 = vsel %vm882, %v2542, %v2543
        %v2545 = vrot.slane %v2285, 1
        %v2546 = vrot.slane %v2286, 1
        %v2547 = vsel %vm882, %v2545, %v2546
        %v2548 = vrot.slane %v2287, 1
        %v2549 = vrot.slane %v2288, 1
        %v2550 = vsel %vm882, %v2548, %v2549
        %v2551 = vrot.slane %v2289, 1
        %v2552 = vrot.slane %v2290, 1
        %v2553 = vsel %vm882, %v2551, %v2552
        %v2554 = vrot.slane %v2291, 1
        %v2555 = vrot.slane %v2292, 1
        %v2556 = vsel %vm882, %v2554, %v2555
        %v2557 = vrot.slane %v2293, 1
        %v2558 = vrot.slane %v2294, 1
        %v2559 = vsel %vm882, %v2557, %v2558
        %v2560 = vrot.slane %v2295, 1
        %v2561 = vrot.slane %v2296, 1
        %v2562 = vsel %vm882, %v2560, %v2561
        %v2563 = vrot.slane %v2297, 1
        %v2564 = vrot.slane %v2298, 1
        %v2565 = vsel %vm882, %v2563, %v2564
        %v2566 = vrot.slane %v2299, 1
        %v2567 = vrot.slane %v2300, 1
        %v2568 = vsel %vm882, %v2566, %v2567
        %v2569 = vrot.slane %v2301, 1
        %v2570 = vrot.slane %v2302, 1
        %v2571 = vsel %vm882, %v2569, %v2570
        %v2572 = vrot.slane %v2303, 1
        %v2573 = vrot.slane %v2304, 1
        %v2574 = vsel %vm882, %v2572, %v2573
        %2607 = vst [vmem:[%s2318 + $0x10] sm:$0xff] %v2529
        %2608 = vst [vmem:[%s2318 + $0x28] sm:$0x7f] %v2528
        %2609 = vst [vmem:[%s2318 + $0x40] sm:$0xff] %v2532
        %2610 = vst [vmem:[%s2318 + $0x58] sm:$0x7f] %v2531
        %2611 = vst [vmem:[%s2318 + $0x70] sm:$0xff] %v2535
        %2612 = vst [vmem:[%s2318 + $0x88] sm:$0x7f] %v2534
        %2613 = vst [vmem:[%s2318 + $0xa0] sm:$0xff] %v2538
        %2614 = vst [vmem:[%s2318 + $0xb8] sm:$0x7f] %v2537
        %2615 = vst [vmem:[%s2318 + $0xd0] sm:$0xff] %v2541
        %2616 = vst [vmem:[%s2318 + $0xe8] sm:$0x7f] %v2540
        %2617 = vst [vmem:[%s2318 + $0x100] sm:$0xff] %v2544
        %2618 = vst [vmem:[%s2318 + $0x118] sm:$0x7f] %v2543
        %2619 = vst [vmem:[%s2318 + $0x130] sm:$0xff] %v2547
        %2620 = vst [vmem:[%s2318 + $0x148] sm:$0x7f] %v2546
        %2621 = vst [vmem:[%s2318 + $0x160] sm:$0xff] %v2550
        %2622 = vst [vmem:[%s2318 + $0x178] sm:$0x7f] %v2549
        %2623 = vst [vmem:[%s2318 + $0x190] sm:$0xff] %v2553
        %2624 = vst [vmem:[%s2318 + $0x1a8] sm:$0x7f] %v2552
        %2625 = vst [vmem:[%s2318 + $0x1c0] sm:$0xff] %v2556
        %2626 = vst [vmem:[%s2318 + $0x1d8] sm:$0x7f] %v2555
        %2627 = vst [vmem:[%s2318 + $0x1f0] sm:$0xff] %v2559
        %2628 = vst [vmem:[%s2318 + $0x208] sm:$0x7f] %v2558
        %2629 = vst [vmem:[%s2318 + $0x220] sm:$0xff] %v2562
        %2630 = vst [vmem:[%s2318 + $0x238] sm:$0x7f] %v2561
        %2631 = vst [vmem:[%s2318 + $0x250] sm:$0xff] %v2565
        %2632 = vst [vmem:[%s2318 + $0x268] sm:$0x7f] %v2564
        %2633 = vst [vmem:[%s2318 + $0x280] sm:$0xff] %v2568
        %2634 = vst [vmem:[%s2318 + $0x298] sm:$0x7f] %v2567
        %2635 = vst [vmem:[%s2318 + $0x2b0] sm:$0xff] %v2571
        %2636 = vst [vmem:[%s2318 + $0x2c8] sm:$0x7f] %v2570
        %2637 = vst [vmem:[%s2318 + $0x2e0] sm:$0xff] %v2574
        %2638 = vst [vmem:[%s2318 + $0x2f8] sm:$0x7f] %v2573
        %v2639 = vld [vmem:[#allocation3] sm:$0xff]
        %v2640 = vld [vmem:[#allocation3 + $0x8] sm:$0xff]
        %v2641 = vld [vmem:[#allocation3 + $0x10] sm:$0xff]
        %v2642 = vld [vmem:[#allocation3 + $0x18] sm:$0xff]
        %v2643 = vld [vmem:[#allocation3 + $0x20] sm:$0xff]
        %v2644 = vld [vmem:[#allocation3 + $0x28] sm:$0xff]
        %v2645 = vld [vmem:[#allocation3 + $0x30] sm:$0xff]
        %v2646 = vld [vmem:[#allocation3 + $0x38] sm:$0xff]
        %v2647 = vld [vmem:[#allocation3 + $0x40] sm:$0xff]
        %v2648 = vld [vmem:[#allocation3 + $0x48] sm:$0xff]
        %v2649 = vld [vmem:[#allocation3 + $0x50] sm:$0xff]
        %v2650 = vld [vmem:[#allocation3 + $0x58] sm:$0xff]
        %v2651 = vld [vmem:[#allocation3 + $0x60] sm:$0xff]
        %v2652 = vld [vmem:[#allocation3 + $0x68] sm:$0xff]
        %v2653 = vld [vmem:[#allocation3 + $0x70] sm:$0xff]
        %v2654 = vld [vmem:[#allocation3 + $0x78] sm:$0xff]
        %v2655 = vld [vmem:[#allocation3 + $0x80] sm:$0xff]
        %v2656 = vld [vmem:[#allocation3 + $0x88] sm:$0xff]
        %v2657 = vld [vmem:[#allocation3 + $0x90] sm:$0xff]
        %v2658 = vld [vmem:[#allocation3 + $0x98] sm:$0xff]
        %v2659 = vld [vmem:[#allocation3 + $0xa0] sm:$0xff]
        %v2660 = vld [vmem:[#allocation3 + $0xa8] sm:$0xff]
        %v2661 = vld [vmem:[#allocation3 + $0xb0] sm:$0xff]
        %v2662 = vld [vmem:[#allocation3 + $0xb8] sm:$0xff]
        %v2663 = vld [vmem:[#allocation3 + $0xc0] sm:$0xff]
        %v2664 = vld [vmem:[#allocation3 + $0xc8] sm:$0xff]
        %v2665 = vld [vmem:[#allocation3 + $0xd0] sm:$0xff]
        %v2666 = vld [vmem:[#allocation3 + $0xd8] sm:$0xff]
        %v2667 = vld [vmem:[#allocation3 + $0xe0] sm:$0xff]
        %v2668 = vld [vmem:[#allocation3 + $0xe8] sm:$0xff]
        %v2669 = vld [vmem:[#allocation3 + $0xf0] sm:$0xff]
        %v2670 = vld [vmem:[#allocation3 + $0xf8] sm:$0xff]
        %v2671 = vld [vmem:[#allocation3 + $0x100] sm:$0xff]
        %v2672 = vld [vmem:[#allocation3 + $0x108] sm:$0xff]
        %v2673 = vld [vmem:[#allocation3 + $0x110] sm:$0xff]
        %v2674 = vld [vmem:[#allocation3 + $0x118] sm:$0xff]
        %v2675 = vld [vmem:[#allocation3 + $0x120] sm:$0xff]
        %v2676 = vld [vmem:[#allocation3 + $0x128] sm:$0xff]
        %v2677 = vld [vmem:[#allocation3 + $0x130] sm:$0xff]
        %v2678 = vld [vmem:[#allocation3 + $0x138] sm:$0xff]
        %v2679 = vld [vmem:[#allocation3 + $0x140] sm:$0xff]
        %v2680 = vld [vmem:[#allocation3 + $0x148] sm:$0xff]
        %v2681 = vld [vmem:[#allocation3 + $0x150] sm:$0xff]
        %v2682 = vld [vmem:[#allocation3 + $0x158] sm:$0xff]
        %v2683 = vld [vmem:[#allocation3 + $0x160] sm:$0xff]
        %v2684 = vld [vmem:[#allocation3 + $0x168] sm:$0xff]
        %v2685 = vld [vmem:[#allocation3 + $0x170] sm:$0xff]
        %v2686 = vld [vmem:[#allocation3 + $0x178] sm:$0xff]
        %v2687 = vld [vmem:[#allocation3 + $0x180] sm:$0xff]
        %v2688 = vld [vmem:[#allocation3 + $0x188] sm:$0xff]
        %v2689 = vld [vmem:[#allocation3 + $0x190] sm:$0xff]
        %v2690 = vld [vmem:[#allocation3 + $0x198] sm:$0xff]
        %v2691 = vld [vmem:[#allocation3 + $0x1a0] sm:$0xff]
        %v2692 = vld [vmem:[#allocation3 + $0x1a8] sm:$0xff]
        %v2693 = vld [vmem:[#allocation3 + $0x1b0] sm:$0xff]
        %v2694 = vld [vmem:[#allocation3 + $0x1b8] sm:$0xff]
        %v2695 = vld [vmem:[#allocation3 + $0x1c0] sm:$0xff]
        %v2696 = vld [vmem:[#allocation3 + $0x1c8] sm:$0xff]
        %v2697 = vld [vmem:[#allocation3 + $0x1d0] sm:$0xff]
        %v2698 = vld [vmem:[#allocation3 + $0x1d8] sm:$0xff]
        %v2699 = vld [vmem:[#allocation3 + $0x1e0] sm:$0xff]
        %v2700 = vld [vmem:[#allocation3 + $0x1e8] sm:$0xff]
        %v2701 = vld [vmem:[#allocation3 + $0x1f0] sm:$0xff]
        %v2702 = vld [vmem:[#allocation3 + $0x1f8] sm:$0xff]
        %v2703 = vld [vmem:[#allocation3 + $0x200] sm:$0xff]
        %v2704 = vld [vmem:[#allocation3 + $0x208] sm:$0xff]
        %v2705 = vld [vmem:[#allocation3 + $0x210] sm:$0xff]
        %v2706 = vld [vmem:[#allocation3 + $0x218] sm:$0xff]
        %v2707 = vld [vmem:[#allocation3 + $0x220] sm:$0xff]
        %v2708 = vld [vmem:[#allocation3 + $0x228] sm:$0xff]
        %v2709 = vld [vmem:[#allocation3 + $0x230] sm:$0xff]
        %v2710 = vld [vmem:[#allocation3 + $0x238] sm:$0xff]
        %v2711 = vld [vmem:[#allocation3 + $0x240] sm:$0xff]
        %v2712 = vld [vmem:[#allocation3 + $0x248] sm:$0xff]
        %v2713 = vld [vmem:[#allocation3 + $0x250] sm:$0xff]
        %v2714 = vld [vmem:[#allocation3 + $0x258] sm:$0xff]
        %v2715 = vld [vmem:[#allocation3 + $0x260] sm:$0xff]
        %v2716 = vld [vmem:[#allocation3 + $0x268] sm:$0xff]
        %v2717 = vld [vmem:[#allocation3 + $0x270] sm:$0xff]
        %v2718 = vld [vmem:[#allocation3 + $0x278] sm:$0xff]
        %v2719 = vld [vmem:[#allocation3 + $0x280] sm:$0xff]
        %v2720 = vld [vmem:[#allocation3 + $0x288] sm:$0xff]
        %v2721 = vld [vmem:[#allocation3 + $0x290] sm:$0xff]
        %v2722 = vld [vmem:[#allocation3 + $0x298] sm:$0xff]
        %v2723 = vld [vmem:[#allocation3 + $0x2a0] sm:$0xff]
        %v2724 = vld [vmem:[#allocation3 + $0x2a8] sm:$0xff]
        %v2725 = vld [vmem:[#allocation3 + $0x2b0] sm:$0xff]
        %v2726 = vld [vmem:[#allocation3 + $0x2b8] sm:$0xff]
        %v2727 = vld [vmem:[#allocation3 + $0x2c0] sm:$0xff]
        %v2728 = vld [vmem:[#allocation3 + $0x2c8] sm:$0xff]
        %v2729 = vld [vmem:[#allocation3 + $0x2d0] sm:$0xff]
        %v2730 = vld [vmem:[#allocation3 + $0x2d8] sm:$0xff]
        %v2731 = vld [vmem:[#allocation3 + $0x2e0] sm:$0xff]
        %v2732 = vld [vmem:[#allocation3 + $0x2e8] sm:$0xff]
        %v2733 = vld [vmem:[#allocation3 + $0x2f0] sm:$0xff]
        %v2734 = vld [vmem:[#allocation3 + $0x2f8] sm:$0xff]
        %v2735 = vpack.c.bf16 %v2642, %v2639
        %v2736 = vpack.c.bf16 %v2643, %v2640
        %v2737 = vpack.c.bf16 %v2644, %v2641
        %v2738 = vpack.c.bf16 %v2648, %v2645
        %v2739 = vpack.c.bf16 %v2649, %v2646
        %v2740 = vpack.c.bf16 %v2650, %v2647
        %v2741 = vpack.c.bf16 %v2654, %v2651
        %v2742 = vpack.c.bf16 %v2655, %v2652
        %v2743 = vpack.c.bf16 %v2656, %v2653
        %v2744 = vpack.c.bf16 %v2660, %v2657
        %v2745 = vpack.c.bf16 %v2661, %v2658
        %v2746 = vpack.c.bf16 %v2662, %v2659
        %v2747 = vpack.c.bf16 %v2666, %v2663
        %v2748 = vpack.c.bf16 %v2667, %v2664
        %v2749 = vpack.c.bf16 %v2668, %v2665
        %v2750 = vpack.c.bf16 %v2672, %v2669
        %v2751 = vpack.c.bf16 %v2673, %v2670
        %v2752 = vpack.c.bf16 %v2674, %v2671
        %v2753 = vpack.c.bf16 %v2678, %v2675
        %v2754 = vpack.c.bf16 %v2679, %v2676
        %v2755 = vpack.c.bf16 %v2680, %v2677
        %v2756 = vpack.c.bf16 %v2684, %v2681
        %v2757 = vpack.c.bf16 %v2685, %v2682
        %v2758 = vpack.c.bf16 %v2686, %v2683
        %v2759 = vpack.c.bf16 %v2690, %v2687
        %v2760 = vpack.c.bf16 %v2691, %v2688
        %v2761 = vpack.c.bf16 %v2692, %v2689
        %v2762 = vpack.c.bf16 %v2696, %v2693
        %v2763 = vpack.c.bf16 %v2697, %v2694
        %v2764 = vpack.c.bf16 %v2698, %v2695
        %v2765 = vpack.c.bf16 %v2702, %v2699
        %v2766 = vpack.c.bf16 %v2703, %v2700
        %v2767 = vpack.c.bf16 %v2704, %v2701
        %v2768 = vpack.c.bf16 %v2708, %v2705
        %v2769 = vpack.c.bf16 %v2709, %v2706
        %v2770 = vpack.c.bf16 %v2710, %v2707
        %v2771 = vpack.c.bf16 %v2714, %v2711
        %v2772 = vpack.c.bf16 %v2715, %v2712
        %v2773 = vpack.c.bf16 %v2716, %v2713
        %v2774 = vpack.c.bf16 %v2720, %v2717
        %v2775 = vpack.c.bf16 %v2721, %v2718
        %v2776 = vpack.c.bf16 %v2722, %v2719
        %v2777 = vpack.c.bf16 %v2726, %v2723
        %v2778 = vpack.c.bf16 %v2727, %v2724
        %v2779 = vpack.c.bf16 %v2728, %v2725
        %v2780 = vpack.c.bf16 %v2732, %v2729
        %v2781 = vpack.c.bf16 %v2733, %v2730
        %v2782 = vpack.c.bf16 %v2734, %v2731
        %v2783 = vld [vmem:[#allocation9] sm:$0xf]
        %v2784 = vld [vmem:[#allocation9 + $0x4] sm:$0xf]
        %v2785 = vld [vmem:[#allocation9 + $0x8] sm:$0xf]
        %v2786 = vld [vmem:[#allocation9 + $0xc] sm:$0xf]
        %v2787 = vld [vmem:[#allocation9 + $0x10] sm:$0xf]
        %v2788 = vld [vmem:[#allocation9 + $0x14] sm:$0xf]
        %v2789 = vld [vmem:[#allocation9 + $0x18] sm:$0xf]
        %v2790 = vld [vmem:[#allocation9 + $0x1c] sm:$0xf]
        %v2791 = vld [vmem:[#allocation9 + $0x20] sm:$0xf]
        %v2792 = vld [vmem:[#allocation9 + $0x24] sm:$0xf]
        %v2793 = vld [vmem:[#allocation9 + $0x28] sm:$0xf]
        %v2794 = vld [vmem:[#allocation9 + $0x2c] sm:$0xf]
        %v2795 = vld [vmem:[#allocation9 + $0x30] sm:$0xf]
        %v2796 = vld [vmem:[#allocation9 + $0x34] sm:$0xf]
        %v2797 = vld [vmem:[#allocation9 + $0x38] sm:$0xf]
        %v2798 = vld [vmem:[#allocation9 + $0x3c] sm:$0xf]
        %v2799 = vld [vmem:[#allocation9 + $0x40] sm:$0xf]
        %v2800 = vld [vmem:[#allocation9 + $0x44] sm:$0xf]
        %v2801 = vld [vmem:[#allocation9 + $0x48] sm:$0xf]
        %v2802 = vld [vmem:[#allocation9 + $0x4c] sm:$0xf]
        %v2803 = vld [vmem:[#allocation9 + $0x50] sm:$0xf]
        %v2804 = vld [vmem:[#allocation9 + $0x54] sm:$0xf]
        %v2805 = vld [vmem:[#allocation9 + $0x58] sm:$0xf]
        %v2806 = vld [vmem:[#allocation9 + $0x5c] sm:$0xf]
        %v2807 = vld [vmem:[#allocation9 + $0x60] sm:$0xf]
        %v2808 = vld [vmem:[#allocation9 + $0x64] sm:$0xf]
        %v2809 = vld [vmem:[#allocation9 + $0x68] sm:$0xf]
        %v2810 = vld [vmem:[#allocation9 + $0x6c] sm:$0xf]
        %v2811 = vld [vmem:[#allocation9 + $0x70] sm:$0xf]
        %v2812 = vld [vmem:[#allocation9 + $0x74] sm:$0xf]
        %v2813 = vld [vmem:[#allocation9 + $0x78] sm:$0xf]
        %v2814 = vld [vmem:[#allocation9 + $0x7c] sm:$0xf]
        %v2815 = vld [vmem:[#allocation9 + $0x80] sm:$0xf]
        %v2816 = vld [vmem:[#allocation9 + $0x84] sm:$0xf]
        %v2817 = vld [vmem:[#allocation9 + $0x88] sm:$0xf]
        %v2818 = vld [vmem:[#allocation9 + $0x8c] sm:$0xf]
        %v2819 = vld [vmem:[#allocation9 + $0x90] sm:$0xf]
        %v2820 = vld [vmem:[#allocation9 + $0x94] sm:$0xf]
        %v2821 = vld [vmem:[#allocation9 + $0x98] sm:$0xf]
        %v2822 = vld [vmem:[#allocation9 + $0x9c] sm:$0xf]
        %v2823 = vld [vmem:[#allocation9 + $0xa0] sm:$0xf]
        %v2824 = vld [vmem:[#allocation9 + $0xa4] sm:$0xf]
        %v2825 = vld [vmem:[#allocation9 + $0xa8] sm:$0xf]
        %v2826 = vld [vmem:[#allocation9 + $0xac] sm:$0xf]
        %v2827 = vld [vmem:[#allocation9 + $0xb0] sm:$0xf]
        %v2828 = vld [vmem:[#allocation9 + $0xb4] sm:$0xf]
        %v2829 = vld [vmem:[#allocation9 + $0xb8] sm:$0xf]
        %v2830 = vld [vmem:[#allocation9 + $0xbc] sm:$0xf]
        %v2831 = vld [vmem:[%s2318] sm:$0xff]
        %v2832 = vld [vmem:[%s2318 + $0x8] sm:$0xff]
        %v2833 = vld [vmem:[%s2318 + $0x10] sm:$0xff]
        %v2834 = vld [vmem:[%s2318 + $0x18] sm:$0xff]
        %v2835 = vld [vmem:[%s2318 + $0x20] sm:$0xff]
        %v2836 = vld [vmem:[%s2318 + $0x28] sm:$0xff]
        %v2837 = vld [vmem:[%s2318 + $0x30] sm:$0xff]
        %v2838 = vld [vmem:[%s2318 + $0x38] sm:$0xff]
        %v2839 = vld [vmem:[%s2318 + $0x40] sm:$0xff]
        %v2840 = vld [vmem:[%s2318 + $0x48] sm:$0xff]
        %v2841 = vld [vmem:[%s2318 + $0x50] sm:$0xff]
        %v2842 = vld [vmem:[%s2318 + $0x58] sm:$0xff]
        %v2843 = vld [vmem:[%s2318 + $0x60] sm:$0xff]
        %v2844 = vld [vmem:[%s2318 + $0x68] sm:$0xff]
        %v2845 = vld [vmem:[%s2318 + $0x70] sm:$0xff]
        %v2846 = vld [vmem:[%s2318 + $0x78] sm:$0xff]
        %v2847 = vld [vmem:[%s2318 + $0x80] sm:$0xff]
        %v2848 = vld [vmem:[%s2318 + $0x88] sm:$0xff]
        %v2849 = vld [vmem:[%s2318 + $0x90] sm:$0xff]
        %v2850 = vld [vmem:[%s2318 + $0x98] sm:$0xff]
        %v2851 = vld [vmem:[%s2318 + $0xa0] sm:$0xff]
        %v2852 = vld [vmem:[%s2318 + $0xa8] sm:$0xff]
        %v2853 = vld [vmem:[%s2318 + $0xb0] sm:$0xff]
        %v2854 = vld [vmem:[%s2318 + $0xb8] sm:$0xff]
        %v2855 = vld [vmem:[%s2318 + $0xc0] sm:$0xff]
        %v2856 = vld [vmem:[%s2318 + $0xc8] sm:$0xff]
        %v2857 = vld [vmem:[%s2318 + $0xd0] sm:$0xff]
        %v2858 = vld [vmem:[%s2318 + $0xd8] sm:$0xff]
        %v2859 = vld [vmem:[%s2318 + $0xe0] sm:$0xff]
        %v2860 = vld [vmem:[%s2318 + $0xe8] sm:$0xff]
        %v2861 = vld [vmem:[%s2318 + $0xf0] sm:$0xff]
        %v2862 = vld [vmem:[%s2318 + $0xf8] sm:$0xff]
        %v2863 = vld [vmem:[%s2318 + $0x100] sm:$0xff]
        %v2864 = vld [vmem:[%s2318 + $0x108] sm:$0xff]
        %v2865 = vld [vmem:[%s2318 + $0x110] sm:$0xff]
        %v2866 = vld [vmem:[%s2318 + $0x118] sm:$0xff]
        %v2867 = vld [vmem:[%s2318 + $0x120] sm:$0xff]
        %v2868 = vld [vmem:[%s2318 + $0x128] sm:$0xff]
        %v2869 = vld [vmem:[%s2318 + $0x130] sm:$0xff]
        %v2870 = vld [vmem:[%s2318 + $0x138] sm:$0xff]
        %v2871 = vld [vmem:[%s2318 + $0x140] sm:$0xff]
        %v2872 = vld [vmem:[%s2318 + $0x148] sm:$0xff]
        %v2873 = vld [vmem:[%s2318 + $0x150] sm:$0xff]
        %v2874 = vld [vmem:[%s2318 + $0x158] sm:$0xff]
        %v2875 = vld [vmem:[%s2318 + $0x160] sm:$0xff]
        %v2876 = vld [vmem:[%s2318 + $0x168] sm:$0xff]
        %v2877 = vld [vmem:[%s2318 + $0x170] sm:$0xff]
        %v2878 = vld [vmem:[%s2318 + $0x178] sm:$0xff]
        %v2879 = vld [vmem:[%s2318 + $0x180] sm:$0xff]
        %v2880 = vld [vmem:[%s2318 + $0x188] sm:$0xff]
        %v2881 = vld [vmem:[%s2318 + $0x190] sm:$0xff]
        %v2882 = vld [vmem:[%s2318 + $0x198] sm:$0xff]
        %v2883 = vld [vmem:[%s2318 + $0x1a0] sm:$0xff]
        %v2884 = vld [vmem:[%s2318 + $0x1a8] sm:$0xff]
        %v2885 = vld [vmem:[%s2318 + $0x1b0] sm:$0xff]
        %v2886 = vld [vmem:[%s2318 + $0x1b8] sm:$0xff]
        %v2887 = vld [vmem:[%s2318 + $0x1c0] sm:$0xff]
        %v2888 = vld [vmem:[%s2318 + $0x1c8] sm:$0xff]
        %v2889 = vld [vmem:[%s2318 + $0x1d0] sm:$0xff]
        %v2890 = vld [vmem:[%s2318 + $0x1d8] sm:$0xff]
        %v2891 = vld [vmem:[%s2318 + $0x1e0] sm:$0xff]
        %v2892 = vld [vmem:[%s2318 + $0x1e8] sm:$0xff]
        %v2893 = vld [vmem:[%s2318 + $0x1f0] sm:$0xff]
        %v2894 = vld [vmem:[%s2318 + $0x1f8] sm:$0xff]
        %v2895 = vld [vmem:[%s2318 + $0x200] sm:$0xff]
        %v2896 = vld [vmem:[%s2318 + $0x208] sm:$0xff]
        %v2897 = vld [vmem:[%s2318 + $0x210] sm:$0xff]
        %v2898 = vld [vmem:[%s2318 + $0x218] sm:$0xff]
        %v2899 = vld [vmem:[%s2318 + $0x220] sm:$0xff]
        %v2900 = vld [vmem:[%s2318 + $0x228] sm:$0xff]
        %v2901 = vld [vmem:[%s2318 + $0x230] sm:$0xff]
        %v2902 = vld [vmem:[%s2318 + $0x238] sm:$0xff]
        %v2903 = vld [vmem:[%s2318 + $0x240] sm:$0xff]
        %v2904 = vld [vmem:[%s2318 + $0x248] sm:$0xff]
        %v2905 = vld [vmem:[%s2318 + $0x250] sm:$0xff]
        %v2906 = vld [vmem:[%s2318 + $0x258] sm:$0xff]
        %v2907 = vld [vmem:[%s2318 + $0x260] sm:$0xff]
        %v2908 = vld [vmem:[%s2318 + $0x268] sm:$0xff]
        %v2909 = vld [vmem:[%s2318 + $0x270] sm:$0xff]
        %v2910 = vld [vmem:[%s2318 + $0x278] sm:$0xff]
        %v2911 = vld [vmem:[%s2318 + $0x280] sm:$0xff]
        %v2912 = vld [vmem:[%s2318 + $0x288] sm:$0xff]
        %v2913 = vld [vmem:[%s2318 + $0x290] sm:$0xff]
        %v2914 = vld [vmem:[%s2318 + $0x298] sm:$0xff]
        %v2915 = vld [vmem:[%s2318 + $0x2a0] sm:$0xff]
        %v2916 = vld [vmem:[%s2318 + $0x2a8] sm:$0xff]
        %v2917 = vld [vmem:[%s2318 + $0x2b0] sm:$0xff]
        %v2918 = vld [vmem:[%s2318 + $0x2b8] sm:$0xff]
        %v2919 = vld [vmem:[%s2318 + $0x2c0] sm:$0xff]
        %v2920 = vld [vmem:[%s2318 + $0x2c8] sm:$0xff]
        %v2921 = vld [vmem:[%s2318 + $0x2d0] sm:$0xff]
        %v2922 = vld [vmem:[%s2318 + $0x2d8] sm:$0xff]
        %v2923 = vld [vmem:[%s2318 + $0x2e0] sm:$0xff]
        %v2924 = vld [vmem:[%s2318 + $0x2e8] sm:$0xff]
        %v2925 = vld [vmem:[%s2318 + $0x2f0] sm:$0xff]
        %v2926 = vld [vmem:[%s2318 + $0x2f8] sm:$0xff]
        %v2927 = vpack.c.bf16 %v2834, %v2831
        %v2928 = vpack.c.bf16 %v2835, %v2832
        %v2929 = vpack.c.bf16 %v2836, %v2833
        %v2930 = vpack.c.bf16 %v2840, %v2837
        %v2931 = vpack.c.bf16 %v2841, %v2838
        %v2932 = vpack.c.bf16 %v2842, %v2839
        %v2933 = vpack.c.bf16 %v2846, %v2843
        %v2934 = vpack.c.bf16 %v2847, %v2844
        %v2935 = vpack.c.bf16 %v2848, %v2845
        %v2936 = vpack.c.bf16 %v2852, %v2849
        %v2937 = vpack.c.bf16 %v2853, %v2850
        %v2938 = vpack.c.bf16 %v2854, %v2851
        %v2939 = vpack.c.bf16 %v2858, %v2855
        %v2940 = vpack.c.bf16 %v2859, %v2856
        %v2941 = vpack.c.bf16 %v2860, %v2857
        %v2942 = vpack.c.bf16 %v2864, %v2861
        %v2943 = vpack.c.bf16 %v2865, %v2862
        %v2944 = vpack.c.bf16 %v2866, %v2863
        %v2945 = vpack.c.bf16 %v2870, %v2867
        %v2946 = vpack.c.bf16 %v2871, %v2868
        %v2947 = vpack.c.bf16 %v2872, %v2869
        %v2948 = vpack.c.bf16 %v2876, %v2873
        %v2949 = vpack.c.bf16 %v2877, %v2874
        %v2950 = vpack.c.bf16 %v2878, %v2875
        %v2951 = vpack.c.bf16 %v2882, %v2879
        %v2952 = vpack.c.bf16 %v2883, %v2880
        %v2953 = vpack.c.bf16 %v2884, %v2881
        %v2954 = vpack.c.bf16 %v2888, %v2885
        %v2955 = vpack.c.bf16 %v2889, %v2886
        %v2956 = vpack.c.bf16 %v2890, %v2887
        %v2957 = vpack.c.bf16 %v2894, %v2891
        %v2958 = vpack.c.bf16 %v2895, %v2892
        %v2959 = vpack.c.bf16 %v2896, %v2893
        %v2960 = vpack.c.bf16 %v2900, %v2897
        %v2961 = vpack.c.bf16 %v2901, %v2898
        %v2962 = vpack.c.bf16 %v2902, %v2899
        %v2963 = vpack.c.bf16 %v2906, %v2903
        %v2964 = vpack.c.bf16 %v2907, %v2904
        %v2965 = vpack.c.bf16 %v2908, %v2905
        %v2966 = vpack.c.bf16 %v2912, %v2909
        %v2967 = vpack.c.bf16 %v2913, %v2910
        %v2968 = vpack.c.bf16 %v2914, %v2911
        %v2969 = vpack.c.bf16 %v2918, %v2915
        %v2970 = vpack.c.bf16 %v2919, %v2916
        %v2971 = vpack.c.bf16 %v2920, %v2917
        %v2972 = vpack.c.bf16 %v2924, %v2921
        %v2973 = vpack.c.bf16 %v2925, %v2922
        %v2974 = vpack.c.bf16 %v2926, %v2923
        %s2975 = scalar_lea.vmem [#allocation9], 192
        %v2976 = vld [vmem:[%s2975] sm:$0xf]
        %v2977 = vld [vmem:[%s2975 + $0x4] sm:$0xf]
        %v2978 = vld [vmem:[%s2975 + $0x8] sm:$0xf]
        %v2979 = vld [vmem:[%s2975 + $0xc] sm:$0xf]
        %v2980 = vld [vmem:[%s2975 + $0x10] sm:$0xf]
        %v2981 = vld [vmem:[%s2975 + $0x14] sm:$0xf]
        %v2982 = vld [vmem:[%s2975 + $0x18] sm:$0xf]
        %v2983 = vld [vmem:[%s2975 + $0x1c] sm:$0xf]
        %v2984 = vld [vmem:[%s2975 + $0x20] sm:$0xf]
        %v2985 = vld [vmem:[%s2975 + $0x24] sm:$0xf]
        %v2986 = vld [vmem:[%s2975 + $0x28] sm:$0xf]
        %v2987 = vld [vmem:[%s2975 + $0x2c] sm:$0xf]
        %v2988 = vld [vmem:[%s2975 + $0x30] sm:$0xf]
        %v2989 = vld [vmem:[%s2975 + $0x34] sm:$0xf]
        %v2990 = vld [vmem:[%s2975 + $0x38] sm:$0xf]
        %v2991 = vld [vmem:[%s2975 + $0x3c] sm:$0xf]
        %v2992 = vld [vmem:[%s2975 + $0x40] sm:$0xf]
        %v2993 = vld [vmem:[%s2975 + $0x44] sm:$0xf]
        %v2994 = vld [vmem:[%s2975 + $0x48] sm:$0xf]
        %v2995 = vld [vmem:[%s2975 + $0x4c] sm:$0xf]
        %v2996 = vld [vmem:[%s2975 + $0x50] sm:$0xf]
        %v2997 = vld [vmem:[%s2975 + $0x54] sm:$0xf]
        %v2998 = vld [vmem:[%s2975 + $0x58] sm:$0xf]
        %v2999 = vld [vmem:[%s2975 + $0x5c] sm:$0xf]
        %v3000 = vld [vmem:[%s2975 + $0x60] sm:$0xf]
        %v3001 = vld [vmem:[%s2975 + $0x64] sm:$0xf]
        %v3002 = vld [vmem:[%s2975 + $0x68] sm:$0xf]
        %v3003 = vld [vmem:[%s2975 + $0x6c] sm:$0xf]
        %v3004 = vld [vmem:[%s2975 + $0x70] sm:$0xf]
        %v3005 = vld [vmem:[%s2975 + $0x74] sm:$0xf]
        %v3006 = vld [vmem:[%s2975 + $0x78] sm:$0xf]
        %v3007 = vld [vmem:[%s2975 + $0x7c] sm:$0xf]
        %v3008 = vld [vmem:[%s2975 + $0x80] sm:$0xf]
        %v3009 = vld [vmem:[%s2975 + $0x84] sm:$0xf]
        %v3010 = vld [vmem:[%s2975 + $0x88] sm:$0xf]
        %v3011 = vld [vmem:[%s2975 + $0x8c] sm:$0xf]
        %v3012 = vld [vmem:[%s2975 + $0x90] sm:$0xf]
        %v3013 = vld [vmem:[%s2975 + $0x94] sm:$0xf]
        %v3014 = vld [vmem:[%s2975 + $0x98] sm:$0xf]
        %v3015 = vld [vmem:[%s2975 + $0x9c] sm:$0xf]
        %v3016 = vld [vmem:[%s2975 + $0xa0] sm:$0xf]
        %v3017 = vld [vmem:[%s2975 + $0xa4] sm:$0xf]
        %v3018 = vld [vmem:[%s2975 + $0xa8] sm:$0xf]
        %v3019 = vld [vmem:[%s2975 + $0xac] sm:$0xf]
        %v3020 = vld [vmem:[%s2975 + $0xb0] sm:$0xf]
        %v3021 = vld [vmem:[%s2975 + $0xb4] sm:$0xf]
        %v3022 = vld [vmem:[%s2975 + $0xb8] sm:$0xf]
        %v3023 = vld [vmem:[%s2975 + $0xbc] sm:$0xf]
        %v3072 = vunpack.c.l.b16 %v2976
        %v3073 = vunpack.c.l.b16 %v2977
        %v3074 = vunpack.c.l.b16 %v2978
        %v3075 = vunpack.c.l.b16 %v2979
        %v3076 = vunpack.c.l.b16 %v2980
        %v3077 = vunpack.c.l.b16 %v2981
        %v3078 = vunpack.c.l.b16 %v2982
        %v3079 = vunpack.c.l.b16 %v2983
        %v3080 = vunpack.c.l.b16 %v2984
        %v3081 = vunpack.c.l.b16 %v2985
        %v3082 = vunpack.c.l.b16 %v2986
        %v3083 = vunpack.c.l.b16 %v2987
        %v3084 = vunpack.c.l.b16 %v2988
        %v3085 = vunpack.c.l.b16 %v2989
        %v3086 = vunpack.c.l.b16 %v2990
        %v3087 = vunpack.c.l.b16 %v2991
        %v3088 = vunpack.c.l.b16 %v2992
        %v3089 = vunpack.c.l.b16 %v2993
        %v3090 = vunpack.c.l.b16 %v2994
        %v3091 = vunpack.c.l.b16 %v2995
        %v3092 = vunpack.c.l.b16 %v2996
        %v3093 = vunpack.c.l.b16 %v2997
        %v3094 = vunpack.c.l.b16 %v2998
        %v3095 = vunpack.c.l.b16 %v2999
        %v3096 = vunpack.c.l.b16 %v3000
        %v3097 = vunpack.c.l.b16 %v3001
        %v3098 = vunpack.c.l.b16 %v3002
        %v3099 = vunpack.c.l.b16 %v3003
        %v3100 = vunpack.c.l.b16 %v3004
        %v3101 = vunpack.c.l.b16 %v3005
        %v3102 = vunpack.c.l.b16 %v3006
        %v3103 = vunpack.c.l.b16 %v3007
        %v3104 = vunpack.c.l.b16 %v3008
        %v3105 = vunpack.c.l.b16 %v3009
        %v3106 = vunpack.c.l.b16 %v3010
        %v3107 = vunpack.c.l.b16 %v3011
        %v3108 = vunpack.c.l.b16 %v3012
        %v3109 = vunpack.c.l.b16 %v3013
        %v3110 = vunpack.c.l.b16 %v3014
        %v3111 = vunpack.c.l.b16 %v3015
        %v3112 = vunpack.c.l.b16 %v3016
        %v3113 = vunpack.c.l.b16 %v3017
        %v3114 = vunpack.c.l.b16 %v3018
        %v3115 = vunpack.c.l.b16 %v3019
        %v3116 = vunpack.c.l.b16 %v3020
        %v3117 = vunpack.c.l.b16 %v3021
        %v3118 = vunpack.c.l.b16 %v3022
        %v3119 = vunpack.c.l.b16 %v3023
        %v3120 = vpack.c.b16 %v3073, %v3072
        %v3121 = vpack.c.b16 %v3075, %v3074
        %v3122 = vpack.c.b16 %v3077, %v3076
        %v3123 = vpack.c.b16 %v3079, %v3078
        %v3124 = vpack.c.b16 %v3081, %v3080
        %v3125 = vpack.c.b16 %v3083, %v3082
        %v3126 = vpack.c.b16 %v3085, %v3084
        %v3127 = vpack.c.b16 %v3087, %v3086
        %v3128 = vpack.c.b16 %v3089, %v3088
        %v3129 = vpack.c.b16 %v3091, %v3090
        %v3130 = vpack.c.b16 %v3093, %v3092
        %v3131 = vpack.c.b16 %v3095, %v3094
        %v3132 = vpack.c.b16 %v3097, %v3096
        %v3133 = vpack.c.b16 %v3099, %v3098
        %v3134 = vpack.c.b16 %v3101, %v3100
        %v3135 = vpack.c.b16 %v3103, %v3102
        %v3136 = vpack.c.b16 %v3105, %v3104
        %v3137 = vpack.c.b16 %v3107, %v3106
        %v3138 = vpack.c.b16 %v3109, %v3108
        %v3139 = vpack.c.b16 %v3111, %v3110
        %v3140 = vpack.c.b16 %v3113, %v3112
        %v3141 = vpack.c.b16 %v3115, %v3114
        %v3142 = vpack.c.b16 %v3117, %v3116
        %v3143 = vpack.c.b16 %v3119, %v3118
        %3168 = vmatprep.subr.bf16.mxu0 0
        %3169 = vmatpush1.bf16.msra.mxu0 %v3127
        %3170 = vmatprep.subr.bf16.mxu0 0
        %3171 = vmatpush1.bf16.msra.mxu0 %v3126
        %3172 = vmatprep.subr.bf16.mxu0 0
        %3173 = vmatpush1.bf16.msra.mxu0 %v3125
        %3174 = vmatprep.subr.bf16.mxu0 0
        %3175 = vmatpush1.bf16.msra.mxu0 %v3124
        %3176 = vmatprep.subr.bf16.mxu0 0
        %3177 = vmatpush1.bf16.msra.mxu0 %v3123
        %3178 = vmatprep.subr.bf16.mxu0 0
        %3179 = vmatpush1.bf16.msra.mxu0 %v3122
        %3180 = vmatprep.subr.bf16.mxu0 0
        %3181 = vmatpush1.bf16.msra.mxu0 %v3121
        %3182 = vmatprep.subr.bf16.mxu0 0
        %3183 = vmatpush1.bf16.msra.mxu0 %v3120
        %3184 = vmatprep.subr.bf16.mxu0 0
        %3185 = vmatpush2.bf16.msra.mxu0 %v3135
        %3186 = vmatprep.subr.bf16.mxu0 0
        %3187 = vmatpush2.bf16.msra.mxu0 %v3134
        %3188 = vmatprep.subr.bf16.mxu0 0
        %3189 = vmatpush2.bf16.msra.mxu0 %v3133
        %3190 = vmatprep.subr.bf16.mxu0 0
        %3191 = vmatpush2.bf16.msra.mxu0 %v3132
        %3192 = vmatprep.subr.bf16.mxu0 0
        %3193 = vmatpush2.bf16.msra.mxu0 %v3131
        %3194 = vmatprep.subr.bf16.mxu0 0
        %3195 = vmatpush2.bf16.msra.mxu0 %v3130
        %3196 = vmatprep.subr.bf16.mxu0 0
        %3197 = vmatpush2.bf16.msra.mxu0 %v3129
        %3198 = vmatprep.subr.bf16.mxu0 0
        %3199 = vmatpush2.bf16.msra.mxu0 %v3128
        %3200 = vmatprep.mubr.bf16.mxu0 %v2928
        %3201 = vmatmul.mubr.bf16.gmra.mxu0 %v2927
        %v3202 = vpop.f32.mrf.mxu0
        %v3203 = vadd.f32 0.0, %v3202
        %v3204 = vpop.f32.mrf.mxu0
        %v3205 = vpop.f32.mrf.mxu0
        %v3206 = vadd.f32 0.0, %v3205
        %v3207 = vpop.f32.mrf.mxu0
        %3208 = vmatprep.mubr.bf16.mxu0 %v2931
        %3209 = vmatmul.mubr.bf16.gmra.mxu0 %v2930
        %v3210 = vpop.f32.mrf.mxu0
        %v3211 = vadd.f32 0.0, %v3210
        %v3212 = vpop.f32.mrf.mxu0
        %v3213 = vpop.f32.mrf.mxu0
        %v3214 = vadd.f32 0.0, %v3213
        %v3215 = vpop.f32.mrf.mxu0
        %3216 = vmatprep.mubr.bf16.mxu0 %v2934
        %3217 = vmatmul.mubr.bf16.gmra.mxu0 %v2933
        %v3218 = vpop.f32.mrf.mxu0
        %v3219 = vadd.f32 0.0, %v3218
        %v3220 = vpop.f32.mrf.mxu0
        %v3221 = vpop.f32.mrf.mxu0
        %v3222 = vadd.f32 0.0, %v3221
        %v3223 = vpop.f32.mrf.mxu0
        %3224 = vmatprep.mubr.bf16.mxu0 %v2937
        %3225 = vmatmul.mubr.bf16.gmra.mxu0 %v2936
        %v3226 = vpop.f32.mrf.mxu0
        %v3227 = vadd.f32 0.0, %v3226
        %v3228 = vpop.f32.mrf.mxu0
        %v3229 = vpop.f32.mrf.mxu0
        %v3230 = vadd.f32 0.0, %v3229
        %v3231 = vpop.f32.mrf.mxu0
        %3232 = vmatprep.mubr.bf16.mxu0 %v2940
        %3233 = vmatmul.mubr.bf16.gmra.mxu0 %v2939
        %v3234 = vpop.f32.mrf.mxu0
        %v3235 = vadd.f32 0.0, %v3234
        %v3236 = vpop.f32.mrf.mxu0
        %v3237 = vpop.f32.mrf.mxu0
        %v3238 = vadd.f32 0.0, %v3237
        %v3239 = vpop.f32.mrf.mxu0
        %3240 = vmatprep.mubr.bf16.mxu0 %v2943
        %3241 = vmatmul.mubr.bf16.gmra.mxu0 %v2942
        %v3242 = vpop.f32.mrf.mxu0
        %v3243 = vadd.f32 0.0, %v3242
        %v3244 = vpop.f32.mrf.mxu0
        %v3245 = vpop.f32.mrf.mxu0
        %v3246 = vadd.f32 0.0, %v3245
        %v3247 = vpop.f32.mrf.mxu0
        %3248 = vmatprep.mubr.bf16.mxu0 %v2946
        %3249 = vmatmul.mubr.bf16.gmra.mxu0 %v2945
        %v3250 = vpop.f32.mrf.mxu0
        %v3251 = vadd.f32 0.0, %v3250
        %v3252 = vpop.f32.mrf.mxu0
        %v3253 = vpop.f32.mrf.mxu0
        %v3254 = vadd.f32 0.0, %v3253
        %v3255 = vpop.f32.mrf.mxu0
        %3256 = vmatprep.mubr.bf16.mxu0 %v2949
        %3257 = vmatmul.mubr.bf16.gmra.mxu0 %v2948
        %v3258 = vpop.f32.mrf.mxu0
        %v3259 = vadd.f32 0.0, %v3258
        %v3260 = vpop.f32.mrf.mxu0
        %v3261 = vpop.f32.mrf.mxu0
        %v3262 = vadd.f32 0.0, %v3261
        %v3263 = vpop.f32.mrf.mxu0
        %3264 = vmatprep.mubr.bf16.mxu0 %v2952
        %3265 = vmatmul.mubr.bf16.gmra.mxu0 %v2951
        %v3266 = vpop.f32.mrf.mxu0
        %v3267 = vadd.f32 0.0, %v3266
        %v3268 = vpop.f32.mrf.mxu0
        %v3269 = vpop.f32.mrf.mxu0
        %v3270 = vadd.f32 0.0, %v3269
        %v3271 = vpop.f32.mrf.mxu0
        %3272 = vmatprep.mubr.bf16.mxu0 %v2955
        %3273 = vmatmul.mubr.bf16.gmra.mxu0 %v2954
        %v3274 = vpop.f32.mrf.mxu0
        %v3275 = vadd.f32 0.0, %v3274
        %v3276 = vpop.f32.mrf.mxu0
        %v3277 = vpop.f32.mrf.mxu0
        %v3278 = vadd.f32 0.0, %v3277
        %v3279 = vpop.f32.mrf.mxu0
        %3280 = vmatprep.mubr.bf16.mxu0 %v2958
        %3281 = vmatmul.mubr.bf16.gmra.mxu0 %v2957
        %v3282 = vpop.f32.mrf.mxu0
        %v3283 = vadd.f32 0.0, %v3282
        %v3284 = vpop.f32.mrf.mxu0
        %v3285 = vpop.f32.mrf.mxu0
        %v3286 = vadd.f32 0.0, %v3285
        %v3287 = vpop.f32.mrf.mxu0
        %3288 = vmatprep.mubr.bf16.mxu0 %v2961
        %3289 = vmatmul.mubr.bf16.gmra.mxu0 %v2960
        %v3290 = vpop.f32.mrf.mxu0
        %v3291 = vadd.f32 0.0, %v3290
        %v3292 = vpop.f32.mrf.mxu0
        %v3293 = vpop.f32.mrf.mxu0
        %v3294 = vadd.f32 0.0, %v3293
        %v3295 = vpop.f32.mrf.mxu0
        %3296 = vmatprep.mubr.bf16.mxu0 %v2964
        %3297 = vmatmul.mubr.bf16.gmra.mxu0 %v2963
        %v3298 = vpop.f32.mrf.mxu0
        %v3299 = vadd.f32 0.0, %v3298
        %v3300 = vpop.f32.mrf.mxu0
        %v3301 = vpop.f32.mrf.mxu0
        %v3302 = vadd.f32 0.0, %v3301
        %v3303 = vpop.f32.mrf.mxu0
        %3304 = vmatprep.mubr.bf16.mxu0 %v2967
        %3305 = vmatmul.mubr.bf16.gmra.mxu0 %v2966
        %v3306 = vpop.f32.mrf.mxu0
        %v3307 = vadd.f32 0.0, %v3306
        %v3308 = vpop.f32.mrf.mxu0
        %v3309 = vpop.f32.mrf.mxu0
        %v3310 = vadd.f32 0.0, %v3309
        %v3311 = vpop.f32.mrf.mxu0
        %3312 = vmatprep.mubr.bf16.mxu0 %v2970
        %3313 = vmatmul.mubr.bf16.gmra.mxu0 %v2969
        %v3314 = vpop.f32.mrf.mxu0
        %v3315 = vadd.f32 0.0, %v3314
        %v3316 = vpop.f32.mrf.mxu0
        %v3317 = vpop.f32.mrf.mxu0
        %v3318 = vadd.f32 0.0, %v3317
        %v3319 = vpop.f32.mrf.mxu0
        %3320 = vmatprep.mubr.bf16.mxu0 %v2973
        %3321 = vmatmul.mubr.bf16.gmra.mxu0 %v2972
        %v3322 = vpop.f32.mrf.mxu0
        %v3323 = vadd.f32 0.0, %v3322
        %v3324 = vpop.f32.mrf.mxu0
        %v3325 = vpop.f32.mrf.mxu0
        %v3326 = vadd.f32 0.0, %v3325
        %v3327 = vpop.f32.mrf.mxu0
        %3328 = vdwg.mxu0
        %3329 = vmatprep.subr.bf16.mxu0 0
        %3330 = vmatpush1.bf16.msra.mxu0 %v3143
        %3331 = vmatprep.subr.bf16.mxu0 0
        %3332 = vmatpush1.bf16.msra.mxu0 %v3142
        %3333 = vmatprep.subr.bf16.mxu0 0
        %3334 = vmatpush1.bf16.msra.mxu0 %v3141
        %3335 = vmatprep.subr.bf16.mxu0 0
        %3336 = vmatpush1.bf16.msra.mxu0 %v3140
        %3337 = vmatprep.subr.bf16.mxu0 0
        %3338 = vmatpush1.bf16.msra.mxu0 %v3139
        %3339 = vmatprep.subr.bf16.mxu0 0
        %3340 = vmatpush1.bf16.msra.mxu0 %v3138
        %3341 = vmatprep.subr.bf16.mxu0 0
        %3342 = vmatpush1.bf16.msra.mxu0 %v3137
        %3343 = vmatprep.subr.bf16.mxu0 0
        %3344 = vmatpush1.bf16.msra.mxu0 %v3136
        %3345 = vmatprep.subr.bf16.mxu0 0
        %3346 = vmatpush2.bf16.msra.mxu0 0
        %3347 = vmatprep.subr.bf16.mxu0 0
        %3348 = vmatpush2.bf16.msra.mxu0 0
        %3349 = vmatprep.subr.bf16.mxu0 0
        %3350 = vmatpush2.bf16.msra.mxu0 0
        %3351 = vmatprep.subr.bf16.mxu0 0
        %3352 = vmatpush2.bf16.msra.mxu0 0
        %3353 = vmatprep.subr.bf16.mxu0 0
        %3354 = vmatpush2.bf16.msra.mxu0 0
        %3355 = vmatprep.subr.bf16.mxu0 0
        %3356 = vmatpush2.bf16.msra.mxu0 0
        %3357 = vmatprep.subr.bf16.mxu0 0
        %3358 = vmatpush2.bf16.msra.mxu0 0
        %3359 = vmatprep.subr.bf16.mxu0 0
        %3360 = vmatpush2.bf16.msra.mxu0 0
        %3361 = vmatprep.mubr.bf16.mxu0 0
        %3362 = vmatmul.mubr.bf16.gmra.mxu0 %v2929
        %v3363 = vpop.f32.mrf.mxu0
        %v3364 = vadd.f32 %v3203, %v3363
        %v3365 = vpop.f32.mrf.mxu0
        %v3366 = vpop.f32.mrf.mxu0
        %v3367 = vadd.f32 %v3206, %v3366
        %v3368 = vpop.f32.mrf.mxu0
        %3369 = vmatprep.mubr.bf16.mxu0 0
        %3370 = vmatmul.mubr.bf16.gmra.mxu0 %v2932
        %v3371 = vpop.f32.mrf.mxu0
        %v3372 = vadd.f32 %v3211, %v3371
        %v3373 = vpop.f32.mrf.mxu0
        %v3374 = vpop.f32.mrf.mxu0
        %v3375 = vadd.f32 %v3214, %v3374
        %v3376 = vpop.f32.mrf.mxu0
        %3377 = vmatprep.mubr.bf16.mxu0 0
        %3378 = vmatmul.mubr.bf16.gmra.mxu0 %v2935
        %v3379 = vpop.f32.mrf.mxu0
        %v3380 = vadd.f32 %v3219, %v3379
        %v3381 = vpop.f32.mrf.mxu0
        %v3382 = vpop.f32.mrf.mxu0
        %v3383 = vadd.f32 %v3222, %v3382
        %v3384 = vpop.f32.mrf.mxu0
        %3385 = vmatprep.mubr.bf16.mxu0 0
        %3386 = vmatmul.mubr.bf16.gmra.mxu0 %v2938
        %v3387 = vpop.f32.mrf.mxu0
        %v3388 = vadd.f32 %v3227, %v3387
        %v3389 = vpop.f32.mrf.mxu0
        %v3390 = vpop.f32.mrf.mxu0
        %v3391 = vadd.f32 %v3230, %v3390
        %v3392 = vpop.f32.mrf.mxu0
        %3393 = vmatprep.mubr.bf16.mxu0 0
        %3394 = vmatmul.mubr.bf16.gmra.mxu0 %v2941
        %v3395 = vpop.f32.mrf.mxu0
        %v3396 = vadd.f32 %v3235, %v3395
        %v3397 = vpop.f32.mrf.mxu0
        %v3398 = vpop.f32.mrf.mxu0
        %v3399 = vadd.f32 %v3238, %v3398
        %v3400 = vpop.f32.mrf.mxu0
        %3401 = vmatprep.mubr.bf16.mxu0 0
        %3402 = vmatmul.mubr.bf16.gmra.mxu0 %v2944
        %v3403 = vpop.f32.mrf.mxu0
        %v3404 = vadd.f32 %v3243, %v3403
        %v3405 = vpop.f32.mrf.mxu0
        %v3406 = vpop.f32.mrf.mxu0
        %v3407 = vadd.f32 %v3246, %v3406
        %v3408 = vpop.f32.mrf.mxu0
        %3409 = vmatprep.mubr.bf16.mxu0 0
        %3410 = vmatmul.mubr.bf16.gmra.mxu0 %v2947
        %v3411 = vpop.f32.mrf.mxu0
        %v3412 = vadd.f32 %v3251, %v3411
        %v3413 = vpop.f32.mrf.mxu0
        %v3414 = vpop.f32.mrf.mxu0
        %v3415 = vadd.f32 %v3254, %v3414
        %v3416 = vpop.f32.mrf.mxu0
        %3417 = vmatprep.mubr.bf16.mxu0 0
        %3418 = vmatmul.mubr.bf16.gmra.mxu0 %v2950
        %v3419 = vpop.f32.mrf.mxu0
        %v3420 = vadd.f32 %v3259, %v3419
        %v3421 = vpop.f32.mrf.mxu0
        %v3422 = vpop.f32.mrf.mxu0
        %v3423 = vadd.f32 %v3262, %v3422
        %v3424 = vpop.f32.mrf.mxu0
        %3425 = vmatprep.mubr.bf16.mxu0 0
        %3426 = vmatmul.mubr.bf16.gmra.mxu0 %v2953
        %v3427 = vpop.f32.mrf.mxu0
        %v3428 = vadd.f32 %v3267, %v3427
        %v3429 = vpop.f32.mrf.mxu0
        %v3430 = vpop.f32.mrf.mxu0
        %v3431 = vadd.f32 %v3270, %v3430
        %v3432 = vpop.f32.mrf.mxu0
        %3433 = vmatprep.mubr.bf16.mxu0 0
        %3434 = vmatmul.mubr.bf16.gmra.mxu0 %v2956
        %v3435 = vpop.f32.mrf.mxu0
        %v3436 = vadd.f32 %v3275, %v3435
        %v3437 = vpop.f32.mrf.mxu0
        %v3438 = vpop.f32.mrf.mxu0
        %v3439 = vadd.f32 %v3278, %v3438
        %v3440 = vpop.f32.mrf.mxu0
        %3441 = vmatprep.mubr.bf16.mxu0 0
        %3442 = vmatmul.mubr.bf16.gmra.mxu0 %v2959
        %v3443 = vpop.f32.mrf.mxu0
        %v3444 = vadd.f32 %v3283, %v3443
        %v3445 = vpop.f32.mrf.mxu0
        %v3446 = vpop.f32.mrf.mxu0
        %v3447 = vadd.f32 %v3286, %v3446
        %v3448 = vpop.f32.mrf.mxu0
        %3449 = vmatprep.mubr.bf16.mxu0 0
        %3450 = vmatmul.mubr.bf16.gmra.mxu0 %v2962
        %v3451 = vpop.f32.mrf.mxu0
        %v3452 = vadd.f32 %v3291, %v3451
        %v3453 = vpop.f32.mrf.mxu0
        %v3454 = vpop.f32.mrf.mxu0
        %v3455 = vadd.f32 %v3294, %v3454
        %v3456 = vpop.f32.mrf.mxu0
        %3457 = vmatprep.mubr.bf16.mxu0 0
        %3458 = vmatmul.mubr.bf16.gmra.mxu0 %v2965
        %v3459 = vpop.f32.mrf.mxu0
        %v3460 = vadd.f32 %v3299, %v3459
        %v3461 = vpop.f32.mrf.mxu0
        %v3462 = vpop.f32.mrf.mxu0
        %v3463 = vadd.f32 %v3302, %v3462
        %v3464 = vpop.f32.mrf.mxu0
        %3465 = vmatprep.mubr.bf16.mxu0 0
        %3466 = vmatmul.mubr.bf16.gmra.mxu0 %v2968
        %v3467 = vpop.f32.mrf.mxu0
        %v3468 = vadd.f32 %v3307, %v3467
        %v3469 = vpop.f32.mrf.mxu0
        %v3470 = vpop.f32.mrf.mxu0
        %v3471 = vadd.f32 %v3310, %v3470
        %v3472 = vpop.f32.mrf.mxu0
        %3473 = vmatprep.mubr.bf16.mxu0 0
        %3474 = vmatmul.mubr.bf16.gmra.mxu0 %v2971
        %v3475 = vpop.f32.mrf.mxu0
        %v3476 = vadd.f32 %v3315, %v3475
        %v3477 = vpop.f32.mrf.mxu0
        %v3478 = vpop.f32.mrf.mxu0
        %v3479 = vadd.f32 %v3318, %v3478
        %v3480 = vpop.f32.mrf.mxu0
        %3481 = vmatprep.mubr.bf16.mxu0 0
        %3482 = vmatmul.mubr.bf16.gmra.mxu0 %v2974
        %v3483 = vpop.f32.mrf.mxu0
        %v3484 = vadd.f32 %v3323, %v3483
        %v3485 = vpop.f32.mrf.mxu0
        %v3486 = vpop.f32.mrf.mxu0
        %v3487 = vadd.f32 %v3326, %v3486
        %v3488 = vpop.f32.mrf.mxu0
        %3489 = vdwg.mxu0
        %v3538 = vunpack.c.l.b16 %v2783
        %v3539 = vunpack.c.l.b16 %v2784
        %v3540 = vunpack.c.l.b16 %v2785
        %v3541 = vunpack.c.l.b16 %v2786
        %v3542 = vunpack.c.l.b16 %v2787
        %v3543 = vunpack.c.l.b16 %v2788
        %v3544 = vunpack.c.l.b16 %v2789
        %v3545 = vunpack.c.l.b16 %v2790
        %v3546 = vunpack.c.l.b16 %v2791
        %v3547 = vunpack.c.l.b16 %v2792
        %v3548 = vunpack.c.l.b16 %v2793
        %v3549 = vunpack.c.l.b16 %v2794
        %v3550 = vunpack.c.l.b16 %v2795
        %v3551 = vunpack.c.l.b16 %v2796
        %v3552 = vunpack.c.l.b16 %v2797
        %v3553 = vunpack.c.l.b16 %v2798
        %v3554 = vunpack.c.l.b16 %v2799
        %v3555 = vunpack.c.l.b16 %v2800
        %v3556 = vunpack.c.l.b16 %v2801
        %v3557 = vunpack.c.l.b16 %v2802
        %v3558 = vunpack.c.l.b16 %v2803
        %v3559 = vunpack.c.l.b16 %v2804
        %v3560 = vunpack.c.l.b16 %v2805
        %v3561 = vunpack.c.l.b16 %v2806
        %v3562 = vunpack.c.l.b16 %v2807
        %v3563 = vunpack.c.l.b16 %v2808
        %v3564 = vunpack.c.l.b16 %v2809
        %v3565 = vunpack.c.l.b16 %v2810
        %v3566 = vunpack.c.l.b16 %v2811
        %v3567 = vunpack.c.l.b16 %v2812
        %v3568 = vunpack.c.l.b16 %v2813
        %v3569 = vunpack.c.l.b16 %v2814
        %v3570 = vunpack.c.l.b16 %v2815
        %v3571 = vunpack.c.l.b16 %v2816
        %v3572 = vunpack.c.l.b16 %v2817
        %v3573 = vunpack.c.l.b16 %v2818
        %v3574 = vunpack.c.l.b16 %v2819
        %v3575 = vunpack.c.l.b16 %v2820
        %v3576 = vunpack.c.l.b16 %v2821
        %v3577 = vunpack.c.l.b16 %v2822
        %v3578 = vunpack.c.l.b16 %v2823
        %v3579 = vunpack.c.l.b16 %v2824
        %v3580 = vunpack.c.l.b16 %v2825
        %v3581 = vunpack.c.l.b16 %v2826
        %v3582 = vunpack.c.l.b16 %v2827
        %v3583 = vunpack.c.l.b16 %v2828
        %v3584 = vunpack.c.l.b16 %v2829
        %v3585 = vunpack.c.l.b16 %v2830
        %v3586 = vpack.c.b16 %v3539, %v3538
        %v3587 = vpack.c.b16 %v3541, %v3540
        %v3588 = vpack.c.b16 %v3543, %v3542
        %v3589 = vpack.c.b16 %v3545, %v3544
        %v3590 = vpack.c.b16 %v3547, %v3546
        %v3591 = vpack.c.b16 %v3549, %v3548
        %v3592 = vpack.c.b16 %v3551, %v3550
        %v3593 = vpack.c.b16 %v3553, %v3552
        %v3594 = vpack.c.b16 %v3555, %v3554
        %v3595 = vpack.c.b16 %v3557, %v3556
        %v3596 = vpack.c.b16 %v3559, %v3558
        %v3597 = vpack.c.b16 %v3561, %v3560
        %v3598 = vpack.c.b16 %v3563, %v3562
        %v3599 = vpack.c.b16 %v3565, %v3564
        %v3600 = vpack.c.b16 %v3567, %v3566
        %v3601 = vpack.c.b16 %v3569, %v3568
        %v3602 = vpack.c.b16 %v3571, %v3570
        %v3603 = vpack.c.b16 %v3573, %v3572
        %v3604 = vpack.c.b16 %v3575, %v3574
        %v3605 = vpack.c.b16 %v3577, %v3576
        %v3606 = vpack.c.b16 %v3579, %v3578
        %v3607 = vpack.c.b16 %v3581, %v3580
        %v3608 = vpack.c.b16 %v3583, %v3582
        %v3609 = vpack.c.b16 %v3585, %v3584
        %3634 = vmatprep.subr.bf16.mxu0 0
        %3635 = vmatpush1.bf16.msra.mxu0 %v3593
        %3636 = vmatprep.subr.bf16.mxu0 0
        %3637 = vmatpush1.bf16.msra.mxu0 %v3592
        %3638 = vmatprep.subr.bf16.mxu0 0
        %3639 = vmatpush1.bf16.msra.mxu0 %v3591
        %3640 = vmatprep.subr.bf16.mxu0 0
        %3641 = vmatpush1.bf16.msra.mxu0 %v3590
        %3642 = vmatprep.subr.bf16.mxu0 0
        %3643 = vmatpush1.bf16.msra.mxu0 %v3589
        %3644 = vmatprep.subr.bf16.mxu0 0
        %3645 = vmatpush1.bf16.msra.mxu0 %v3588
        %3646 = vmatprep.subr.bf16.mxu0 0
        %3647 = vmatpush1.bf16.msra.mxu0 %v3587
        %3648 = vmatprep.subr.bf16.mxu0 0
        %3649 = vmatpush1.bf16.msra.mxu0 %v3586
        %3650 = vmatprep.subr.bf16.mxu0 0
        %3651 = vmatpush2.bf16.msra.mxu0 %v3601
        %3652 = vmatprep.subr.bf16.mxu0 0
        %3653 = vmatpush2.bf16.msra.mxu0 %v3600
        %3654 = vmatprep.subr.bf16.mxu0 0
        %3655 = vmatpush2.bf16.msra.mxu0 %v3599
        %3656 = vmatprep.subr.bf16.mxu0 0
        %3657 = vmatpush2.bf16.msra.mxu0 %v3598
        %3658 = vmatprep.subr.bf16.mxu0 0
        %3659 = vmatpush2.bf16.msra.mxu0 %v3597
        %3660 = vmatprep.subr.bf16.mxu0 0
        %3661 = vmatpush2.bf16.msra.mxu0 %v3596
        %3662 = vmatprep.subr.bf16.mxu0 0
        %3663 = vmatpush2.bf16.msra.mxu0 %v3595
        %3664 = vmatprep.subr.bf16.mxu0 0
        %3665 = vmatpush2.bf16.msra.mxu0 %v3594
        %3666 = vmatprep.mubr.bf16.mxu0 %v2736
        %3667 = vmatmul.mubr.bf16.gmra.mxu0 %v2735
        %v3668 = vpop.f32.mrf.mxu0
        %v3669 = vadd.f32 %v3364, %v3668
        %v3670 = vpop.f32.mrf.mxu0
        %v3671 = vpop.f32.mrf.mxu0
        %v3672 = vadd.f32 %v3367, %v3671
        %v3673 = vpop.f32.mrf.mxu0
        %3674 = vmatprep.mubr.bf16.mxu0 %v2739
        %3675 = vmatmul.mubr.bf16.gmra.mxu0 %v2738
        %v3676 = vpop.f32.mrf.mxu0
        %v3677 = vadd.f32 %v3372, %v3676
        %v3678 = vpop.f32.mrf.mxu0
        %v3679 = vpop.f32.mrf.mxu0
        %v3680 = vadd.f32 %v3375, %v3679
        %v3681 = vpop.f32.mrf.mxu0
        %3682 = vmatprep.mubr.bf16.mxu0 %v2742
        %3683 = vmatmul.mubr.bf16.gmra.mxu0 %v2741
        %v3684 = vpop.f32.mrf.mxu0
        %v3685 = vadd.f32 %v3380, %v3684
        %v3686 = vpop.f32.mrf.mxu0
        %v3687 = vpop.f32.mrf.mxu0
        %v3688 = vadd.f32 %v3383, %v3687
        %v3689 = vpop.f32.mrf.mxu0
        %3690 = vmatprep.mubr.bf16.mxu0 %v2745
        %3691 = vmatmul.mubr.bf16.gmra.mxu0 %v2744
        %v3692 = vpop.f32.mrf.mxu0
        %v3693 = vadd.f32 %v3388, %v3692
        %v3694 = vpop.f32.mrf.mxu0
        %v3695 = vpop.f32.mrf.mxu0
        %v3696 = vadd.f32 %v3391, %v3695
        %v3697 = vpop.f32.mrf.mxu0
        %3698 = vmatprep.mubr.bf16.mxu0 %v2748
        %3699 = vmatmul.mubr.bf16.gmra.mxu0 %v2747
        %v3700 = vpop.f32.mrf.mxu0
        %v3701 = vadd.f32 %v3396, %v3700
        %v3702 = vpop.f32.mrf.mxu0
        %v3703 = vpop.f32.mrf.mxu0
        %v3704 = vadd.f32 %v3399, %v3703
        %v3705 = vpop.f32.mrf.mxu0
        %3706 = vmatprep.mubr.bf16.mxu0 %v2751
        %3707 = vmatmul.mubr.bf16.gmra.mxu0 %v2750
        %v3708 = vpop.f32.mrf.mxu0
        %v3709 = vadd.f32 %v3404, %v3708
        %v3710 = vpop.f32.mrf.mxu0
        %v3711 = vpop.f32.mrf.mxu0
        %v3712 = vadd.f32 %v3407, %v3711
        %v3713 = vpop.f32.mrf.mxu0
        %3714 = vmatprep.mubr.bf16.mxu0 %v2754
        %3715 = vmatmul.mubr.bf16.gmra.mxu0 %v2753
        %v3716 = vpop.f32.mrf.mxu0
        %v3717 = vadd.f32 %v3412, %v3716
        %v3718 = vpop.f32.mrf.mxu0
        %v3719 = vpop.f32.mrf.mxu0
        %v3720 = vadd.f32 %v3415, %v3719
        %v3721 = vpop.f32.mrf.mxu0
        %3722 = vmatprep.mubr.bf16.mxu0 %v2757
        %3723 = vmatmul.mubr.bf16.gmra.mxu0 %v2756
        %v3724 = vpop.f32.mrf.mxu0
        %v3725 = vadd.f32 %v3420, %v3724
        %v3726 = vpop.f32.mrf.mxu0
        %v3727 = vpop.f32.mrf.mxu0
        %v3728 = vadd.f32 %v3423, %v3727
        %v3729 = vpop.f32.mrf.mxu0
        %3730 = vmatprep.mubr.bf16.mxu0 %v2760
        %3731 = vmatmul.mubr.bf16.gmra.mxu0 %v2759
        %v3732 = vpop.f32.mrf.mxu0
        %v3733 = vadd.f32 %v3428, %v3732
        %v3734 = vpop.f32.mrf.mxu0
        %v3735 = vpop.f32.mrf.mxu0
        %v3736 = vadd.f32 %v3431, %v3735
        %v3737 = vpop.f32.mrf.mxu0
        %3738 = vmatprep.mubr.bf16.mxu0 %v2763
        %3739 = vmatmul.mubr.bf16.gmra.mxu0 %v2762
        %v3740 = vpop.f32.mrf.mxu0
        %v3741 = vadd.f32 %v3436, %v3740
        %v3742 = vpop.f32.mrf.mxu0
        %v3743 = vpop.f32.mrf.mxu0
        %v3744 = vadd.f32 %v3439, %v3743
        %v3745 = vpop.f32.mrf.mxu0
        %3746 = vmatprep.mubr.bf16.mxu0 %v2766
        %3747 = vmatmul.mubr.bf16.gmra.mxu0 %v2765
        %v3748 = vpop.f32.mrf.mxu0
        %v3749 = vadd.f32 %v3444, %v3748
        %v3750 = vpop.f32.mrf.mxu0
        %v3751 = vpop.f32.mrf.mxu0
        %v3752 = vadd.f32 %v3447, %v3751
        %v3753 = vpop.f32.mrf.mxu0
        %3754 = vmatprep.mubr.bf16.mxu0 %v2769
        %3755 = vmatmul.mubr.bf16.gmra.mxu0 %v2768
        %v3756 = vpop.f32.mrf.mxu0
        %v3757 = vadd.f32 %v3452, %v3756
        %v3758 = vpop.f32.mrf.mxu0
        %v3759 = vpop.f32.mrf.mxu0
        %v3760 = vadd.f32 %v3455, %v3759
        %v3761 = vpop.f32.mrf.mxu0
        %3762 = vmatprep.mubr.bf16.mxu0 %v2772
        %3763 = vmatmul.mubr.bf16.gmra.mxu0 %v2771
        %v3764 = vpop.f32.mrf.mxu0
        %v3765 = vadd.f32 %v3460, %v3764
        %v3766 = vpop.f32.mrf.mxu0
        %v3767 = vpop.f32.mrf.mxu0
        %v3768 = vadd.f32 %v3463, %v3767
        %v3769 = vpop.f32.mrf.mxu0
        %3770 = vmatprep.mubr.bf16.mxu0 %v2775
        %3771 = vmatmul.mubr.bf16.gmra.mxu0 %v2774
        %v3772 = vpop.f32.mrf.mxu0
        %v3773 = vadd.f32 %v3468, %v3772
        %v3774 = vpop.f32.mrf.mxu0
        %v3775 = vpop.f32.mrf.mxu0
        %v3776 = vadd.f32 %v3471, %v3775
        %v3777 = vpop.f32.mrf.mxu0
        %3778 = vmatprep.mubr.bf16.mxu0 %v2778
        %3779 = vmatmul.mubr.bf16.gmra.mxu0 %v2777
        %v3780 = vpop.f32.mrf.mxu0
        %v3781 = vadd.f32 %v3476, %v3780
        %v3782 = vpop.f32.mrf.mxu0
        %v3783 = vpop.f32.mrf.mxu0
        %v3784 = vadd.f32 %v3479, %v3783
        %v3785 = vpop.f32.mrf.mxu0
        %3786 = vmatprep.mubr.bf16.mxu0 %v2781
        %3787 = vmatmul.mubr.bf16.gmra.mxu0 %v2780
        %v3788 = vpop.f32.mrf.mxu0
        %v3789 = vadd.f32 %v3484, %v3788
        %v3790 = vpop.f32.mrf.mxu0
        %v3791 = vpop.f32.mrf.mxu0
        %v3792 = vadd.f32 %v3487, %v3791
        %v3793 = vpop.f32.mrf.mxu0
        %3794 = vdwg.mxu0
        %3795 = vmatprep.subr.bf16.mxu0 0
        %3796 = vmatpush1.bf16.msra.mxu0 %v3609
        %3797 = vmatprep.subr.bf16.mxu0 0
        %3798 = vmatpush1.bf16.msra.mxu0 %v3608
        %3799 = vmatprep.subr.bf16.mxu0 0
        %3800 = vmatpush1.bf16.msra.mxu0 %v3607
        %3801 = vmatprep.subr.bf16.mxu0 0
        %3802 = vmatpush1.bf16.msra.mxu0 %v3606
        %3803 = vmatprep.subr.bf16.mxu0 0
        %3804 = vmatpush1.bf16.msra.mxu0 %v3605
        %3805 = vmatprep.subr.bf16.mxu0 0
        %3806 = vmatpush1.bf16.msra.mxu0 %v3604
        %3807 = vmatprep.subr.bf16.mxu0 0
        %3808 = vmatpush1.bf16.msra.mxu0 %v3603
        %3809 = vmatprep.subr.bf16.mxu0 0
        %3810 = vmatpush1.bf16.msra.mxu0 %v3602
        %3811 = vmatprep.subr.bf16.mxu0 0
        %3812 = vmatpush2.bf16.msra.mxu0 0
        %3813 = vmatprep.subr.bf16.mxu0 0
        %3814 = vmatpush2.bf16.msra.mxu0 0
        %3815 = vmatprep.subr.bf16.mxu0 0
        %3816 = vmatpush2.bf16.msra.mxu0 0
        %3817 = vmatprep.subr.bf16.mxu0 0
        %3818 = vmatpush2.bf16.msra.mxu0 0
        %3819 = vmatprep.subr.bf16.mxu0 0
        %3820 = vmatpush2.bf16.msra.mxu0 0
        %3821 = vmatprep.subr.bf16.mxu0 0
        %3822 = vmatpush2.bf16.msra.mxu0 0
        %3823 = vmatprep.subr.bf16.mxu0 0
        %3824 = vmatpush2.bf16.msra.mxu0 0
        %3825 = vmatprep.subr.bf16.mxu0 0
        %3826 = vmatpush2.bf16.msra.mxu0 0
        %3827 = vmatprep.mubr.bf16.mxu0 0
        %3828 = vmatmul.mubr.bf16.gmra.mxu0 %v2737
        %v3829 = vpop.f32.mrf.mxu0
        %v3830 = vadd.f32 %v3669, %v3829
        %v3831 = vpop.f32.mrf.mxu0
        %v3832 = vpop.f32.mrf.mxu0
        %v3833 = vadd.f32 %v3672, %v3832
        %v3834 = vpop.f32.mrf.mxu0
        %3835 = vmatprep.mubr.bf16.mxu0 0
        %3836 = vmatmul.mubr.bf16.gmra.mxu0 %v2740
        %v3837 = vpop.f32.mrf.mxu0
        %v3838 = vadd.f32 %v3677, %v3837
        %v3839 = vpop.f32.mrf.mxu0
        %v3840 = vpop.f32.mrf.mxu0
        %v3841 = vadd.f32 %v3680, %v3840
        %v3842 = vpop.f32.mrf.mxu0
        %3843 = vmatprep.mubr.bf16.mxu0 0
        %3844 = vmatmul.mubr.bf16.gmra.mxu0 %v2743
        %v3845 = vpop.f32.mrf.mxu0
        %v3846 = vadd.f32 %v3685, %v3845
        %v3847 = vpop.f32.mrf.mxu0
        %v3848 = vpop.f32.mrf.mxu0
        %v3849 = vadd.f32 %v3688, %v3848
        %v3850 = vpop.f32.mrf.mxu0
        %3851 = vmatprep.mubr.bf16.mxu0 0
        %3852 = vmatmul.mubr.bf16.gmra.mxu0 %v2746
        %v3853 = vpop.f32.mrf.mxu0
        %v3854 = vadd.f32 %v3693, %v3853
        %v3855 = vpop.f32.mrf.mxu0
        %v3856 = vpop.f32.mrf.mxu0
        %v3857 = vadd.f32 %v3696, %v3856
        %v3858 = vpop.f32.mrf.mxu0
        %3859 = vmatprep.mubr.bf16.mxu0 0
        %3860 = vmatmul.mubr.bf16.gmra.mxu0 %v2749
        %v3861 = vpop.f32.mrf.mxu0
        %v3862 = vadd.f32 %v3701, %v3861
        %v3863 = vpop.f32.mrf.mxu0
        %v3864 = vpop.f32.mrf.mxu0
        %v3865 = vadd.f32 %v3704, %v3864
        %v3866 = vpop.f32.mrf.mxu0
        %3867 = vmatprep.mubr.bf16.mxu0 0
        %3868 = vmatmul.mubr.bf16.gmra.mxu0 %v2752
        %v3869 = vpop.f32.mrf.mxu0
        %v3870 = vadd.f32 %v3709, %v3869
        %v3871 = vpop.f32.mrf.mxu0
        %v3872 = vpop.f32.mrf.mxu0
        %v3873 = vadd.f32 %v3712, %v3872
        %v3874 = vpop.f32.mrf.mxu0
        %3875 = vmatprep.mubr.bf16.mxu0 0
        %3876 = vmatmul.mubr.bf16.gmra.mxu0 %v2755
        %v3877 = vpop.f32.mrf.mxu0
        %v3878 = vadd.f32 %v3717, %v3877
        %v3879 = vpop.f32.mrf.mxu0
        %v3880 = vpop.f32.mrf.mxu0
        %v3881 = vadd.f32 %v3720, %v3880
        %v3882 = vpop.f32.mrf.mxu0
        %3883 = vmatprep.mubr.bf16.mxu0 0
        %3884 = vmatmul.mubr.bf16.gmra.mxu0 %v2758
        %v3885 = vpop.f32.mrf.mxu0
        %v3886 = vadd.f32 %v3725, %v3885
        %v3887 = vpop.f32.mrf.mxu0
        %v3888 = vpop.f32.mrf.mxu0
        %v3889 = vadd.f32 %v3728, %v3888
        %v3890 = vpop.f32.mrf.mxu0
        %3891 = vmatprep.mubr.bf16.mxu0 0
        %3892 = vmatmul.mubr.bf16.gmra.mxu0 %v2761
        %v3893 = vpop.f32.mrf.mxu0
        %v3894 = vadd.f32 %v3733, %v3893
        %v3895 = vpop.f32.mrf.mxu0
        %v3896 = vpop.f32.mrf.mxu0
        %v3897 = vadd.f32 %v3736, %v3896
        %v3898 = vpop.f32.mrf.mxu0
        %3899 = vmatprep.mubr.bf16.mxu0 0
        %3900 = vmatmul.mubr.bf16.gmra.mxu0 %v2764
        %v3901 = vpop.f32.mrf.mxu0
        %v3902 = vadd.f32 %v3741, %v3901
        %v3903 = vpop.f32.mrf.mxu0
        %v3904 = vpop.f32.mrf.mxu0
        %v3905 = vadd.f32 %v3744, %v3904
        %v3906 = vpop.f32.mrf.mxu0
        %3907 = vmatprep.mubr.bf16.mxu0 0
        %3908 = vmatmul.mubr.bf16.gmra.mxu0 %v2767
        %v3909 = vpop.f32.mrf.mxu0
        %v3910 = vadd.f32 %v3749, %v3909
        %v3911 = vpop.f32.mrf.mxu0
        %v3912 = vpop.f32.mrf.mxu0
        %v3913 = vadd.f32 %v3752, %v3912
        %v3914 = vpop.f32.mrf.mxu0
        %3915 = vmatprep.mubr.bf16.mxu0 0
        %3916 = vmatmul.mubr.bf16.gmra.mxu0 %v2770
        %v3917 = vpop.f32.mrf.mxu0
        %v3918 = vadd.f32 %v3757, %v3917
        %v3919 = vpop.f32.mrf.mxu0
        %v3920 = vpop.f32.mrf.mxu0
        %v3921 = vadd.f32 %v3760, %v3920
        %v3922 = vpop.f32.mrf.mxu0
        %3923 = vmatprep.mubr.bf16.mxu0 0
        %3924 = vmatmul.mubr.bf16.gmra.mxu0 %v2773
        %v3925 = vpop.f32.mrf.mxu0
        %v3926 = vadd.f32 %v3765, %v3925
        %v3927 = vpop.f32.mrf.mxu0
        %v3928 = vpop.f32.mrf.mxu0
        %v3929 = vadd.f32 %v3768, %v3928
        %v3930 = vpop.f32.mrf.mxu0
        %3931 = vmatprep.mubr.bf16.mxu0 0
        %3932 = vmatmul.mubr.bf16.gmra.mxu0 %v2776
        %v3933 = vpop.f32.mrf.mxu0
        %v3934 = vadd.f32 %v3773, %v3933
        %v3935 = vpop.f32.mrf.mxu0
        %v3936 = vpop.f32.mrf.mxu0
        %v3937 = vadd.f32 %v3776, %v3936
        %v3938 = vpop.f32.mrf.mxu0
        %3939 = vmatprep.mubr.bf16.mxu0 0
        %3940 = vmatmul.mubr.bf16.gmra.mxu0 %v2779
        %v3941 = vpop.f32.mrf.mxu0
        %v3942 = vadd.f32 %v3781, %v3941
        %v3943 = vpop.f32.mrf.mxu0
        %v3944 = vpop.f32.mrf.mxu0
        %v3945 = vadd.f32 %v3784, %v3944
        %v3946 = vpop.f32.mrf.mxu0
        %3947 = vmatprep.mubr.bf16.mxu0 0
        %3948 = vmatmul.mubr.bf16.gmra.mxu0 %v2782
        %v3949 = vpop.f32.mrf.mxu0
        %v3950 = vadd.f32 %v3789, %v3949
        %v3951 = vpop.f32.mrf.mxu0
        %v3952 = vpop.f32.mrf.mxu0
        %v3953 = vadd.f32 %v3792, %v3952
        %v3954 = vpop.f32.mrf.mxu0
        %3955 = vdwg.mxu0
        %s3956 = scalar_lea.vmem [#allocation3], 96
        %v3957 = vld [vmem:[%s3956] sm:$0xff]
        %v3958 = vld [vmem:[%s3956 + $0x8] sm:$0xff]
        %v3959 = vld [vmem:[%s3956 + $0x10] sm:$0xff]
        %v3960 = vld [vmem:[%s3956 + $0x18] sm:$0xff]
        %v3961 = vld [vmem:[%s3956 + $0x20] sm:$0xff]
        %v3962 = vld [vmem:[%s3956 + $0x28] sm:$0xff]
        %v3963 = vld [vmem:[%s3956 + $0x30] sm:$0xff]
        %v3964 = vld [vmem:[%s3956 + $0x38] sm:$0xff]
        %v3965 = vld [vmem:[%s3956 + $0x40] sm:$0xff]
        %v3966 = vld [vmem:[%s3956 + $0x48] sm:$0xff]
        %v3967 = vld [vmem:[%s3956 + $0x50] sm:$0xff]
        %v3968 = vld [vmem:[%s3956 + $0x58] sm:$0xff]
        %v3969 = vld [vmem:[%s3956 + $0x60] sm:$0xff]
        %v3970 = vld [vmem:[%s3956 + $0x68] sm:$0xff]
        %v3971 = vld [vmem:[%s3956 + $0x70] sm:$0xff]
        %v3972 = vld [vmem:[%s3956 + $0x78] sm:$0xff]
        %v3973 = vld [vmem:[%s3956 + $0x80] sm:$0xff]
        %v3974 = vld [vmem:[%s3956 + $0x88] sm:$0xff]
        %v3975 = vld [vmem:[%s3956 + $0x90] sm:$0xff]
        %v3976 = vld [vmem:[%s3956 + $0x98] sm:$0xff]
        %v3977 = vld [vmem:[%s3956 + $0xa0] sm:$0xff]
        %v3978 = vld [vmem:[%s3956 + $0xa8] sm:$0xff]
        %v3979 = vld [vmem:[%s3956 + $0xb0] sm:$0xff]
        %v3980 = vld [vmem:[%s3956 + $0xb8] sm:$0xff]
        %v3981 = vld [vmem:[%s3956 + $0xc0] sm:$0xff]
        %v3982 = vld [vmem:[%s3956 + $0xc8] sm:$0xff]
        %v3983 = vld [vmem:[%s3956 + $0xd0] sm:$0xff]
        %v3984 = vld [vmem:[%s3956 + $0xd8] sm:$0xff]
        %v3985 = vld [vmem:[%s3956 + $0xe0] sm:$0xff]
        %v3986 = vld [vmem:[%s3956 + $0xe8] sm:$0xff]
        %v3987 = vld [vmem:[%s3956 + $0xf0] sm:$0xff]
        %v3988 = vld [vmem:[%s3956 + $0xf8] sm:$0xff]
        %v3989 = vld [vmem:[%s3956 + $0x100] sm:$0xff]
        %v3990 = vld [vmem:[%s3956 + $0x108] sm:$0xff]
        %v3991 = vld [vmem:[%s3956 + $0x110] sm:$0xff]
        %v3992 = vld [vmem:[%s3956 + $0x118] sm:$0xff]
        %v3993 = vld [vmem:[%s3956 + $0x120] sm:$0xff]
        %v3994 = vld [vmem:[%s3956 + $0x128] sm:$0xff]
        %v3995 = vld [vmem:[%s3956 + $0x130] sm:$0xff]
        %v3996 = vld [vmem:[%s3956 + $0x138] sm:$0xff]
        %v3997 = vld [vmem:[%s3956 + $0x140] sm:$0xff]
        %v3998 = vld [vmem:[%s3956 + $0x148] sm:$0xff]
        %v3999 = vld [vmem:[%s3956 + $0x150] sm:$0xff]
        %v4000 = vld [vmem:[%s3956 + $0x158] sm:$0xff]
        %v4001 = vld [vmem:[%s3956 + $0x160] sm:$0xff]
        %v4002 = vld [vmem:[%s3956 + $0x168] sm:$0xff]
        %v4003 = vld [vmem:[%s3956 + $0x170] sm:$0xff]
        %v4004 = vld [vmem:[%s3956 + $0x178] sm:$0xff]
        %v4005 = vld [vmem:[%s3956 + $0x180] sm:$0xff]
        %v4006 = vld [vmem:[%s3956 + $0x188] sm:$0xff]
        %v4007 = vld [vmem:[%s3956 + $0x190] sm:$0xff]
        %v4008 = vld [vmem:[%s3956 + $0x198] sm:$0xff]
        %v4009 = vld [vmem:[%s3956 + $0x1a0] sm:$0xff]
        %v4010 = vld [vmem:[%s3956 + $0x1a8] sm:$0xff]
        %v4011 = vld [vmem:[%s3956 + $0x1b0] sm:$0xff]
        %v4012 = vld [vmem:[%s3956 + $0x1b8] sm:$0xff]
        %v4013 = vld [vmem:[%s3956 + $0x1c0] sm:$0xff]
        %v4014 = vld [vmem:[%s3956 + $0x1c8] sm:$0xff]
        %v4015 = vld [vmem:[%s3956 + $0x1d0] sm:$0xff]
        %v4016 = vld [vmem:[%s3956 + $0x1d8] sm:$0xff]
        %v4017 = vld [vmem:[%s3956 + $0x1e0] sm:$0xff]
        %v4018 = vld [vmem:[%s3956 + $0x1e8] sm:$0xff]
        %v4019 = vld [vmem:[%s3956 + $0x1f0] sm:$0xff]
        %v4020 = vld [vmem:[%s3956 + $0x1f8] sm:$0xff]
        %v4021 = vld [vmem:[%s3956 + $0x200] sm:$0xff]
        %v4022 = vld [vmem:[%s3956 + $0x208] sm:$0xff]
        %v4023 = vld [vmem:[%s3956 + $0x210] sm:$0xff]
        %v4024 = vld [vmem:[%s3956 + $0x218] sm:$0xff]
        %v4025 = vld [vmem:[%s3956 + $0x220] sm:$0xff]
        %v4026 = vld [vmem:[%s3956 + $0x228] sm:$0xff]
        %v4027 = vld [vmem:[%s3956 + $0x230] sm:$0xff]
        %v4028 = vld [vmem:[%s3956 + $0x238] sm:$0xff]
        %v4029 = vld [vmem:[%s3956 + $0x240] sm:$0xff]
        %v4030 = vld [vmem:[%s3956 + $0x248] sm:$0xff]
        %v4031 = vld [vmem:[%s3956 + $0x250] sm:$0xff]
        %v4032 = vld [vmem:[%s3956 + $0x258] sm:$0xff]
        %v4033 = vld [vmem:[%s3956 + $0x260] sm:$0xff]
        %v4034 = vld [vmem:[%s3956 + $0x268] sm:$0xff]
        %v4035 = vld [vmem:[%s3956 + $0x270] sm:$0xff]
        %v4036 = vld [vmem:[%s3956 + $0x278] sm:$0xff]
        %v4037 = vld [vmem:[%s3956 + $0x280] sm:$0xff]
        %v4038 = vld [vmem:[%s3956 + $0x288] sm:$0xff]
        %v4039 = vld [vmem:[%s3956 + $0x290] sm:$0xff]
        %v4040 = vld [vmem:[%s3956 + $0x298] sm:$0xff]
        %v4041 = vld [vmem:[%s3956 + $0x2a0] sm:$0xff]
        %v4042 = vld [vmem:[%s3956 + $0x2a8] sm:$0xff]
        %v4043 = vld [vmem:[%s3956 + $0x2b0] sm:$0xff]
        %v4044 = vld [vmem:[%s3956 + $0x2b8] sm:$0xff]
        %v4045 = vld [vmem:[%s3956 + $0x2c0] sm:$0xff]
        %v4046 = vld [vmem:[%s3956 + $0x2c8] sm:$0xff]
        %v4047 = vld [vmem:[%s3956 + $0x2d0] sm:$0xff]
        %v4048 = vld [vmem:[%s3956 + $0x2d8] sm:$0xff]
        %v4049 = vld [vmem:[%s3956 + $0x2e0] sm:$0xff]
        %v4050 = vld [vmem:[%s3956 + $0x2e8] sm:$0xff]
        %v4051 = vld [vmem:[%s3956 + $0x2f0] sm:$0xff]
        %v4052 = vld [vmem:[%s3956 + $0x2f8] sm:$0xff]
        %v4053 = vpack.c.bf16 %v3960, %v3957
        %v4054 = vpack.c.bf16 %v3961, %v3958
        %v4055 = vpack.c.bf16 %v3962, %v3959
        %v4056 = vpack.c.bf16 %v3966, %v3963
        %v4057 = vpack.c.bf16 %v3967, %v3964
        %v4058 = vpack.c.bf16 %v3968, %v3965
        %v4059 = vpack.c.bf16 %v3972, %v3969
        %v4060 = vpack.c.bf16 %v3973, %v3970
        %v4061 = vpack.c.bf16 %v3974, %v3971
        %v4062 = vpack.c.bf16 %v3978, %v3975
        %v4063 = vpack.c.bf16 %v3979, %v3976
        %v4064 = vpack.c.bf16 %v3980, %v3977
        %v4065 = vpack.c.bf16 %v3984, %v3981
        %v4066 = vpack.c.bf16 %v3985, %v3982
        %v4067 = vpack.c.bf16 %v3986, %v3983
        %v4068 = vpack.c.bf16 %v3990, %v3987
        %v4069 = vpack.c.bf16 %v3991, %v3988
        %v4070 = vpack.c.bf16 %v3992, %v3989
        %v4071 = vpack.c.bf16 %v3996, %v3993
        %v4072 = vpack.c.bf16 %v3997, %v3994
        %v4073 = vpack.c.bf16 %v3998, %v3995
        %v4074 = vpack.c.bf16 %v4002, %v3999
        %v4075 = vpack.c.bf16 %v4003, %v4000
        %v4076 = vpack.c.bf16 %v4004, %v4001
        %v4077 = vpack.c.bf16 %v4008, %v4005
        %v4078 = vpack.c.bf16 %v4009, %v4006
        %v4079 = vpack.c.bf16 %v4010, %v4007
        %v4080 = vpack.c.bf16 %v4014, %v4011
        %v4081 = vpack.c.bf16 %v4015, %v4012
        %v4082 = vpack.c.bf16 %v4016, %v4013
        %v4083 = vpack.c.bf16 %v4020, %v4017
        %v4084 = vpack.c.bf16 %v4021, %v4018
        %v4085 = vpack.c.bf16 %v4022, %v4019
        %v4086 = vpack.c.bf16 %v4026, %v4023
        %v4087 = vpack.c.bf16 %v4027, %v4024
        %v4088 = vpack.c.bf16 %v4028, %v4025
        %v4089 = vpack.c.bf16 %v4032, %v4029
        %v4090 = vpack.c.bf16 %v4033, %v4030
        %v4091 = vpack.c.bf16 %v4034, %v4031
        %v4092 = vpack.c.bf16 %v4038, %v4035
        %v4093 = vpack.c.bf16 %v4039, %v4036
        %v4094 = vpack.c.bf16 %v4040, %v4037
        %v4095 = vpack.c.bf16 %v4044, %v4041
        %v4096 = vpack.c.bf16 %v4045, %v4042
        %v4097 = vpack.c.bf16 %v4046, %v4043
        %v4098 = vpack.c.bf16 %v4050, %v4047
        %v4099 = vpack.c.bf16 %v4051, %v4048
        %v4100 = vpack.c.bf16 %v4052, %v4049
        %s4101 = scalar_lea.vmem [#allocation9], 384
        %v4102 = vld [vmem:[%s4101] sm:$0xf]
        %v4103 = vld [vmem:[%s4101 + $0x4] sm:$0xf]
        %v4104 = vld [vmem:[%s4101 + $0x8] sm:$0xf]
        %v4105 = vld [vmem:[%s4101 + $0xc] sm:$0xf]
        %v4106 = vld [vmem:[%s4101 + $0x10] sm:$0xf]
        %v4107 = vld [vmem:[%s4101 + $0x14] sm:$0xf]
        %v4108 = vld [vmem:[%s4101 + $0x18] sm:$0xf]
        %v4109 = vld [vmem:[%s4101 + $0x1c] sm:$0xf]
        %v4110 = vld [vmem:[%s4101 + $0x20] sm:$0xf]
        %v4111 = vld [vmem:[%s4101 + $0x24] sm:$0xf]
        %v4112 = vld [vmem:[%s4101 + $0x28] sm:$0xf]
        %v4113 = vld [vmem:[%s4101 + $0x2c] sm:$0xf]
        %v4114 = vld [vmem:[%s4101 + $0x30] sm:$0xf]
        %v4115 = vld [vmem:[%s4101 + $0x34] sm:$0xf]
        %v4116 = vld [vmem:[%s4101 + $0x38] sm:$0xf]
        %v4117 = vld [vmem:[%s4101 + $0x3c] sm:$0xf]
        %v4118 = vld [vmem:[%s4101 + $0x40] sm:$0xf]
        %v4119 = vld [vmem:[%s4101 + $0x44] sm:$0xf]
        %v4120 = vld [vmem:[%s4101 + $0x48] sm:$0xf]
        %v4121 = vld [vmem:[%s4101 + $0x4c] sm:$0xf]
        %v4122 = vld [vmem:[%s4101 + $0x50] sm:$0xf]
        %v4123 = vld [vmem:[%s4101 + $0x54] sm:$0xf]
        %v4124 = vld [vmem:[%s4101 + $0x58] sm:$0xf]
        %v4125 = vld [vmem:[%s4101 + $0x5c] sm:$0xf]
        %v4126 = vld [vmem:[%s4101 + $0x60] sm:$0xf]
        %v4127 = vld [vmem:[%s4101 + $0x64] sm:$0xf]
        %v4128 = vld [vmem:[%s4101 + $0x68] sm:$0xf]
        %v4129 = vld [vmem:[%s4101 + $0x6c] sm:$0xf]
        %v4130 = vld [vmem:[%s4101 + $0x70] sm:$0xf]
        %v4131 = vld [vmem:[%s4101 + $0x74] sm:$0xf]
        %v4132 = vld [vmem:[%s4101 + $0x78] sm:$0xf]
        %v4133 = vld [vmem:[%s4101 + $0x7c] sm:$0xf]
        %v4134 = vld [vmem:[%s4101 + $0x80] sm:$0xf]
        %v4135 = vld [vmem:[%s4101 + $0x84] sm:$0xf]
        %v4136 = vld [vmem:[%s4101 + $0x88] sm:$0xf]
        %v4137 = vld [vmem:[%s4101 + $0x8c] sm:$0xf]
        %v4138 = vld [vmem:[%s4101 + $0x90] sm:$0xf]
        %v4139 = vld [vmem:[%s4101 + $0x94] sm:$0xf]
        %v4140 = vld [vmem:[%s4101 + $0x98] sm:$0xf]
        %v4141 = vld [vmem:[%s4101 + $0x9c] sm:$0xf]
        %v4142 = vld [vmem:[%s4101 + $0xa0] sm:$0xf]
        %v4143 = vld [vmem:[%s4101 + $0xa4] sm:$0xf]
        %v4144 = vld [vmem:[%s4101 + $0xa8] sm:$0xf]
        %v4145 = vld [vmem:[%s4101 + $0xac] sm:$0xf]
        %v4146 = vld [vmem:[%s4101 + $0xb0] sm:$0xf]
        %v4147 = vld [vmem:[%s4101 + $0xb4] sm:$0xf]
        %v4148 = vld [vmem:[%s4101 + $0xb8] sm:$0xf]
        %v4149 = vld [vmem:[%s4101 + $0xbc] sm:$0xf]
        %v4198 = vunpack.c.l.b16 %v4102
        %v4199 = vunpack.c.l.b16 %v4103
        %v4200 = vunpack.c.l.b16 %v4104
        %v4201 = vunpack.c.l.b16 %v4105
        %v4202 = vunpack.c.l.b16 %v4106
        %v4203 = vunpack.c.l.b16 %v4107
        %v4204 = vunpack.c.l.b16 %v4108
        %v4205 = vunpack.c.l.b16 %v4109
        %v4206 = vunpack.c.l.b16 %v4110
        %v4207 = vunpack.c.l.b16 %v4111
        %v4208 = vunpack.c.l.b16 %v4112
        %v4209 = vunpack.c.l.b16 %v4113
        %v4210 = vunpack.c.l.b16 %v4114
        %v4211 = vunpack.c.l.b16 %v4115
        %v4212 = vunpack.c.l.b16 %v4116
        %v4213 = vunpack.c.l.b16 %v4117
        %v4214 = vunpack.c.l.b16 %v4118
        %v4215 = vunpack.c.l.b16 %v4119
        %v4216 = vunpack.c.l.b16 %v4120
        %v4217 = vunpack.c.l.b16 %v4121
        %v4218 = vunpack.c.l.b16 %v4122
        %v4219 = vunpack.c.l.b16 %v4123
        %v4220 = vunpack.c.l.b16 %v4124
        %v4221 = vunpack.c.l.b16 %v4125
        %v4222 = vunpack.c.l.b16 %v4126
        %v4223 = vunpack.c.l.b16 %v4127
        %v4224 = vunpack.c.l.b16 %v4128
        %v4225 = vunpack.c.l.b16 %v4129
        %v4226 = vunpack.c.l.b16 %v4130
        %v4227 = vunpack.c.l.b16 %v4131
        %v4228 = vunpack.c.l.b16 %v4132
        %v4229 = vunpack.c.l.b16 %v4133
        %v4230 = vunpack.c.l.b16 %v4134
        %v4231 = vunpack.c.l.b16 %v4135
        %v4232 = vunpack.c.l.b16 %v4136
        %v4233 = vunpack.c.l.b16 %v4137
        %v4234 = vunpack.c.l.b16 %v4138
        %v4235 = vunpack.c.l.b16 %v4139
        %v4236 = vunpack.c.l.b16 %v4140
        %v4237 = vunpack.c.l.b16 %v4141
        %v4238 = vunpack.c.l.b16 %v4142
        %v4239 = vunpack.c.l.b16 %v4143
        %v4240 = vunpack.c.l.b16 %v4144
        %v4241 = vunpack.c.l.b16 %v4145
        %v4242 = vunpack.c.l.b16 %v4146
        %v4243 = vunpack.c.l.b16 %v4147
        %v4244 = vunpack.c.l.b16 %v4148
        %v4245 = vunpack.c.l.b16 %v4149
        %v4246 = vpack.c.b16 %v4199, %v4198
        %v4247 = vpack.c.b16 %v4201, %v4200
        %v4248 = vpack.c.b16 %v4203, %v4202
        %v4249 = vpack.c.b16 %v4205, %v4204
        %v4250 = vpack.c.b16 %v4207, %v4206
        %v4251 = vpack.c.b16 %v4209, %v4208
        %v4252 = vpack.c.b16 %v4211, %v4210
        %v4253 = vpack.c.b16 %v4213, %v4212
        %v4254 = vpack.c.b16 %v4215, %v4214
        %v4255 = vpack.c.b16 %v4217, %v4216
        %v4256 = vpack.c.b16 %v4219, %v4218
        %v4257 = vpack.c.b16 %v4221, %v4220
        %v4258 = vpack.c.b16 %v4223, %v4222
        %v4259 = vpack.c.b16 %v4225, %v4224
        %v4260 = vpack.c.b16 %v4227, %v4226
        %v4261 = vpack.c.b16 %v4229, %v4228
        %v4262 = vpack.c.b16 %v4231, %v4230
        %v4263 = vpack.c.b16 %v4233, %v4232
        %v4264 = vpack.c.b16 %v4235, %v4234
        %v4265 = vpack.c.b16 %v4237, %v4236
        %v4266 = vpack.c.b16 %v4239, %v4238
        %v4267 = vpack.c.b16 %v4241, %v4240
        %v4268 = vpack.c.b16 %v4243, %v4242
        %v4269 = vpack.c.b16 %v4245, %v4244
        %4294 = vmatprep.subr.bf16.mxu0 0
        %4295 = vmatpush1.bf16.msra.mxu0 %v4253
        %4296 = vmatprep.subr.bf16.mxu0 0
        %4297 = vmatpush1.bf16.msra.mxu0 %v4252
        %4298 = vmatprep.subr.bf16.mxu0 0
        %4299 = vmatpush1.bf16.msra.mxu0 %v4251
        %4300 = vmatprep.subr.bf16.mxu0 0
        %4301 = vmatpush1.bf16.msra.mxu0 %v4250
        %4302 = vmatprep.subr.bf16.mxu0 0
        %4303 = vmatpush1.bf16.msra.mxu0 %v4249
        %4304 = vmatprep.subr.bf16.mxu0 0
        %4305 = vmatpush1.bf16.msra.mxu0 %v4248
        %4306 = vmatprep.subr.bf16.mxu0 0
        %4307 = vmatpush1.bf16.msra.mxu0 %v4247
        %4308 = vmatprep.subr.bf16.mxu0 0
        %4309 = vmatpush1.bf16.msra.mxu0 %v4246
        %4310 = vmatprep.subr.bf16.mxu0 0
        %4311 = vmatpush2.bf16.msra.mxu0 %v4261
        %4312 = vmatprep.subr.bf16.mxu0 0
        %4313 = vmatpush2.bf16.msra.mxu0 %v4260
        %4314 = vmatprep.subr.bf16.mxu0 0
        %4315 = vmatpush2.bf16.msra.mxu0 %v4259
        %4316 = vmatprep.subr.bf16.mxu0 0
        %4317 = vmatpush2.bf16.msra.mxu0 %v4258
        %4318 = vmatprep.subr.bf16.mxu0 0
        %4319 = vmatpush2.bf16.msra.mxu0 %v4257
        %4320 = vmatprep.subr.bf16.mxu0 0
        %4321 = vmatpush2.bf16.msra.mxu0 %v4256
        %4322 = vmatprep.subr.bf16.mxu0 0
        %4323 = vmatpush2.bf16.msra.mxu0 %v4255
        %4324 = vmatprep.subr.bf16.mxu0 0
        %4325 = vmatpush2.bf16.msra.mxu0 %v4254
        %4326 = vmatprep.mubr.bf16.mxu0 %v4054
        %4327 = vmatmul.mubr.bf16.gmra.mxu0 %v4053
        %v4328 = vpop.f32.mrf.mxu0
        %v4329 = vadd.f32 0.0, %v4328
        %v4330 = vpop.f32.mrf.mxu0
        %v4331 = vpop.f32.mrf.mxu0
        %v4332 = vadd.f32 0.0, %v4331
        %v4333 = vpop.f32.mrf.mxu0
        %4334 = vmatprep.mubr.bf16.mxu0 %v4057
        %4335 = vmatmul.mubr.bf16.gmra.mxu0 %v4056
        %v4336 = vpop.f32.mrf.mxu0
        %v4337 = vadd.f32 0.0, %v4336
        %v4338 = vpop.f32.mrf.mxu0
        %v4339 = vpop.f32.mrf.mxu0
        %v4340 = vadd.f32 0.0, %v4339
        %v4341 = vpop.f32.mrf.mxu0
        %4342 = vmatprep.mubr.bf16.mxu0 %v4060
        %4343 = vmatmul.mubr.bf16.gmra.mxu0 %v4059
        %v4344 = vpop.f32.mrf.mxu0
        %v4345 = vadd.f32 0.0, %v4344
        %v4346 = vpop.f32.mrf.mxu0
        %v4347 = vpop.f32.mrf.mxu0
        %v4348 = vadd.f32 0.0, %v4347
        %v4349 = vpop.f32.mrf.mxu0
        %4350 = vmatprep.mubr.bf16.mxu0 %v4063
        %4351 = vmatmul.mubr.bf16.gmra.mxu0 %v4062
        %v4352 = vpop.f32.mrf.mxu0
        %v4353 = vadd.f32 0.0, %v4352
        %v4354 = vpop.f32.mrf.mxu0
        %v4355 = vpop.f32.mrf.mxu0
        %v4356 = vadd.f32 0.0, %v4355
        %v4357 = vpop.f32.mrf.mxu0
        %4358 = vmatprep.mubr.bf16.mxu0 %v4066
        %4359 = vmatmul.mubr.bf16.gmra.mxu0 %v4065
        %v4360 = vpop.f32.mrf.mxu0
        %v4361 = vadd.f32 0.0, %v4360
        %v4362 = vpop.f32.mrf.mxu0
        %v4363 = vpop.f32.mrf.mxu0
        %v4364 = vadd.f32 0.0, %v4363
        %v4365 = vpop.f32.mrf.mxu0
        %4366 = vmatprep.mubr.bf16.mxu0 %v4069
        %4367 = vmatmul.mubr.bf16.gmra.mxu0 %v4068
        %v4368 = vpop.f32.mrf.mxu0
        %v4369 = vadd.f32 0.0, %v4368
        %v4370 = vpop.f32.mrf.mxu0
        %v4371 = vpop.f32.mrf.mxu0
        %v4372 = vadd.f32 0.0, %v4371
        %v4373 = vpop.f32.mrf.mxu0
        %4374 = vmatprep.mubr.bf16.mxu0 %v4072
        %4375 = vmatmul.mubr.bf16.gmra.mxu0 %v4071
        %v4376 = vpop.f32.mrf.mxu0
        %v4377 = vadd.f32 0.0, %v4376
        %v4378 = vpop.f32.mrf.mxu0
        %v4379 = vpop.f32.mrf.mxu0
        %v4380 = vadd.f32 0.0, %v4379
        %v4381 = vpop.f32.mrf.mxu0
        %4382 = vmatprep.mubr.bf16.mxu0 %v4075
        %4383 = vmatmul.mubr.bf16.gmra.mxu0 %v4074
        %v4384 = vpop.f32.mrf.mxu0
        %v4385 = vadd.f32 0.0, %v4384
        %v4386 = vpop.f32.mrf.mxu0
        %v4387 = vpop.f32.mrf.mxu0
        %v4388 = vadd.f32 0.0, %v4387
        %v4389 = vpop.f32.mrf.mxu0
        %4390 = vmatprep.mubr.bf16.mxu0 %v4078
        %4391 = vmatmul.mubr.bf16.gmra.mxu0 %v4077
        %v4392 = vpop.f32.mrf.mxu0
        %v4393 = vadd.f32 0.0, %v4392
        %v4394 = vpop.f32.mrf.mxu0
        %v4395 = vpop.f32.mrf.mxu0
        %v4396 = vadd.f32 0.0, %v4395
        %v4397 = vpop.f32.mrf.mxu0
        %4398 = vmatprep.mubr.bf16.mxu0 %v4081
        %4399 = vmatmul.mubr.bf16.gmra.mxu0 %v4080
        %v4400 = vpop.f32.mrf.mxu0
        %v4401 = vadd.f32 0.0, %v4400
        %v4402 = vpop.f32.mrf.mxu0
        %v4403 = vpop.f32.mrf.mxu0
        %v4404 = vadd.f32 0.0, %v4403
        %v4405 = vpop.f32.mrf.mxu0
        %4406 = vmatprep.mubr.bf16.mxu0 %v4084
        %4407 = vmatmul.mubr.bf16.gmra.mxu0 %v4083
        %v4408 = vpop.f32.mrf.mxu0
        %v4409 = vadd.f32 0.0, %v4408
        %v4410 = vpop.f32.mrf.mxu0
        %v4411 = vpop.f32.mrf.mxu0
        %v4412 = vadd.f32 0.0, %v4411
        %v4413 = vpop.f32.mrf.mxu0
        %4414 = vmatprep.mubr.bf16.mxu0 %v4087
        %4415 = vmatmul.mubr.bf16.gmra.mxu0 %v4086
        %v4416 = vpop.f32.mrf.mxu0
        %v4417 = vadd.f32 0.0, %v4416
        %v4418 = vpop.f32.mrf.mxu0
        %v4419 = vpop.f32.mrf.mxu0
        %v4420 = vadd.f32 0.0, %v4419
        %v4421 = vpop.f32.mrf.mxu0
        %4422 = vmatprep.mubr.bf16.mxu0 %v4090
        %4423 = vmatmul.mubr.bf16.gmra.mxu0 %v4089
        %v4424 = vpop.f32.mrf.mxu0
        %v4425 = vadd.f32 0.0, %v4424
        %v4426 = vpop.f32.mrf.mxu0
        %v4427 = vpop.f32.mrf.mxu0
        %v4428 = vadd.f32 0.0, %v4427
        %v4429 = vpop.f32.mrf.mxu0
        %4430 = vmatprep.mubr.bf16.mxu0 %v4093
        %4431 = vmatmul.mubr.bf16.gmra.mxu0 %v4092
        %v4432 = vpop.f32.mrf.mxu0
        %v4433 = vadd.f32 0.0, %v4432
        %v4434 = vpop.f32.mrf.mxu0
        %v4435 = vpop.f32.mrf.mxu0
        %v4436 = vadd.f32 0.0, %v4435
        %v4437 = vpop.f32.mrf.mxu0
        %4438 = vmatprep.mubr.bf16.mxu0 %v4096
        %4439 = vmatmul.mubr.bf16.gmra.mxu0 %v4095
        %v4440 = vpop.f32.mrf.mxu0
        %v4441 = vadd.f32 0.0, %v4440
        %v4442 = vpop.f32.mrf.mxu0
        %v4443 = vpop.f32.mrf.mxu0
        %v4444 = vadd.f32 0.0, %v4443
        %v4445 = vpop.f32.mrf.mxu0
        %4446 = vmatprep.mubr.bf16.mxu0 %v4099
        %4447 = vmatmul.mubr.bf16.gmra.mxu0 %v4098
        %v4448 = vpop.f32.mrf.mxu0
        %v4449 = vadd.f32 0.0, %v4448
        %v4450 = vpop.f32.mrf.mxu0
        %v4451 = vpop.f32.mrf.mxu0
        %v4452 = vadd.f32 0.0, %v4451
        %v4453 = vpop.f32.mrf.mxu0
        %4454 = vdwg.mxu0
        %4455 = vmatprep.subr.bf16.mxu0 0
        %4456 = vmatpush1.bf16.msra.mxu0 %v4269
        %4457 = vmatprep.subr.bf16.mxu0 0
        %4458 = vmatpush1.bf16.msra.mxu0 %v4268
        %4459 = vmatprep.subr.bf16.mxu0 0
        %4460 = vmatpush1.bf16.msra.mxu0 %v4267
        %4461 = vmatprep.subr.bf16.mxu0 0
        %4462 = vmatpush1.bf16.msra.mxu0 %v4266
        %4463 = vmatprep.subr.bf16.mxu0 0
        %4464 = vmatpush1.bf16.msra.mxu0 %v4265
        %4465 = vmatprep.subr.bf16.mxu0 0
        %4466 = vmatpush1.bf16.msra.mxu0 %v4264
        %4467 = vmatprep.subr.bf16.mxu0 0
        %4468 = vmatpush1.bf16.msra.mxu0 %v4263
        %4469 = vmatprep.subr.bf16.mxu0 0
        %4470 = vmatpush1.bf16.msra.mxu0 %v4262
        %4471 = vmatprep.subr.bf16.mxu0 0
        %4472 = vmatpush2.bf16.msra.mxu0 0
        %4473 = vmatprep.subr.bf16.mxu0 0
        %4474 = vmatpush2.bf16.msra.mxu0 0
        %4475 = vmatprep.subr.bf16.mxu0 0
        %4476 = vmatpush2.bf16.msra.mxu0 0
        %4477 = vmatprep.subr.bf16.mxu0 0
        %4478 = vmatpush2.bf16.msra.mxu0 0
        %4479 = vmatprep.subr.bf16.mxu0 0
        %4480 = vmatpush2.bf16.msra.mxu0 0
        %4481 = vmatprep.subr.bf16.mxu0 0
        %4482 = vmatpush2.bf16.msra.mxu0 0
        %4483 = vmatprep.subr.bf16.mxu0 0
        %4484 = vmatpush2.bf16.msra.mxu0 0
        %4485 = vmatprep.subr.bf16.mxu0 0
        %4486 = vmatpush2.bf16.msra.mxu0 0
        %4487 = vmatprep.mubr.bf16.mxu0 0
        %4488 = vmatmul.mubr.bf16.gmra.mxu0 %v4055
        %v4489 = vpop.f32.mrf.mxu0
        %v4490 = vadd.f32 %v4329, %v4489
        %v4491 = vpop.f32.mrf.mxu0
        %v4492 = vpop.f32.mrf.mxu0
        %v4493 = vadd.f32 %v4332, %v4492
        %v4494 = vpop.f32.mrf.mxu0
        %4495 = vmatprep.mubr.bf16.mxu0 0
        %4496 = vmatmul.mubr.bf16.gmra.mxu0 %v4058
        %v4497 = vpop.f32.mrf.mxu0
        %v4498 = vadd.f32 %v4337, %v4497
        %v4499 = vpop.f32.mrf.mxu0
        %v4500 = vpop.f32.mrf.mxu0
        %v4501 = vadd.f32 %v4340, %v4500
        %v4502 = vpop.f32.mrf.mxu0
        %4503 = vmatprep.mubr.bf16.mxu0 0
        %4504 = vmatmul.mubr.bf16.gmra.mxu0 %v4061
        %v4505 = vpop.f32.mrf.mxu0
        %v4506 = vadd.f32 %v4345, %v4505
        %v4507 = vpop.f32.mrf.mxu0
        %v4508 = vpop.f32.mrf.mxu0
        %v4509 = vadd.f32 %v4348, %v4508
        %v4510 = vpop.f32.mrf.mxu0
        %4511 = vmatprep.mubr.bf16.mxu0 0
        %4512 = vmatmul.mubr.bf16.gmra.mxu0 %v4064
        %v4513 = vpop.f32.mrf.mxu0
        %v4514 = vadd.f32 %v4353, %v4513
        %v4515 = vpop.f32.mrf.mxu0
        %v4516 = vpop.f32.mrf.mxu0
        %v4517 = vadd.f32 %v4356, %v4516
        %v4518 = vpop.f32.mrf.mxu0
        %4519 = vmatprep.mubr.bf16.mxu0 0
        %4520 = vmatmul.mubr.bf16.gmra.mxu0 %v4067
        %v4521 = vpop.f32.mrf.mxu0
        %v4522 = vadd.f32 %v4361, %v4521
        %v4523 = vpop.f32.mrf.mxu0
        %v4524 = vpop.f32.mrf.mxu0
        %v4525 = vadd.f32 %v4364, %v4524
        %v4526 = vpop.f32.mrf.mxu0
        %4527 = vmatprep.mubr.bf16.mxu0 0
        %4528 = vmatmul.mubr.bf16.gmra.mxu0 %v4070
        %v4529 = vpop.f32.mrf.mxu0
        %v4530 = vadd.f32 %v4369, %v4529
        %v4531 = vpop.f32.mrf.mxu0
        %v4532 = vpop.f32.mrf.mxu0
        %v4533 = vadd.f32 %v4372, %v4532
        %v4534 = vpop.f32.mrf.mxu0
        %4535 = vmatprep.mubr.bf16.mxu0 0
        %4536 = vmatmul.mubr.bf16.gmra.mxu0 %v4073
        %v4537 = vpop.f32.mrf.mxu0
        %v4538 = vadd.f32 %v4377, %v4537
        %v4539 = vpop.f32.mrf.mxu0
        %v4540 = vpop.f32.mrf.mxu0
        %v4541 = vadd.f32 %v4380, %v4540
        %v4542 = vpop.f32.mrf.mxu0
        %4543 = vmatprep.mubr.bf16.mxu0 0
        %4544 = vmatmul.mubr.bf16.gmra.mxu0 %v4076
        %v4545 = vpop.f32.mrf.mxu0
        %v4546 = vadd.f32 %v4385, %v4545
        %v4547 = vpop.f32.mrf.mxu0
        %v4548 = vpop.f32.mrf.mxu0
        %v4549 = vadd.f32 %v4388, %v4548
        %v4550 = vpop.f32.mrf.mxu0
        %4551 = vmatprep.mubr.bf16.mxu0 0
        %4552 = vmatmul.mubr.bf16.gmra.mxu0 %v4079
        %v4553 = vpop.f32.mrf.mxu0
        %v4554 = vadd.f32 %v4393, %v4553
        %v4555 = vpop.f32.mrf.mxu0
        %v4556 = vpop.f32.mrf.mxu0
        %v4557 = vadd.f32 %v4396, %v4556
        %v4558 = vpop.f32.mrf.mxu0
        %4559 = vmatprep.mubr.bf16.mxu0 0
        %4560 = vmatmul.mubr.bf16.gmra.mxu0 %v4082
        %v4561 = vpop.f32.mrf.mxu0
        %v4562 = vadd.f32 %v4401, %v4561
        %v4563 = vpop.f32.mrf.mxu0
        %v4564 = vpop.f32.mrf.mxu0
        %v4565 = vadd.f32 %v4404, %v4564
        %v4566 = vpop.f32.mrf.mxu0
        %4567 = vmatprep.mubr.bf16.mxu0 0
        %4568 = vmatmul.mubr.bf16.gmra.mxu0 %v4085
        %v4569 = vpop.f32.mrf.mxu0
        %v4570 = vadd.f32 %v4409, %v4569
        %v4571 = vpop.f32.mrf.mxu0
        %v4572 = vpop.f32.mrf.mxu0
        %v4573 = vadd.f32 %v4412, %v4572
        %v4574 = vpop.f32.mrf.mxu0
        %4575 = vmatprep.mubr.bf16.mxu0 0
        %4576 = vmatmul.mubr.bf16.gmra.mxu0 %v4088
        %v4577 = vpop.f32.mrf.mxu0
        %v4578 = vadd.f32 %v4417, %v4577
        %v4579 = vpop.f32.mrf.mxu0
        %v4580 = vpop.f32.mrf.mxu0
        %v4581 = vadd.f32 %v4420, %v4580
        %v4582 = vpop.f32.mrf.mxu0
        %4583 = vmatprep.mubr.bf16.mxu0 0
        %4584 = vmatmul.mubr.bf16.gmra.mxu0 %v4091
        %v4585 = vpop.f32.mrf.mxu0
        %v4586 = vadd.f32 %v4425, %v4585
        %v4587 = vpop.f32.mrf.mxu0
        %v4588 = vpop.f32.mrf.mxu0
        %v4589 = vadd.f32 %v4428, %v4588
        %v4590 = vpop.f32.mrf.mxu0
        %4591 = vmatprep.mubr.bf16.mxu0 0
        %4592 = vmatmul.mubr.bf16.gmra.mxu0 %v4094
        %v4593 = vpop.f32.mrf.mxu0
        %v4594 = vadd.f32 %v4433, %v4593
        %v4595 = vpop.f32.mrf.mxu0
        %v4596 = vpop.f32.mrf.mxu0
        %v4597 = vadd.f32 %v4436, %v4596
        %v4598 = vpop.f32.mrf.mxu0
        %4599 = vmatprep.mubr.bf16.mxu0 0
        %4600 = vmatmul.mubr.bf16.gmra.mxu0 %v4097
        %v4601 = vpop.f32.mrf.mxu0
        %v4602 = vadd.f32 %v4441, %v4601
        %v4603 = vpop.f32.mrf.mxu0
        %v4604 = vpop.f32.mrf.mxu0
        %v4605 = vadd.f32 %v4444, %v4604
        %v4606 = vpop.f32.mrf.mxu0
        %4607 = vmatprep.mubr.bf16.mxu0 0
        %4608 = vmatmul.mubr.bf16.gmra.mxu0 %v4100
        %v4609 = vpop.f32.mrf.mxu0
        %v4610 = vadd.f32 %v4449, %v4609
        %v4611 = vpop.f32.mrf.mxu0
        %v4612 = vpop.f32.mrf.mxu0
        %v4613 = vadd.f32 %v4452, %v4612
        %v4614 = vpop.f32.mrf.mxu0
        %4615 = vdwg.mxu0
        %v4616 = vadd.f32 %v3830, %v4490
        %v4617 = vadd.f32 %v3833, %v4493
        %v4618 = vadd.f32 %v3838, %v4498
        %v4619 = vadd.f32 %v3841, %v4501
        %v4620 = vadd.f32 %v3846, %v4506
        %v4621 = vadd.f32 %v3849, %v4509
        %v4622 = vadd.f32 %v3854, %v4514
        %v4623 = vadd.f32 %v3857, %v4517
        %v4624 = vadd.f32 %v3862, %v4522
        %v4625 = vadd.f32 %v3865, %v4525
        %v4626 = vadd.f32 %v3870, %v4530
        %v4627 = vadd.f32 %v3873, %v4533
        %v4628 = vadd.f32 %v3878, %v4538
        %v4629 = vadd.f32 %v3881, %v4541
        %v4630 = vadd.f32 %v3886, %v4546
        %v4631 = vadd.f32 %v3889, %v4549
        %v4632 = vadd.f32 %v3894, %v4554
        %v4633 = vadd.f32 %v3897, %v4557
        %v4634 = vadd.f32 %v3902, %v4562
        %v4635 = vadd.f32 %v3905, %v4565
        %v4636 = vadd.f32 %v3910, %v4570
        %v4637 = vadd.f32 %v3913, %v4573
        %v4638 = vadd.f32 %v3918, %v4578
        %v4639 = vadd.f32 %v3921, %v4581
        %v4640 = vadd.f32 %v3926, %v4586
        %v4641 = vadd.f32 %v3929, %v4589
        %v4642 = vadd.f32 %v3934, %v4594
        %v4643 = vadd.f32 %v3937, %v4597
        %v4644 = vadd.f32 %v3942, %v4602
        %v4645 = vadd.f32 %v3945, %v4605
        %v4646 = vadd.f32 %v3950, %v4610
        %v4647 = vadd.f32 %v3953, %v4613
        %v4648 = vld [vmem:[%s4] sm:$0x1]
        %v4650 = vlaneseq
        %v4651 = vshrl.u32 %v4650, 7
        %v4652 = vsub.s32 0, %v4651
        %v4653 = vrot.slane %v4648, %v4652
        %v4655 = vadd.f32 %v4616, %v4653
        %v4656 = vadd.f32 %v4617, %v4653
        %v4657 = vadd.f32 %v4618, %v4653
        %v4658 = vadd.f32 %v4619, %v4653
        %v4659 = vadd.f32 %v4620, %v4653
        %v4660 = vadd.f32 %v4621, %v4653
        %v4661 = vadd.f32 %v4622, %v4653
        %v4662 = vadd.f32 %v4623, %v4653
        %v4663 = vadd.f32 %v4624, %v4653
        %v4664 = vadd.f32 %v4625, %v4653
        %v4665 = vadd.f32 %v4626, %v4653
        %v4666 = vadd.f32 %v4627, %v4653
        %v4667 = vadd.f32 %v4628, %v4653
        %v4668 = vadd.f32 %v4629, %v4653
        %v4669 = vadd.f32 %v4630, %v4653
        %v4670 = vadd.f32 %v4631, %v4653
        %v4671 = vadd.f32 %v4632, %v4653
        %v4672 = vadd.f32 %v4633, %v4653
        %v4673 = vadd.f32 %v4634, %v4653
        %v4674 = vadd.f32 %v4635, %v4653
        %v4675 = vadd.f32 %v4636, %v4653
        %v4676 = vadd.f32 %v4637, %v4653
        %v4677 = vadd.f32 %v4638, %v4653
        %v4678 = vadd.f32 %v4639, %v4653
        %v4679 = vadd.f32 %v4640, %v4653
        %v4680 = vadd.f32 %v4641, %v4653
        %v4681 = vadd.f32 %v4642, %v4653
        %v4682 = vadd.f32 %v4643, %v4653
        %v4683 = vadd.f32 %v4644, %v4653
        %v4684 = vadd.f32 %v4645, %v4653
        %v4685 = vadd.f32 %v4646, %v4653
        %v4686 = vadd.f32 %v4647, %v4653
        %v4687 = vmax.f32 %v4655, 0.0
        %v4688 = vmax.f32 %v4656, 0.0
        %v4689 = vmax.f32 %v4657, 0.0
        %v4690 = vmax.f32 %v4658, 0.0
        %v4691 = vmax.f32 %v4659, 0.0
        %v4692 = vmax.f32 %v4660, 0.0
        %v4693 = vmax.f32 %v4661, 0.0
        %v4694 = vmax.f32 %v4662, 0.0
        %v4695 = vmax.f32 %v4663, 0.0
        %v4696 = vmax.f32 %v4664, 0.0
        %v4697 = vmax.f32 %v4665, 0.0
        %v4698 = vmax.f32 %v4666, 0.0
        %v4699 = vmax.f32 %v4667, 0.0
        %v4700 = vmax.f32 %v4668, 0.0
        %v4701 = vmax.f32 %v4669, 0.0
        %v4702 = vmax.f32 %v4670, 0.0
        %v4703 = vmax.f32 %v4671, 0.0
        %v4704 = vmax.f32 %v4672, 0.0
        %v4705 = vmax.f32 %v4673, 0.0
        %v4706 = vmax.f32 %v4674, 0.0
        %v4707 = vmax.f32 %v4675, 0.0
        %v4708 = vmax.f32 %v4676, 0.0
        %v4709 = vmax.f32 %v4677, 0.0
        %v4710 = vmax.f32 %v4678, 0.0
        %v4711 = vmax.f32 %v4679, 0.0
        %v4712 = vmax.f32 %v4680, 0.0
        %v4713 = vmax.f32 %v4681, 0.0
        %v4714 = vmax.f32 %v4682, 0.0
        %v4715 = vmax.f32 %v4683, 0.0
        %v4716 = vmax.f32 %v4684, 0.0
        %v4717 = vmax.f32 %v4685, 0.0
        %v4718 = vmax.f32 %v4686, 0.0
        %4719 = vst [vmem:[%s272] sm:$0xff] %v4687
        %4720 = vst [vmem:[%s272 + $0x8] sm:$0xff] %v4688
        %4721 = vst [vmem:[%s272 + $0x10] sm:$0xff] %v4689
        %4722 = vst [vmem:[%s272 + $0x18] sm:$0xff] %v4690
        %4723 = vst [vmem:[%s272 + $0x20] sm:$0xff] %v4691
        %4724 = vst [vmem:[%s272 + $0x28] sm:$0xff] %v4692
        %4725 = vst [vmem:[%s272 + $0x30] sm:$0xff] %v4693
        %4726 = vst [vmem:[%s272 + $0x38] sm:$0xff] %v4694
        %4727 = vst [vmem:[%s272 + $0x40] sm:$0xff] %v4695
        %4728 = vst [vmem:[%s272 + $0x48] sm:$0xff] %v4696
        %4729 = vst [vmem:[%s272 + $0x50] sm:$0xff] %v4697
        %4730 = vst [vmem:[%s272 + $0x58] sm:$0xff] %v4698
        %4731 = vst [vmem:[%s272 + $0x60] sm:$0xff] %v4699
        %4732 = vst [vmem:[%s272 + $0x68] sm:$0xff] %v4700
        %4733 = vst [vmem:[%s272 + $0x70] sm:$0xff] %v4701
        %4734 = vst [vmem:[%s272 + $0x78] sm:$0xff] %v4702
        %4735 = vst [vmem:[%s272 + $0x80] sm:$0xff] %v4703
        %4736 = vst [vmem:[%s272 + $0x88] sm:$0xff] %v4704
        %4737 = vst [vmem:[%s272 + $0x90] sm:$0xff] %v4705
        %4738 = vst [vmem:[%s272 + $0x98] sm:$0xff] %v4706
        %4739 = vst [vmem:[%s272 + $0xa0] sm:$0xff] %v4707
        %4740 = vst [vmem:[%s272 + $0xa8] sm:$0xff] %v4708
        %4741 = vst [vmem:[%s272 + $0xb0] sm:$0xff] %v4709
        %4742 = vst [vmem:[%s272 + $0xb8] sm:$0xff] %v4710
        %4743 = vst [vmem:[%s272 + $0xc0] sm:$0xff] %v4711
        %4744 = vst [vmem:[%s272 + $0xc8] sm:$0xff] %v4712
        %4745 = vst [vmem:[%s272 + $0xd0] sm:$0xff] %v4713
        %4746 = vst [vmem:[%s272 + $0xd8] sm:$0xff] %v4714
        %4747 = vst [vmem:[%s272 + $0xe0] sm:$0xff] %v4715
        %4748 = vst [vmem:[%s272 + $0xe8] sm:$0xff] %v4716
        %4749 = vst [vmem:[%s272 + $0xf0] sm:$0xff] %v4717
        %4750 = vst [vmem:[%s272 + $0xf8] sm:$0xff] %v4718
        %s4751 = sand.u32 %s141, 1
        %s4752 = scalar_lea.sflag [#allocation6], %s4751
        %s4753 = sand.u32 %s141, 1
        %s4754 = smul.addr %s4753, 256
        %s4755 = scalar_lea.vmem [#allocation10], %s4754
        // Predicated region
        $region53: #{tpu_custom_call.1} parent=39 // pred_check
          %p4756 = pneg %p151
        $region54: #{tpu_custom_call.1} parent=39 // pred_check_branch
          %4758 = sbr.rel (%p4756) target = $region56
        $region55: #{tpu_custom_call.1} parent=39 // pred_region
          %s4760 = ssub.s32 4096, 4096
          %4761 = vsyncadd %s4752, %s4760
          %s4762 = smul.addr %s23, 32
          %s4763 = smul.addr %s4762, 128
          %s4764 = scalar_lea.hbm %s5, %s4763
          %s4765 = sshll.u32 %s4755, 4
          %s4766 = int_to_ptr.vmem [resolvable:$true] %s4765
          %4771 = dma.vmem_to_hbm [thread:$0]  %s4766, 4096, %s4764, %s4752, 128, 128, 8
        $region56: #{tpu_custom_call.1} parent=39 // pred_fallthru
          _
      $region40: #{tpu_custom_call.1} parent=5 // pred_fallthru
        _
      %p4772 = scmp.le.s32.totalorder 2, %s18
      // Predicated region
      $region57: #{tpu_custom_call.1} parent=5 // pred_check
        %p4773 = pneg %p4772
      $region58: #{tpu_custom_call.1} parent=5 // pred_check_branch
        %4775 = sbr.rel (%p4773) target = $region60
      $region59: #{tpu_custom_call.1} parent=5 // pred_region
        %s4776 = ssub.s32 %s18, 2
        // Predicated region
        $region61: #{tpu_custom_call.1} parent=59 // pred_check
          %p4777 = pneg %p157
        $region62: #{tpu_custom_call.1} parent=59 // pred_check_branch
          %4779 = sbr.rel (%p4777) target = $region64
        $region63: #{tpu_custom_call.1} parent=59 // pred_region
          %s4780 = sand.u32 %s142, 1
          %s4781 = scalar_lea.sflag [#allocation6], %s4780
          %s4782 = sand.u32 %s142, 1
          %s4783 = smul.addr %s4782, 256
          %s4784 = scalar_lea.vmem [#allocation10], %s4783
          %4785 = dma.done %s4781, 4096
        $region64: #{tpu_custom_call.1} parent=59 // pred_fallthru
          _
      $region60: #{tpu_custom_call.1} parent=5 // pred_fallthru
        _
    $region6: #{tpu_custom_call.1} parent=1 // loop_footer
      %s22 = sadd.s32 1, %s18
    $region7: #{tpu_custom_call.1} parent=1 // loop_footer_branch
      %17 = sbr.rel target = $region3
    $region8: #{tpu_custom_call.1} parent=1 // loop_exit
      _
    %4786 = vsyncpa [#allocation5], 1
    %s4787 = scalar_lea.sflag [#allocation5], 1
    %4788 = vsyncpa %s4787, 1
    %4789 = vsyncpa [#allocation8], 1
    %4790 = vsyncpa [#allocation6], 1
    %s4791 = scalar_lea.sflag [#allocation6], 1
    %4792 = vsyncpa %s4791, 1

</llo_original>
